<compile_context>
chip_gen: v7x
topology: tpu7x:2x2x1
jax: 0.10.0
libtpu: 0.0.40
codegen_flags: <defaults>
</compile_context>

<pallas_src>
import functools

import jax
import jax.numpy as jnp
from jax.experimental import pallas as pl
from jax.experimental.pallas import tpu as pltpu


def _full_self_attention_kernel(q_ref, k_ref, vt_ref, idx_ref, out_ref,
                                *, topk, n_total, exp_in_bf16):
    """Grid = (batch, query-tile); no scratch, no cross-iteration state.

    q_ref  : (1, TQ, D) bf16   query tile, already scaled by dim**-0.5
    k_ref  : (1, N, D)  bf16   full keys of this batch element
    vt_ref : (1, D, N)  bf16   full values, pre-transposed
    idx_ref: (1, K, TQ) int32  top-k indices, lane-dense (transposed in wrapper)
    out_ref: (1, D, TQ) f32    output tile already in the (B, D, N) layout
    """
    q = q_ref[0]                                               # (TQ, D) bf16
    k = k_ref[0]                                               # (N, D)  bf16
    vt = vt_ref[0]                                             # (D, N)  bf16

    # ---- scores for this query tile: (TQ, N) f32 = (q*scale) @ k^T ----------
    s = jax.lax.dot_general(q, k, (((1,), (1,)), ((), ())),
                            preferred_element_type=jnp.float32)

    # ---- top-k on raw scores (softmax is monotone -> identical indices) -----
    # Each pass does one max + one first-occurrence-index reduction; the first
    # pass's row max doubles as the softmax max, saving a full (TQ, N) pass.
    col_ids = jax.lax.broadcasted_iota(jnp.int32, s.shape, 1)  # (TQ, N)
    neg = jnp.finfo(jnp.float32).min
    work = s
    cols = []
    m = None
    for j in range(topk):
        mval = jnp.max(work, axis=-1, keepdims=True)           # (TQ, 1)
        if j == 0:
            m = mval                                           # softmax row max
        pick = jnp.min(jnp.where(work == mval, col_ids, n_total),
                       axis=-1, keepdims=True)                 # first occurrence
        cols.append(pick)
        if j + 1 < topk:                                       # no mask on last pass
            work = jnp.where(col_ids == pick, neg, work)
    idx_ref[0] = jnp.concatenate(cols, axis=-1).T              # (K, TQ) lane-dense

    # ---- unnormalized softmax; normalization deferred to the (D, TQ) tile ---
    if exp_in_bf16:
        # bf16 EUP (v6e / v7x): ~2x exp throughput, half the live bytes for p.
        p = jnp.exp((s - m).astype(jnp.bfloat16))              # (TQ, N) bf16
        denom = jnp.sum(p, axis=-1, keepdims=True, dtype=jnp.float32)
    else:
        e = jnp.exp(s - m)                                     # f32 (v5e-safe)
        denom = jnp.sum(e, axis=-1, keepdims=True)
        p = e.astype(jnp.bfloat16)

    # ---- output tile directly as (D, TQ) = v^T @ p^T, then scale by 1/denom --
    out_t = jax.lax.dot_general(vt, p, (((1,), (1,)), ((), ())),
                                preferred_element_type=jnp.float32)   # (D, TQ)
    inv = pl.reciprocal(denom, approx=True)                    # (TQ, 1)
    # Note: output could be emitted bf16 (halves HBM writeback) and cast in the
    # wrapper if downstream tolerates it; kept f32 to match the module exactly.
    out_ref[0] = (out_t * inv.T).astype(out_ref.dtype)


def _vmem_estimate_bytes(N, D, tq, topk):
    """Rough per-step VMEM footprint: double-buffered blocks + live temps."""
    bf16, f32, i32 = 2, 4, 4
    blocks = 2 * (tq * D * bf16          # q tile
                  + N * D * bf16         # k (constant in qi, still 2-buffered)
                  + D * N * bf16         # v^T
                  + topk * tq * i32      # idx tile
                  + D * tq * f32)        # out tile
    live = 6 * tq * N * f32              # s / work / iota / exp / select temps
    return blocks + live


def _vmem_capacity_bytes():
    try:
        return int(pltpu.get_tpu_info().vmem_capacity_bytes)
    except Exception:                    # interpret mode / unknown chip
        return 64 << 20                  # conservative: v7x per-core VMEM


def _pick_tq(N, D, topk):
    """Largest query tile (multiple of 128 dividing N) that fits comfortably."""
    budget = _vmem_capacity_bytes() // 2
    for cand in (512, 256, 128):
        if N % cand == 0 and _vmem_estimate_bytes(N, D, cand, topk) <= budget:
            return cand
    return N                             # small-N fallback: single tile


def _bf16_eup_available():
    """v6e / v7x have a bf16 EUP; v5e and older do not."""
    try:
        kind = jax.devices()[0].device_kind.lower()
    except Exception:
        return False
    return ("v6" in kind) or ("v7" in kind)


def full_self_attention(x, wq, wk, wv, topk, *, tq=None):
    """x: (B, N, D) f32.  wq/wk/wv: (D, D) nn.Linear weights (out, in).

    Returns (idx, out): idx (B, N, topk) int32, out (B, D, N) f32, matching the
    PyTorch module's forward (idx dtype is int32 instead of int64).
    """
    B, N, D = x.shape
    if tq is None:
        tq = _pick_tq(N, D, topk)
    tq = min(tq, N)
    assert N % tq == 0, "N must be a multiple of the query tile size"

    # Fused QKV projection in the wrapper (one wide bf16 MXU matmul via XLA).
    # The scale is folded into q; v is pre-transposed so the kernel's output
    # store is lane-dense in the module's (B, D, N) layout.
    xb = x.astype(jnp.bfloat16)
    w_qkv = jnp.concatenate([wq.T, wk.T, wv.T], axis=1).astype(jnp.bfloat16)
    qkv = jnp.einsum("bnd,de->bne", xb, w_qkv,
                     preferred_element_type=jnp.float32)        # (B, N, 3D) f32
    scale = D ** -0.5
    q = (qkv[..., :D] * scale).astype(jnp.bfloat16)             # (B, N, D)
    k = qkv[..., D:2 * D].astype(jnp.bfloat16)                  # (B, N, D)
    vt = jnp.transpose(qkv[..., 2 * D:], (0, 2, 1)).astype(jnp.bfloat16)  # (B, D, N)

    kernel = functools.partial(_full_self_attention_kernel,
                               topk=topk, n_total=N,
                               exp_in_bf16=_bf16_eup_available())

    vmem_cap = _vmem_capacity_bytes()
    vmem_limit = int(min(max(2 * _vmem_estimate_bytes(N, D, tq, topk) + (4 << 20),
                             8 << 20),
                         (3 * vmem_cap) // 4))

    idx_t, out = pl.pallas_call(
        kernel,
        out_shape=(
            jax.ShapeDtypeStruct((B, topk, N), jnp.int32),      # lane-dense idx
            jax.ShapeDtypeStruct((B, D, N), jnp.float32),
        ),
        grid_spec=pltpu.PrefetchScalarGridSpec(
            num_scalar_prefetch=0,
            grid=(B, N // tq),
            in_specs=[
                # Only the current query tile is DMA'd each step.
                pl.BlockSpec((1, tq, D), lambda b, qi: (b, qi, 0)),
                # k / v^T blocks are constant in qi -> re-DMA'd only when b changes.
                pl.BlockSpec((1, N, D), lambda b, qi: (b, 0, 0)),
                pl.BlockSpec((1, D, N), lambda b, qi: (b, 0, 0)),
            ],
            out_specs=[
                pl.BlockSpec((1, topk, tq), lambda b, qi: (b, 0, qi)),
                pl.BlockSpec((1, D, tq), lambda b, qi: (b, 0, qi)),
            ],
        ),
        compiler_params=pltpu.CompilerParams(
            # No cross-iteration state: both grid axes can be sharded across
            # TensorCores (main v7x win; harmless elsewhere).
            dimension_semantics=("parallel", "parallel"),
            vmem_limit_bytes=vmem_limit,
        ),
    )(q, k, vt)

    idx = jnp.transpose(idx_t, (0, 2, 1))     # (B, N, K) — module's layout
    return idx, out


def _reference(x, wq, wk, wv, topk):
    """Pure-JAX reference mirroring the PyTorch forward, with the kernel's
    bf16 input/intermediate rounding so values & top-k indices are comparable."""
    f32, bf16 = jnp.float32, jnp.bfloat16
    xb = x.astype(bf16).astype(f32)
    wqt = wq.T.astype(bf16).astype(f32)
    wkt = wk.T.astype(bf16).astype(f32)
    wvt = wv.T.astype(bf16).astype(f32)
    scale = x.shape[-1] ** -0.5
    q = ((xb @ wqt) * scale).astype(bf16).astype(f32)
    k = (xb @ wkt).astype(bf16).astype(f32)
    v = (xb @ wvt).astype(bf16).astype(f32)
    s = jnp.einsum("bnd,bmd->bnm", q, k)
    _, idx = jax.lax.top_k(s, topk)                  # == top-k of softmax(s)
    attn = jax.nn.softmax(s, axis=-1)
    out = jnp.einsum("bnm,bmd->bnd", attn.astype(bf16).astype(f32), v)
    return idx.astype(jnp.int32), jnp.transpose(out, (0, 2, 1)), attn


if __name__ == "__main__":
    B, N, D, K = 2, 256, 32, 4   # batch, points, feature dim, top-k

    key = jax.random.PRNGKey(0)
    kx, kq, kk, kv = jax.random.split(key, 4)
    x = jax.random.normal(kx, (B, N, D), dtype=jnp.float32)
    # nn.Linear(dim, dim, bias=False) weight shape: (out_features, in_features)
    wq = jax.random.normal(kq, (D, D), dtype=jnp.float32) * 0.1
    wk = jax.random.normal(kk, (D, D), dtype=jnp.float32) * 0.1
    wv = jax.random.normal(kv, (D, D), dtype=jnp.float32) * 0.1

    idx, out = full_self_attention(x, wq, wk, wv, K)
    jax.block_until_ready((idx, out))

    ref_idx, ref_out, ref_attn = _reference(x, wq, wk, wv, K)
    assert idx.shape == (B, N, K) and out.shape == (B, D, N)
    assert jnp.allclose(out, ref_out, atol=5e-3, rtol=5e-3), "output mismatch"

    # Top-k check: value-based (robust to near-tie swaps from bf16 rounding)
    # plus an almost-all-equal index check.
    got_vals = jnp.take_along_axis(ref_attn, idx, axis=-1)
    ref_vals = jnp.take_along_axis(ref_attn, ref_idx, axis=-1)
    assert jnp.allclose(got_vals, ref_vals, atol=1e-3, rtol=1e-2), "topk value mismatch"
    match = float(jnp.mean((idx == ref_idx).astype(jnp.float32)))
    assert match > 0.99, f"topk index mismatch rate too high: {1.0 - match:.4f}"

    print("KERNEL_OK")
</pallas_src>

<mosaic_0001>
module attributes {stable_mosaic.version = 11 : i64} {
  func.func @_full_self_attention_kernel(%arg0: i32, %arg1: i32, %arg2: memref<1x256x32xbf16, #tpu.memory_space<vmem>>, %arg3: memref<1x256x32xbf16, #tpu.memory_space<vmem>>, %arg4: memref<1x32x256xbf16, #tpu.memory_space<vmem>>, %arg5: memref<1x4x256xi32, #tpu.memory_space<vmem>>, %arg6: memref<1x32x256xf32, #tpu.memory_space<vmem>>) attributes {dimension_semantics = [#tpu.dimension_semantics<parallel>, #tpu.dimension_semantics<parallel>], iteration_bounds = array<i64: 2, 1>, scalar_prefetch = 0 : i64, scratch_operands = 0 : i64, tpu.core_type = #tpu.core_type<tc>, window_params = [{transform_indices = @transform_0, window_bounds = array<i64: 1, 256, 32>}, {transform_indices = @transform_1, window_bounds = array<i64: 1, 256, 32>}, {transform_indices = @transform_2, window_bounds = array<i64: 1, 32, 256>}, {transform_indices = @transform_3, window_bounds = array<i64: 1, 4, 256>}, {transform_indices = @transform_4, window_bounds = array<i64: 1, 32, 256>}]} {
    %c0 = arith.constant 0 : index
    %c0_0 = arith.constant 0 : index
    %c0_1 = arith.constant 0 : index
    %0 = vector.load %arg2[%c0, %c0_0, %c0_1] : memref<1x256x32xbf16, #tpu.memory_space<vmem>>, vector<1x256x32xbf16>
    %1 = vector.shape_cast %0 : vector<1x256x32xbf16> to vector<256x32xbf16>
    %c0_2 = arith.constant 0 : index
    %c0_3 = arith.constant 0 : index
    %c0_4 = arith.constant 0 : index
    %2 = vector.load %arg3[%c0_2, %c0_3, %c0_4] : memref<1x256x32xbf16, #tpu.memory_space<vmem>>, vector<1x256x32xbf16>
    %3 = vector.shape_cast %2 : vector<1x256x32xbf16> to vector<256x32xbf16>
    %c0_5 = arith.constant 0 : index
    %c0_6 = arith.constant 0 : index
    %c0_7 = arith.constant 0 : index
    %4 = vector.load %arg4[%c0_5, %c0_6, %c0_7] : memref<1x32x256xbf16, #tpu.memory_space<vmem>>, vector<1x32x256xbf16>
    %5 = vector.shape_cast %4 : vector<1x32x256xbf16> to vector<32x256xbf16>
    %cst = arith.constant dense<0.000000e+00> : vector<256x256xf32>
    %6 = tpu.matmul %1, %3, %cst {dimension_numbers = #tpu.dot_dimension_numbers<[1], [1], [0], [0], [0, 0, 1, 0], [], []>} : vector<256x32xbf16>, vector<256x32xbf16>, vector<256x256xf32> -> vector<256x256xf32>
    %7 = tpu.iota {dimensions = array<i32: 1>} : vector<256x256xi32>
    %cst_8 = arith.constant dense<0xFF800000> : vector<256xf32>
    %8 = vector.multi_reduction <maximumf>, %6, %cst_8 [1] : vector<256x256xf32> to vector<256xf32>
    %9 = vector.shape_cast %8 : vector<256xf32> to vector<256x1xf32>
    %10 = vector.broadcast %9 : vector<256x1xf32> to vector<256x256xf32>
    %11 = arith.cmpf oeq, %6, %10 : vector<256x256xf32>
    %c256_i32 = arith.constant 256 : i32
    %12 = vector.broadcast %c256_i32 : i32 to vector<256x256xi32>
    %13 = arith.select %11, %7, %12 : vector<256x256xi1>, vector<256x256xi32>
    %cst_9 = arith.constant dense<2147483647> : vector<256xi32>
    %14 = vector.multi_reduction <minsi>, %13, %cst_9 [1] : vector<256x256xi32> to vector<256xi32>
    %15 = vector.shape_cast %14 : vector<256xi32> to vector<256x1xi32>
    %16 = vector.broadcast %15 : vector<256x1xi32> to vector<256x256xi32>
    %17 = arith.cmpi eq, %7, %16 : vector<256x256xi32>
    %cst_10 = arith.constant -3.40282347E+38 : f32
    %18 = vector.broadcast %cst_10 : f32 to vector<256x256xf32>
    %19 = arith.select %17, %18, %6 : vector<256x256xi1>, vector<256x256xf32>
    %cst_11 = arith.constant dense<0xFF800000> : vector<256xf32>
    %20 = vector.multi_reduction <maximumf>, %19, %cst_11 [1] : vector<256x256xf32> to vector<256xf32>
    %21 = vector.shape_cast %20 : vector<256xf32> to vector<256x1xf32>
    %22 = vector.broadcast %21 : vector<256x1xf32> to vector<256x256xf32>
    %23 = arith.cmpf oeq, %19, %22 : vector<256x256xf32>
    %c256_i32_12 = arith.constant 256 : i32
    %24 = vector.broadcast %c256_i32_12 : i32 to vector<256x256xi32>
    %25 = arith.select %23, %7, %24 : vector<256x256xi1>, vector<256x256xi32>
    %cst_13 = arith.constant dense<2147483647> : vector<256xi32>
    %26 = vector.multi_reduction <minsi>, %25, %cst_13 [1] : vector<256x256xi32> to vector<256xi32>
    %27 = vector.shape_cast %26 : vector<256xi32> to vector<256x1xi32>
    %28 = vector.broadcast %27 : vector<256x1xi32> to vector<256x256xi32>
    %29 = arith.cmpi eq, %7, %28 : vector<256x256xi32>
    %cst_14 = arith.constant -3.40282347E+38 : f32
    %30 = vector.broadcast %cst_14 : f32 to vector<256x256xf32>
    %31 = arith.select %29, %30, %19 : vector<256x256xi1>, vector<256x256xf32>
    %cst_15 = arith.constant dense<0xFF800000> : vector<256xf32>
    %32 = vector.multi_reduction <maximumf>, %31, %cst_15 [1] : vector<256x256xf32> to vector<256xf32>
    %33 = vector.shape_cast %32 : vector<256xf32> to vector<256x1xf32>
    %34 = vector.broadcast %33 : vector<256x1xf32> to vector<256x256xf32>
    %35 = arith.cmpf oeq, %31, %34 : vector<256x256xf32>
    %c256_i32_16 = arith.constant 256 : i32
    %36 = vector.broadcast %c256_i32_16 : i32 to vector<256x256xi32>
    %37 = arith.select %35, %7, %36 : vector<256x256xi1>, vector<256x256xi32>
    %cst_17 = arith.constant dense<2147483647> : vector<256xi32>
    %38 = vector.multi_reduction <minsi>, %37, %cst_17 [1] : vector<256x256xi32> to vector<256xi32>
    %39 = vector.shape_cast %38 : vector<256xi32> to vector<256x1xi32>
    %40 = vector.broadcast %39 : vector<256x1xi32> to vector<256x256xi32>
    %41 = arith.cmpi eq, %7, %40 : vector<256x256xi32>
    %cst_18 = arith.constant -3.40282347E+38 : f32
    %42 = vector.broadcast %cst_18 : f32 to vector<256x256xf32>
    %43 = arith.select %41, %42, %31 : vector<256x256xi1>, vector<256x256xf32>
    %cst_19 = arith.constant dense<0xFF800000> : vector<256xf32>
    %44 = vector.multi_reduction <maximumf>, %43, %cst_19 [1] : vector<256x256xf32> to vector<256xf32>
    %45 = vector.shape_cast %44 : vector<256xf32> to vector<256x1xf32>
    %46 = vector.broadcast %45 : vector<256x1xf32> to vector<256x256xf32>
    %47 = arith.cmpf oeq, %43, %46 : vector<256x256xf32>
    %c256_i32_20 = arith.constant 256 : i32
    %48 = vector.broadcast %c256_i32_20 : i32 to vector<256x256xi32>
    %49 = arith.select %47, %7, %48 : vector<256x256xi1>, vector<256x256xi32>
    %cst_21 = arith.constant dense<2147483647> : vector<256xi32>
    %50 = vector.multi_reduction <minsi>, %49, %cst_21 [1] : vector<256x256xi32> to vector<256xi32>
    %51 = vector.shape_cast %50 : vector<256xi32> to vector<256x1xi32>
    %52 = tpu.concatenate %15, %27, %39, %51 in 1 : vector<256x1xi32>, vector<256x1xi32>, vector<256x1xi32>, vector<256x1xi32> -> vector<256x4xi32>
    %53 = tpu.transpose %52, [1, 0] : vector<256x4xi32> -> vector<4x256xi32>
    %c0_22 = arith.constant 0 : index
    %c0_23 = arith.constant 0 : index
    %c0_24 = arith.constant 0 : index
    %54 = vector.load %arg5[%c0_22, %c0_23, %c0_24] : memref<1x4x256xi32, #tpu.memory_space<vmem>>, vector<1x4x256xi32>
    %55 = vector.shape_cast %54 : vector<1x4x256xi32> to vector<4x256xi32>
    %56 = vector.shape_cast %53 : vector<4x256xi32> to vector<1x4x256xi32>
    tpu.vector_store %arg5[%c0_22, %c0_23, %c0_24], %56 {strides = array<i32>} : memref<1x4x256xi32, #tpu.memory_space<vmem>>, vector<1x4x256xi32>,
    %57 = vector.broadcast %9 : vector<256x1xf32> to vector<256x256xf32>
    %58 = arith.subf %6, %57 : vector<256x256xf32>
    %59 = math.exp %58 : vector<256x256xf32>
    %cst_25 = arith.constant dense<0.000000e+00> : vector<256xf32>
    %60 = vector.multi_reduction <add>, %59, %cst_25 [1] : vector<256x256xf32> to vector<256xf32>
    %61 = vector.shape_cast %60 : vector<256xf32> to vector<256x1xf32>
    %62 = arith.truncf %59 : vector<256x256xf32> to vector<256x256xbf16>
    %cst_26 = arith.constant dense<0.000000e+00> : vector<32x256xf32>
    %63 = tpu.matmul %5, %62, %cst_26 {dimension_numbers = #tpu.dot_dimension_numbers<[1], [1], [0], [0], [0, 0, 1, 0], [], []>} : vector<32x256xbf16>, vector<256x256xbf16>, vector<32x256xf32> -> vector<32x256xf32>
    %64 = tpu.reciprocal %61 {approx = true} : vector<256x1xf32> -> vector<256x1xf32>
    %65 = tpu.transpose %64, [1, 0] : vector<256x1xf32> -> vector<1x256xf32>
    %66 = vector.broadcast %65 : vector<1x256xf32> to vector<32x256xf32>
    %67 = arith.mulf %63, %66 : vector<32x256xf32>
    %c0_27 = arith.constant 0 : index
    %c0_28 = arith.constant 0 : index
    %c0_29 = arith.constant 0 : index
    %68 = vector.load %arg6[%c0_27, %c0_28, %c0_29] : memref<1x32x256xf32, #tpu.memory_space<vmem>>, vector<1x32x256xf32>
    %69 = vector.shape_cast %68 : vector<1x32x256xf32> to vector<32x256xf32>
    %70 = vector.shape_cast %67 : vector<32x256xf32> to vector<1x32x256xf32>
    tpu.vector_store %arg6[%c0_27, %c0_28, %c0_29], %70 {strides = array<i32>} : memref<1x32x256xf32, #tpu.memory_space<vmem>>, vector<1x32x256xf32>,
    return
  }
  func.func @transform_0(%arg0: i32, %arg1: i32) -> (i32, i32, i32) {
    %c0_i32 = arith.constant 0 : i32
    %c0_i32_0 = arith.constant 0 : i32
    return %arg0, %arg1, %c0_i32 : i32, i32, i32
  }
  func.func @transform_1(%arg0: i32, %arg1: i32) -> (i32, i32, i32) {
    %c0_i32 = arith.constant 0 : i32
    %c0_i32_0 = arith.constant 0 : i32
    %c0_i32_1 = arith.constant 0 : i32
    return %arg0, %c0_i32, %c0_i32_0 : i32, i32, i32
  }
  func.func @transform_2(%arg0: i32, %arg1: i32) -> (i32, i32, i32) {
    %c0_i32 = arith.constant 0 : i32
    %c0_i32_0 = arith.constant 0 : i32
    %c0_i32_1 = arith.constant 0 : i32
    return %arg0, %c0_i32, %c0_i32_0 : i32, i32, i32
  }
  func.func @transform_3(%arg0: i32, %arg1: i32) -> (i32, i32, i32) {
    %c0_i32 = arith.constant 0 : i32
    %c0_i32_0 = arith.constant 0 : i32
    return %arg0, %c0_i32, %arg1 : i32, i32, i32
  }
  func.func @transform_4(%arg0: i32, %arg1: i32) -> (i32, i32, i32) {
    %c0_i32 = arith.constant 0 : i32
    %c0_i32_0 = arith.constant 0 : i32
    return %arg0, %c0_i32, %arg1 : i32, i32, i32
  }
}

</mosaic_0001>

<llo_original>
// kernel: tpu_custom_call.1
$region0: #{tpu_custom_call.1}
  #allocation0 [shape = 'u32[]', space=smem, size = 0x4, offset = 0x4, fixed_abs, tag = 'smem constant byte address 0x4 - core index']
  #allocation1 [shape = 'u32[144,128]{1,0:T(1,128)}', space=vmem, size = 0x12000, scoped, tag = 'internal scratch']
  %s0 = inlined_call_operand.vmem [shape: bf16[2,256,32], index: 0, kind: input, shape index: {}]
  %s1 = inlined_call_operand.vmem [shape: bf16[2,256,32], index: 1, kind: input, shape index: {}]
  %s2 = inlined_call_operand.vmem [shape: bf16[2,32,256], index: 2, kind: input, shape index: {}]
  %s3 = inlined_call_operand.hbm [shape: s32[2,4,256], index: 3, kind: output, shape index: {0}]
  %s4 = inlined_call_operand.hbm [shape: f32[2,32,256], index: 4, kind: output, shape index: {1}]
  %5 = xla_tuple %s3, %s4
  %s6 = sld [smem:[#allocation0]]
  $region53: #{tpu_custom_call.1} parent=0
    _
  %s8 = ssub.s32 1, %s6
  %s9 = scalar_select 0, %s8, %s6
  $region1: #{tpu_custom_call.1} parent=0
    #allocation2 [shape = 'u8[8192]{0}', space=vmem, size = 0x2000, scoped, tag = 'output window, operand 0']
    #allocation3 [shape = 's32[2]{0}', space=sflag, size = 0x8, scoped, tag = 'scoped memory for tpu_custom_call.1']
    #allocation4 [shape = 'u8[65536]{0}', space=vmem, size = 0x10000, scoped, tag = 'output window, operand 1']
    #allocation5 [shape = 's32[2]{0}', space=sflag, size = 0x8, scoped, tag = 'scoped memory for tpu_custom_call.1']
    %10 = vsyncpa [#allocation3], 0
    %s11 = scalar_lea.sflag [#allocation3], 1
    %12 = vsyncpa %s11, 0
    %13 = vsyncpa [#allocation5], 0
    %s14 = scalar_lea.sflag [#allocation5], 1
    %15 = vsyncpa %s14, 0
    loop: start=0, step=1, limit=4
    $region2: #{tpu_custom_call.1} parent=1 // loop_pre_header
      _
    $region3: #{tpu_custom_call.1} parent=1 // loop_header
      %s17 = sphi 0, %s21
      %p18 = scmp.ge.s32.totalorder %s17, 4
      %s24 = sphi 0, %s36
      %s25 = sphi 0, %s32
      %s26 = sphi 0, %s24
      %s27 = sphi 0, %s25
      %s28 = sphi 0, %s26
      %s29 = sphi 0, %s27
      %s41 = sphi 0, %s43
      %s44 = sphi 0, %s41
      %s45 = sphi 0, %s44
      %s61 = sphi 0, %s45
      %s67 = sphi 0, %s69
      %s70 = sphi 0, %s67
      %s71 = sphi 0, %s70
      %s87 = sphi 0, %s71
      %s93 = sphi 0, %s95
      %s96 = sphi 0, %s93
      %s97 = sphi 0, %s96
      %s113 = sphi 0, %s97
      %s121 = sphi 0, %s123
      %s124 = sphi 0, %s121
      %s125 = sphi 0, %s124
      %s141 = sphi 0, %s125
      %s149 = sphi 0, %s151
      %s152 = sphi 0, %s149
      %s153 = sphi 0, %s152
      %s169 = sphi 0, %s153
    $region4: #{tpu_custom_call.1} parent=1 // loop_header_branch
      %20 = sbr.rel (%p18) target = $region8
    $region5: #{tpu_custom_call.1} parent=1 // loop_body
      %s22 = ssub.s32 %s17, 1
      %s23 = ssub.s32 %s17, 2
      %s30 = sadd.s32 1, %s25
      %p31 = scmp.ge.s32.totalorder %s30, 1
      %s32 = scalar_select %p31, 0, %s30
      %s33 = sadd.s32 1, %s24
      %s34 = scalar_select %p31, %s33, %s24
      %p35 = scmp.ge.s32.totalorder %s34, 2
      %s36 = scalar_select %p35, 0, %s34
      %s37 = ssub.s32 %s24, %s36
      %s38 = ssub.s32 %s25, %s32
      %s39 = sor.u32 %s37, %s38
      %p40 = scmp.eq.s32.totalorder %s39, 0
      %s42 = sadd.s32 %s41, 1
      %s43 = scalar_select %p40, %s41, %s42
      %p46 = pneg %p40
      %p47 = scmp.eq.s32.totalorder %s17, 1
      %p48 = por %p46, %p47
      %p49 = scmp.ne.s32.totalorder %s41, %s44
      %p50 = scmp.eq.s32.totalorder %s17, 0
      %p51 = por %p49, %p50
      %p52 = scmp.ne.s32.totalorder %s41, %s44
      %p53 = scmp.eq.s32.totalorder %s22, 1
      %p54 = por %p52, %p53
      %p55 = scmp.ne.s32.totalorder %s44, %s45
      %p56 = scmp.eq.s32.totalorder %s22, 0
      %p57 = por %p55, %p56
      %p58 = scmp.ne.s32.totalorder %s44, %s45
      %p59 = scmp.eq.s32.totalorder %s23, 1
      %p60 = por %p58, %p59
      %p62 = scmp.ne.s32.totalorder %s45, %s61
      %p63 = scmp.eq.s32.totalorder %s23, 0
      %p64 = por %p62, %p63
      %s65 = ssub.s32 %s24, %s36
      %p66 = scmp.eq.s32.totalorder %s65, 0
      %s68 = sadd.s32 %s67, 1
      %s69 = scalar_select %p66, %s67, %s68
      %p72 = pneg %p66
      %p73 = scmp.eq.s32.totalorder %s17, 1
      %p74 = por %p72, %p73
      %p75 = scmp.ne.s32.totalorder %s67, %s70
      %p76 = scmp.eq.s32.totalorder %s17, 0
      %p77 = por %p75, %p76
      %p78 = scmp.ne.s32.totalorder %s67, %s70
      %p79 = scmp.eq.s32.totalorder %s22, 1
      %p80 = por %p78, %p79
      %p81 = scmp.ne.s32.totalorder %s70, %s71
      %p82 = scmp.eq.s32.totalorder %s22, 0
      %p83 = por %p81, %p82
      %p84 = scmp.ne.s32.totalorder %s70, %s71
      %p85 = scmp.eq.s32.totalorder %s23, 1
      %p86 = por %p84, %p85
      %p88 = scmp.ne.s32.totalorder %s71, %s87
      %p89 = scmp.eq.s32.totalorder %s23, 0
      %p90 = por %p88, %p89
      %s91 = ssub.s32 %s24, %s36
      %p92 = scmp.eq.s32.totalorder %s91, 0
      %s94 = sadd.s32 %s93, 1
      %s95 = scalar_select %p92, %s93, %s94
      %p98 = pneg %p92
      %p99 = scmp.eq.s32.totalorder %s17, 1
      %p100 = por %p98, %p99
      %p101 = scmp.ne.s32.totalorder %s93, %s96
      %p102 = scmp.eq.s32.totalorder %s17, 0
      %p103 = por %p101, %p102
      %p104 = scmp.ne.s32.totalorder %s93, %s96
      %p105 = scmp.eq.s32.totalorder %s22, 1
      %p106 = por %p104, %p105
      %p107 = scmp.ne.s32.totalorder %s96, %s97
      %p108 = scmp.eq.s32.totalorder %s22, 0
      %p109 = por %p107, %p108
      %p110 = scmp.ne.s32.totalorder %s96, %s97
      %p111 = scmp.eq.s32.totalorder %s23, 1
      %p112 = por %p110, %p111
      %p114 = scmp.ne.s32.totalorder %s97, %s113
      %p115 = scmp.eq.s32.totalorder %s23, 0
      %p116 = por %p114, %p115
      %s117 = ssub.s32 %s24, %s36
      %s118 = ssub.s32 %s25, %s32
      %s119 = sor.u32 %s117, %s118
      %p120 = scmp.eq.s32.totalorder %s119, 0
      %s122 = sadd.s32 %s121, 1
      %s123 = scalar_select %p120, %s121, %s122
      %p126 = pneg %p120
      %p127 = scmp.eq.s32.totalorder %s17, 1
      %p128 = por %p126, %p127
      %p129 = scmp.ne.s32.totalorder %s121, %s124
      %p130 = scmp.eq.s32.totalorder %s17, 0
      %p131 = por %p129, %p130
      %p132 = scmp.ne.s32.totalorder %s121, %s124
      %p133 = scmp.eq.s32.totalorder %s22, 1
      %p134 = por %p132, %p133
      %p135 = scmp.ne.s32.totalorder %s124, %s125
      %p136 = scmp.eq.s32.totalorder %s22, 0
      %p137 = por %p135, %p136
      %p138 = scmp.ne.s32.totalorder %s124, %s125
      %p139 = scmp.eq.s32.totalorder %s23, 1
      %p140 = por %p138, %p139
      %p142 = scmp.ne.s32.totalorder %s125, %s141
      %p143 = scmp.eq.s32.totalorder %s23, 0
      %p144 = por %p142, %p143
      %s145 = ssub.s32 %s24, %s36
      %s146 = ssub.s32 %s25, %s32
      %s147 = sor.u32 %s145, %s146
      %p148 = scmp.eq.s32.totalorder %s147, 0
      %s150 = sadd.s32 %s149, 1
      %s151 = scalar_select %p148, %s149, %s150
      %p154 = pneg %p148
      %p155 = scmp.eq.s32.totalorder %s17, 1
      %p156 = por %p154, %p155
      %p157 = scmp.ne.s32.totalorder %s149, %s152
      %p158 = scmp.eq.s32.totalorder %s17, 0
      %p159 = por %p157, %p158
      %p160 = scmp.ne.s32.totalorder %s149, %s152
      %p161 = scmp.eq.s32.totalorder %s22, 1
      %p162 = por %p160, %p161
      %p163 = scmp.ne.s32.totalorder %s152, %s153
      %p164 = scmp.eq.s32.totalorder %s22, 0
      %p165 = por %p163, %p164
      %p166 = scmp.ne.s32.totalorder %s152, %s153
      %p167 = scmp.eq.s32.totalorder %s23, 1
      %p168 = por %p166, %p167
      %p170 = scmp.ne.s32.totalorder %s153, %s169
      %p171 = scmp.eq.s32.totalorder %s23, 0
      %p172 = por %p170, %p171
      %p173 = scmp.le.s32.totalorder 1, %s17
      %p174 = scmp.lt.s32.totalorder %s17, 3
      %p175 = pnand %p173, %p174
      %p176 = pneg %p175
      // Predicated region
      $region9: #{tpu_custom_call.1} parent=5 // pred_check
        _
      $region10: #{tpu_custom_call.1} parent=5 // pred_check_branch
        %178 = sbr.rel (%p175) target = $region12
      $region11: #{tpu_custom_call.1} parent=5 // pred_region
        %s179 = ssub.s32 %s17, 1
      $region12: #{tpu_custom_call.1} parent=5 // pred_fallthru
        _
      %p180 = scmp.lt.s32.totalorder %s17, 2
      // Predicated region
      $region13: #{tpu_custom_call.1} parent=5 // pred_check
        %p181 = pneg %p180
      $region14: #{tpu_custom_call.1} parent=5 // pred_check_branch
        %183 = sbr.rel (%p181) target = $region16
      $region15: #{tpu_custom_call.1} parent=5 // pred_region
        // Predicated region
        $region17: #{tpu_custom_call.1} parent=15 // pred_check
          %p184 = pneg %p51
        $region18: #{tpu_custom_call.1} parent=15 // pred_check_branch
          %186 = sbr.rel (%p184) target = $region20
        $region19: #{tpu_custom_call.1} parent=15 // pred_region
          %s187 = smul.u32 32, %s25
          %p188 = scmp.lt.s32.totalorder %s24, 1
          %s189 = scalar_select %p188, %s24, 1
          %p190 = scmp.lt.s32.totalorder %s187, 31
          %s191 = scalar_select %p190, %s187, 31
          %s192 = smul.addr %s189, 32
          %s193 = sadd.s32 %s191, %s192
          %s194 = smul.addr %s193, 4
          %s195 = scalar_lea.vmem %s0, %s194
          %s196 = smul.u32 32, %s25
        $region20: #{tpu_custom_call.1} parent=15 // pred_fallthru
          _
        // Predicated region
        $region21: #{tpu_custom_call.1} parent=15 // pred_check
          %p197 = pneg %p77
        $region22: #{tpu_custom_call.1} parent=15 // pred_check_branch
          %199 = sbr.rel (%p197) target = $region24
        $region23: #{tpu_custom_call.1} parent=15 // pred_region
          %p200 = scmp.lt.s32.totalorder %s24, 1
          %s201 = scalar_select %p200, %s24, 1
          %s202 = smul.addr %s201, 32
          %s203 = smul.addr %s202, 4
          %s204 = scalar_lea.vmem %s1, %s203
        $region24: #{tpu_custom_call.1} parent=15 // pred_fallthru
          _
        // Predicated region
        $region25: #{tpu_custom_call.1} parent=15 // pred_check
          %p205 = pneg %p103
        $region26: #{tpu_custom_call.1} parent=15 // pred_check_branch
          %207 = sbr.rel (%p205) target = $region28
        $region27: #{tpu_custom_call.1} parent=15 // pred_region
          %p208 = scmp.lt.s32.totalorder %s24, 1
          %s209 = scalar_select %p208, %s24, 1
          %s210 = smul.addr %s209, 8
          %s211 = smul.addr %s210, 4
          %s212 = scalar_lea.vmem %s2, %s211
        $region28: #{tpu_custom_call.1} parent=15 // pred_fallthru
          _
      $region16: #{tpu_custom_call.1} parent=5 // pred_fallthru
        _
      %p213 = scmp.le.s32.totalorder 1, %s17
      %p214 = scmp.lt.s32.totalorder %s17, 3
      %p215 = pnand %p213, %p214
      %p216 = pneg %p215
      // Predicated region
      $region29: #{tpu_custom_call.1} parent=5 // pred_check
        _
      $region30: #{tpu_custom_call.1} parent=5 // pred_check_branch
        %218 = sbr.rel (%p215) target = $region32
      $region31: #{tpu_custom_call.1} parent=5 // pred_region
        %s219 = ssub.s32 %s17, 1
        %s220 = smul.u32 32, %s27
        %p221 = scmp.lt.s32.totalorder %s26, 1
        %s222 = scalar_select %p221, %s26, 1
        %p223 = scmp.lt.s32.totalorder %s220, 31
        %s224 = scalar_select %p223, %s220, 31
        %s225 = smul.addr %s222, 32
        %s226 = sadd.s32 %s224, %s225
        %s227 = smul.addr %s226, 4
        %s228 = scalar_lea.vmem %s0, %s227
        %p229 = pneg %p57
        %p230 = pneg %p54
        %p231 = scmp.lt.s32.totalorder %s26, 1
        %s232 = scalar_select %p231, %s26, 1
        %s233 = smul.addr %s232, 32
        %s234 = smul.addr %s233, 4
        %s235 = scalar_lea.vmem %s1, %s234
        %p236 = pneg %p83
        %p237 = pneg %p80
        %p238 = scmp.lt.s32.totalorder %s26, 1
        %s239 = scalar_select %p238, %s26, 1
        %s240 = smul.addr %s239, 8
        %s241 = smul.addr %s240, 4
        %s242 = scalar_lea.vmem %s2, %s241
        %p243 = pneg %p109
        %p244 = pneg %p106
        %p245 = pneg %p137
        %p246 = pneg %p134
        %s247 = sand.u32 %s124, 1
        %s248 = scalar_lea.sflag [#allocation3], %s247
        %s249 = sand.u32 %s124, 1
        %s250 = smul.addr %s249, 8
        %s251 = scalar_lea.vmem [#allocation2], %s250
        %p252 = pneg %p165
        %p253 = pneg %p162
        %s254 = sand.u32 %s152, 1
        %s255 = scalar_lea.sflag [#allocation5], %s254
        %s256 = sand.u32 %s152, 1
        %s257 = smul.addr %s256, 64
        %s258 = scalar_lea.vmem [#allocation4], %s257
        %s259 = smul.u32 32, %s27
        %p260 = scmp.lt.s32.totalorder %s26, 1
        %s261 = scalar_select %p260, %s26, 1
        %p262 = scmp.lt.s32.totalorder %s259, 31
        %s263 = scalar_select %p262, %s259, 31
        %s264 = smul.addr %s261, 32
        %s265 = sadd.s32 %s263, %s264
        %s266 = smul.addr %s265, 4
        %s267 = scalar_lea.vmem %s0, %s266
        %s268 = smul.u32 32, %s27
        %p269 = scmp.lt.s32.totalorder %s26, 1
        %s270 = scalar_select %p269, %s26, 1
        %s271 = smul.addr %s270, 32
        %s272 = smul.addr %s271, 4
        %s273 = scalar_lea.vmem %s1, %s272
        %p274 = scmp.lt.s32.totalorder %s26, 1
        %s275 = scalar_select %p274, %s26, 1
        %s276 = smul.addr %s275, 8
        %s277 = smul.addr %s276, 4
        %s278 = scalar_lea.vmem %s2, %s277
        %s279 = smul.u32 2, %s27
        %s280 = smul.u32 2, %s27
        %v282 = vld [vmem:[%s267] sm:$0xf]
        %v283 = vld [vmem:[%s267 + $0x4] sm:$0xf]
        %v284 = vld [vmem:[%s267 + $0x8] sm:$0xf]
        %v285 = vld [vmem:[%s267 + $0xc] sm:$0xf]
        %v286 = vld [vmem:[%s267 + $0x10] sm:$0xf]
        %v287 = vld [vmem:[%s267 + $0x14] sm:$0xf]
        %v288 = vld [vmem:[%s267 + $0x18] sm:$0xf]
        %v289 = vld [vmem:[%s267 + $0x1c] sm:$0xf]
        %v290 = vld [vmem:[%s267 + $0x20] sm:$0xf]
        %v291 = vld [vmem:[%s267 + $0x24] sm:$0xf]
        %v292 = vld [vmem:[%s267 + $0x28] sm:$0xf]
        %v293 = vld [vmem:[%s267 + $0x2c] sm:$0xf]
        %v294 = vld [vmem:[%s267 + $0x30] sm:$0xf]
        %v295 = vld [vmem:[%s267 + $0x34] sm:$0xf]
        %v296 = vld [vmem:[%s267 + $0x38] sm:$0xf]
        %v297 = vld [vmem:[%s267 + $0x3c] sm:$0xf]
        %v298 = vld [vmem:[%s267 + $0x40] sm:$0xf]
        %v299 = vld [vmem:[%s267 + $0x44] sm:$0xf]
        %v300 = vld [vmem:[%s267 + $0x48] sm:$0xf]
        %v301 = vld [vmem:[%s267 + $0x4c] sm:$0xf]
        %v302 = vld [vmem:[%s267 + $0x50] sm:$0xf]
        %v303 = vld [vmem:[%s267 + $0x54] sm:$0xf]
        %v304 = vld [vmem:[%s267 + $0x58] sm:$0xf]
        %v305 = vld [vmem:[%s267 + $0x5c] sm:$0xf]
        %v306 = vld [vmem:[%s267 + $0x60] sm:$0xf]
        %v307 = vld [vmem:[%s267 + $0x64] sm:$0xf]
        %v308 = vld [vmem:[%s267 + $0x68] sm:$0xf]
        %v309 = vld [vmem:[%s267 + $0x6c] sm:$0xf]
        %v310 = vld [vmem:[%s267 + $0x70] sm:$0xf]
        %v311 = vld [vmem:[%s267 + $0x74] sm:$0xf]
        %v312 = vld [vmem:[%s267 + $0x78] sm:$0xf]
        %v313 = vld [vmem:[%s267 + $0x7c] sm:$0xf]
        %v314 = vld [vmem:[%s273] sm:$0xf]
        %v315 = vld [vmem:[%s273 + $0x4] sm:$0xf]
        %v316 = vld [vmem:[%s273 + $0x8] sm:$0xf]
        %v317 = vld [vmem:[%s273 + $0xc] sm:$0xf]
        %v318 = vld [vmem:[%s273 + $0x10] sm:$0xf]
        %v319 = vld [vmem:[%s273 + $0x14] sm:$0xf]
        %v320 = vld [vmem:[%s273 + $0x18] sm:$0xf]
        %v321 = vld [vmem:[%s273 + $0x1c] sm:$0xf]
        %v322 = vld [vmem:[%s273 + $0x20] sm:$0xf]
        %v323 = vld [vmem:[%s273 + $0x24] sm:$0xf]
        %v324 = vld [vmem:[%s273 + $0x28] sm:$0xf]
        %v325 = vld [vmem:[%s273 + $0x2c] sm:$0xf]
        %v326 = vld [vmem:[%s273 + $0x30] sm:$0xf]
        %v327 = vld [vmem:[%s273 + $0x34] sm:$0xf]
        %v328 = vld [vmem:[%s273 + $0x38] sm:$0xf]
        %v329 = vld [vmem:[%s273 + $0x3c] sm:$0xf]
        %v330 = vld [vmem:[%s273 + $0x40] sm:$0xf]
        %v331 = vld [vmem:[%s273 + $0x44] sm:$0xf]
        %v332 = vld [vmem:[%s273 + $0x48] sm:$0xf]
        %v333 = vld [vmem:[%s273 + $0x4c] sm:$0xf]
        %v334 = vld [vmem:[%s273 + $0x50] sm:$0xf]
        %v335 = vld [vmem:[%s273 + $0x54] sm:$0xf]
        %v336 = vld [vmem:[%s273 + $0x58] sm:$0xf]
        %v337 = vld [vmem:[%s273 + $0x5c] sm:$0xf]
        %v338 = vld [vmem:[%s273 + $0x60] sm:$0xf]
        %v339 = vld [vmem:[%s273 + $0x64] sm:$0xf]
        %v340 = vld [vmem:[%s273 + $0x68] sm:$0xf]
        %v341 = vld [vmem:[%s273 + $0x6c] sm:$0xf]
        %v342 = vld [vmem:[%s273 + $0x70] sm:$0xf]
        %v343 = vld [vmem:[%s273 + $0x74] sm:$0xf]
        %v344 = vld [vmem:[%s273 + $0x78] sm:$0xf]
        %v345 = vld [vmem:[%s273 + $0x7c] sm:$0xf]
        %v346 = vld [vmem:[%s278] sm:$0xff]
        %v347 = vld [vmem:[%s278 + $0x8] sm:$0xff]
        %v348 = vld [vmem:[%s278 + $0x10] sm:$0xff]
        %v349 = vld [vmem:[%s278 + $0x18] sm:$0xff]
        %v382 = vunpack.c.l.b16 %v282
        %v383 = vunpack.c.l.b16 %v283
        %v384 = vunpack.c.l.b16 %v284
        %v385 = vunpack.c.l.b16 %v285
        %v386 = vunpack.c.l.b16 %v286
        %v387 = vunpack.c.l.b16 %v287
        %v388 = vunpack.c.l.b16 %v288
        %v389 = vunpack.c.l.b16 %v289
        %v390 = vunpack.c.l.b16 %v290
        %v391 = vunpack.c.l.b16 %v291
        %v392 = vunpack.c.l.b16 %v292
        %v393 = vunpack.c.l.b16 %v293
        %v394 = vunpack.c.l.b16 %v294
        %v395 = vunpack.c.l.b16 %v295
        %v396 = vunpack.c.l.b16 %v296
        %v397 = vunpack.c.l.b16 %v297
        %v398 = vunpack.c.l.b16 %v298
        %v399 = vunpack.c.l.b16 %v299
        %v400 = vunpack.c.l.b16 %v300
        %v401 = vunpack.c.l.b16 %v301
        %v402 = vunpack.c.l.b16 %v302
        %v403 = vunpack.c.l.b16 %v303
        %v404 = vunpack.c.l.b16 %v304
        %v405 = vunpack.c.l.b16 %v305
        %v406 = vunpack.c.l.b16 %v306
        %v407 = vunpack.c.l.b16 %v307
        %v408 = vunpack.c.l.b16 %v308
        %v409 = vunpack.c.l.b16 %v309
        %v410 = vunpack.c.l.b16 %v310
        %v411 = vunpack.c.l.b16 %v311
        %v412 = vunpack.c.l.b16 %v312
        %v413 = vunpack.c.l.b16 %v313
        %v414 = vpack.c.b16 %v383, %v382
        %v415 = vpack.c.b16 %v385, %v384
        %v416 = vpack.c.b16 %v387, %v386
        %v417 = vpack.c.b16 %v389, %v388
        %v418 = vpack.c.b16 %v391, %v390
        %v419 = vpack.c.b16 %v393, %v392
        %v420 = vpack.c.b16 %v395, %v394
        %v421 = vpack.c.b16 %v397, %v396
        %v422 = vpack.c.b16 %v399, %v398
        %v423 = vpack.c.b16 %v401, %v400
        %v424 = vpack.c.b16 %v403, %v402
        %v425 = vpack.c.b16 %v405, %v404
        %v426 = vpack.c.b16 %v407, %v406
        %v427 = vpack.c.b16 %v409, %v408
        %v428 = vpack.c.b16 %v411, %v410
        %v429 = vpack.c.b16 %v413, %v412
        %v462 = vunpack.c.l.b16 %v314
        %v463 = vunpack.c.l.b16 %v315
        %v464 = vunpack.c.l.b16 %v316
        %v465 = vunpack.c.l.b16 %v317
        %v466 = vunpack.c.l.b16 %v318
        %v467 = vunpack.c.l.b16 %v319
        %v468 = vunpack.c.l.b16 %v320
        %v469 = vunpack.c.l.b16 %v321
        %v470 = vunpack.c.l.b16 %v322
        %v471 = vunpack.c.l.b16 %v323
        %v472 = vunpack.c.l.b16 %v324
        %v473 = vunpack.c.l.b16 %v325
        %v474 = vunpack.c.l.b16 %v326
        %v475 = vunpack.c.l.b16 %v327
        %v476 = vunpack.c.l.b16 %v328
        %v477 = vunpack.c.l.b16 %v329
        %v478 = vunpack.c.l.b16 %v330
        %v479 = vunpack.c.l.b16 %v331
        %v480 = vunpack.c.l.b16 %v332
        %v481 = vunpack.c.l.b16 %v333
        %v482 = vunpack.c.l.b16 %v334
        %v483 = vunpack.c.l.b16 %v335
        %v484 = vunpack.c.l.b16 %v336
        %v485 = vunpack.c.l.b16 %v337
        %v486 = vunpack.c.l.b16 %v338
        %v487 = vunpack.c.l.b16 %v339
        %v488 = vunpack.c.l.b16 %v340
        %v489 = vunpack.c.l.b16 %v341
        %v490 = vunpack.c.l.b16 %v342
        %v491 = vunpack.c.l.b16 %v343
        %v492 = vunpack.c.l.b16 %v344
        %v493 = vunpack.c.l.b16 %v345
        %v494 = vpack.c.b16 %v463, %v462
        %v495 = vpack.c.b16 %v465, %v464
        %v496 = vpack.c.b16 %v467, %v466
        %v497 = vpack.c.b16 %v469, %v468
        %v498 = vpack.c.b16 %v471, %v470
        %v499 = vpack.c.b16 %v473, %v472
        %v500 = vpack.c.b16 %v475, %v474
        %v501 = vpack.c.b16 %v477, %v476
        %v502 = vpack.c.b16 %v479, %v478
        %v503 = vpack.c.b16 %v481, %v480
        %v504 = vpack.c.b16 %v483, %v482
        %v505 = vpack.c.b16 %v485, %v484
        %v506 = vpack.c.b16 %v487, %v486
        %v507 = vpack.c.b16 %v489, %v488
        %v508 = vpack.c.b16 %v491, %v490
        %v509 = vpack.c.b16 %v493, %v492
        %vm510 = vcmask 261120
        %v512 = vsel %vm510, %v414, 0
        %v515 = vsel %vm510, %v415, 0
        %v518 = vsel %vm510, %v416, 0
        %v521 = vsel %vm510, %v417, 0
        %v524 = vsel %vm510, %v418, 0
        %v527 = vsel %vm510, %v419, 0
        %v530 = vsel %vm510, %v420, 0
        %v533 = vsel %vm510, %v421, 0
        %v536 = vsel %vm510, %v422, 0
        %v539 = vsel %vm510, %v423, 0
        %v542 = vsel %vm510, %v424, 0
        %v545 = vsel %vm510, %v425, 0
        %v548 = vsel %vm510, %v426, 0
        %v551 = vsel %vm510, %v427, 0
        %v554 = vsel %vm510, %v428, 0
        %v557 = vsel %vm510, %v429, 0
        %v560 = vsel %vm510, %v494, 0
        %v563 = vsel %vm510, %v495, 0
        %v566 = vsel %vm510, %v496, 0
        %v569 = vsel %vm510, %v497, 0
        %v572 = vsel %vm510, %v498, 0
        %v575 = vsel %vm510, %v499, 0
        %v578 = vsel %vm510, %v500, 0
        %v581 = vsel %vm510, %v501, 0
        %v584 = vsel %vm510, %v502, 0
        %v587 = vsel %vm510, %v503, 0
        %v590 = vsel %vm510, %v504, 0
        %v593 = vsel %vm510, %v505, 0
        %v596 = vsel %vm510, %v506, 0
        %v599 = vsel %vm510, %v507, 0
        %v602 = vsel %vm510, %v508, 0
        %v605 = vsel %vm510, %v509, 0
        %607 = vmatprep.subr.bf16.mxu0 0
        %608 = vmatpush1.bf16.xpose.msra.mxu0 %v560
        %609 = vmatprep.subr.bf16.mxu0 0
        %610 = vmatpush1.bf16.xpose.msra.mxu0 %v563
        %611 = vmatprep.subr.bf16.mxu0 0
        %612 = vmatpush1.bf16.xpose.msra.mxu0 %v566
        %613 = vmatprep.subr.bf16.mxu0 0
        %614 = vmatpush1.bf16.xpose.msra.mxu0 %v569
        %615 = vmatprep.subr.bf16.mxu0 0
        %616 = vmatpush1.bf16.xpose.msra.mxu0 %v572
        %617 = vmatprep.subr.bf16.mxu0 0
        %618 = vmatpush1.bf16.xpose.msra.mxu0 %v575
        %619 = vmatprep.subr.bf16.mxu0 0
        %620 = vmatpush1.bf16.xpose.msra.mxu0 %v578
        %621 = vmatprep.subr.bf16.mxu0 0
        %622 = vmatpush1.bf16.xpose.msra.mxu0 %v581
        %623 = vmatprep.subr.bf16.mxu0 0
        %624 = vmatpush1.bf16.xpose.msra.mxu0 %v584
        %625 = vmatprep.subr.bf16.mxu0 0
        %626 = vmatpush1.bf16.xpose.msra.mxu0 %v587
        %627 = vmatprep.subr.bf16.mxu0 0
        %628 = vmatpush1.bf16.xpose.msra.mxu0 %v590
        %629 = vmatprep.subr.bf16.mxu0 0
        %630 = vmatpush1.bf16.xpose.msra.mxu0 %v593
        %631 = vmatprep.subr.bf16.mxu0 0
        %632 = vmatpush1.bf16.xpose.msra.mxu0 %v596
        %633 = vmatprep.subr.bf16.mxu0 0
        %634 = vmatpush1.bf16.xpose.msra.mxu0 %v599
        %635 = vmatprep.subr.bf16.mxu0 0
        %636 = vmatpush1.bf16.xpose.msra.mxu0 %v602
        %637 = vmatprep.subr.bf16.mxu0 0
        %638 = vmatpush1.bf16.xpose.msra.mxu0 %v605
        %639 = vmatprep.mubr.bf16.mxu0 0
        %640 = vmatmul.mubr.bf16.gmra.mrb[0].mxu0 %v512
        %v641 = vpop.f32.mrb[0].mxu0
        %v642 = vadd.f32 0.0, %v641
        %v643 = vpop.f32.mrb[0].mxu0
        %v644 = vadd.f32 0.0, %v643
        %v645 = vpop.f32.mrb[0].mxu0
        %v646 = vadd.f32 0.0, %v645
        %v647 = vpop.f32.mrb[0].mxu0
        %v648 = vadd.f32 0.0, %v647
        %649 = vmatprep.mubr.bf16.mxu0 0
        %650 = vmatmul.mubr.bf16.gmra.mrb[0].mxu0 %v515
        %v651 = vpop.f32.mrb[0].mxu0
        %v652 = vadd.f32 0.0, %v651
        %v653 = vpop.f32.mrb[0].mxu0
        %v654 = vadd.f32 0.0, %v653
        %v655 = vpop.f32.mrb[0].mxu0
        %v656 = vadd.f32 0.0, %v655
        %v657 = vpop.f32.mrb[0].mxu0
        %v658 = vadd.f32 0.0, %v657
        %659 = vmatprep.mubr.bf16.mxu0 0
        %660 = vmatmul.mubr.bf16.gmra.mrb[0].mxu0 %v518
        %v661 = vpop.f32.mrb[0].mxu0
        %v662 = vadd.f32 0.0, %v661
        %v663 = vpop.f32.mrb[0].mxu0
        %v664 = vadd.f32 0.0, %v663
        %v665 = vpop.f32.mrb[0].mxu0
        %v666 = vadd.f32 0.0, %v665
        %v667 = vpop.f32.mrb[0].mxu0
        %v668 = vadd.f32 0.0, %v667
        %669 = vmatprep.mubr.bf16.mxu0 0
        %670 = vmatmul.mubr.bf16.gmra.mrb[0].mxu0 %v521
        %v671 = vpop.f32.mrb[0].mxu0
        %v672 = vadd.f32 0.0, %v671
        %v673 = vpop.f32.mrb[0].mxu0
        %v674 = vadd.f32 0.0, %v673
        %v675 = vpop.f32.mrb[0].mxu0
        %v676 = vadd.f32 0.0, %v675
        %v677 = vpop.f32.mrb[0].mxu0
        %v678 = vadd.f32 0.0, %v677
        %679 = vmatprep.mubr.bf16.mxu0 0
        %680 = vmatmul.mubr.bf16.gmra.mrb[0].mxu0 %v524
        %v681 = vpop.f32.mrb[0].mxu0
        %v682 = vadd.f32 0.0, %v681
        %v683 = vpop.f32.mrb[0].mxu0
        %v684 = vadd.f32 0.0, %v683
        %v685 = vpop.f32.mrb[0].mxu0
        %v686 = vadd.f32 0.0, %v685
        %v687 = vpop.f32.mrb[0].mxu0
        %v688 = vadd.f32 0.0, %v687
        %689 = vmatprep.mubr.bf16.mxu0 0
        %690 = vmatmul.mubr.bf16.gmra.mrb[0].mxu0 %v527
        %v691 = vpop.f32.mrb[0].mxu0
        %v692 = vadd.f32 0.0, %v691
        %v693 = vpop.f32.mrb[0].mxu0
        %v694 = vadd.f32 0.0, %v693
        %v695 = vpop.f32.mrb[0].mxu0
        %v696 = vadd.f32 0.0, %v695
        %v697 = vpop.f32.mrb[0].mxu0
        %v698 = vadd.f32 0.0, %v697
        %699 = vmatprep.mubr.bf16.mxu0 0
        %700 = vmatmul.mubr.bf16.gmra.mrb[0].mxu0 %v530
        %v701 = vpop.f32.mrb[0].mxu0
        %v702 = vadd.f32 0.0, %v701
        %v703 = vpop.f32.mrb[0].mxu0
        %v704 = vadd.f32 0.0, %v703
        %v705 = vpop.f32.mrb[0].mxu0
        %v706 = vadd.f32 0.0, %v705
        %v707 = vpop.f32.mrb[0].mxu0
        %v708 = vadd.f32 0.0, %v707
        %709 = vmatprep.mubr.bf16.mxu0 0
        %710 = vmatmul.mubr.bf16.gmra.mrb[0].mxu0 %v533
        %v711 = vpop.f32.mrb[0].mxu0
        %v712 = vadd.f32 0.0, %v711
        %v713 = vpop.f32.mrb[0].mxu0
        %v714 = vadd.f32 0.0, %v713
        %v715 = vpop.f32.mrb[0].mxu0
        %v716 = vadd.f32 0.0, %v715
        %v717 = vpop.f32.mrb[0].mxu0
        %v718 = vadd.f32 0.0, %v717
        %719 = vmatprep.mubr.bf16.mxu0 0
        %720 = vmatmul.mubr.bf16.gmra.mrb[0].mxu0 %v536
        %v721 = vpop.f32.mrb[0].mxu0
        %v722 = vadd.f32 0.0, %v721
        %v723 = vpop.f32.mrb[0].mxu0
        %v724 = vadd.f32 0.0, %v723
        %v725 = vpop.f32.mrb[0].mxu0
        %v726 = vadd.f32 0.0, %v725
        %v727 = vpop.f32.mrb[0].mxu0
        %v728 = vadd.f32 0.0, %v727
        %729 = vmatprep.mubr.bf16.mxu0 0
        %730 = vmatmul.mubr.bf16.gmra.mrb[0].mxu0 %v539
        %v731 = vpop.f32.mrb[0].mxu0
        %v732 = vadd.f32 0.0, %v731
        %v733 = vpop.f32.mrb[0].mxu0
        %v734 = vadd.f32 0.0, %v733
        %v735 = vpop.f32.mrb[0].mxu0
        %v736 = vadd.f32 0.0, %v735
        %v737 = vpop.f32.mrb[0].mxu0
        %v738 = vadd.f32 0.0, %v737
        %739 = vmatprep.mubr.bf16.mxu0 0
        %740 = vmatmul.mubr.bf16.gmra.mrb[0].mxu0 %v542
        %v741 = vpop.f32.mrb[0].mxu0
        %v742 = vadd.f32 0.0, %v741
        %v743 = vpop.f32.mrb[0].mxu0
        %v744 = vadd.f32 0.0, %v743
        %v745 = vpop.f32.mrb[0].mxu0
        %v746 = vadd.f32 0.0, %v745
        %v747 = vpop.f32.mrb[0].mxu0
        %v748 = vadd.f32 0.0, %v747
        %749 = vmatprep.mubr.bf16.mxu0 0
        %750 = vmatmul.mubr.bf16.gmra.mrb[0].mxu0 %v545
        %v751 = vpop.f32.mrb[0].mxu0
        %v752 = vadd.f32 0.0, %v751
        %v753 = vpop.f32.mrb[0].mxu0
        %v754 = vadd.f32 0.0, %v753
        %v755 = vpop.f32.mrb[0].mxu0
        %v756 = vadd.f32 0.0, %v755
        %v757 = vpop.f32.mrb[0].mxu0
        %v758 = vadd.f32 0.0, %v757
        %759 = vmatprep.mubr.bf16.mxu0 0
        %760 = vmatmul.mubr.bf16.gmra.mrb[0].mxu0 %v548
        %v761 = vpop.f32.mrb[0].mxu0
        %v762 = vadd.f32 0.0, %v761
        %v763 = vpop.f32.mrb[0].mxu0
        %v764 = vadd.f32 0.0, %v763
        %v765 = vpop.f32.mrb[0].mxu0
        %v766 = vadd.f32 0.0, %v765
        %v767 = vpop.f32.mrb[0].mxu0
        %v768 = vadd.f32 0.0, %v767
        %769 = vmatprep.mubr.bf16.mxu0 0
        %770 = vmatmul.mubr.bf16.gmra.mrb[0].mxu0 %v551
        %v771 = vpop.f32.mrb[0].mxu0
        %v772 = vadd.f32 0.0, %v771
        %v773 = vpop.f32.mrb[0].mxu0
        %v774 = vadd.f32 0.0, %v773
        %v775 = vpop.f32.mrb[0].mxu0
        %v776 = vadd.f32 0.0, %v775
        %v777 = vpop.f32.mrb[0].mxu0
        %v778 = vadd.f32 0.0, %v777
        %779 = vmatprep.mubr.bf16.mxu0 0
        %780 = vmatmul.mubr.bf16.gmra.mrb[0].mxu0 %v554
        %v781 = vpop.f32.mrb[0].mxu0
        %v782 = vadd.f32 0.0, %v781
        %v783 = vpop.f32.mrb[0].mxu0
        %v784 = vadd.f32 0.0, %v783
        %v785 = vpop.f32.mrb[0].mxu0
        %v786 = vadd.f32 0.0, %v785
        %v787 = vpop.f32.mrb[0].mxu0
        %v788 = vadd.f32 0.0, %v787
        %789 = vmatprep.mubr.bf16.mxu0 0
        %790 = vmatmul.mubr.bf16.gmra.mrb[0].mxu0 %v557
        %v791 = vpop.f32.mrb[0].mxu0
        %v792 = vadd.f32 0.0, %v791
        %v793 = vpop.f32.mrb[0].mxu0
        %v794 = vadd.f32 0.0, %v793
        %v795 = vpop.f32.mrb[0].mxu0
        %v796 = vadd.f32 0.0, %v795
        %v797 = vpop.f32.mrb[0].mxu0
        %v798 = vadd.f32 0.0, %v797
        %799 = vdwg.mxu0
        %v800 = vlaneseq
        %v801 = vand.u32 %v800, 127
        %v802 = vadd.s32 %v801, 128
        %v803 = vmax.f32 %v642, %v644
        %804 = vmax.xlane.f32.xlu0 %v803
        %v805 = vpop.xlane.xlu0 %804
        %v806 = vmax.f32 %v646, %v648
        %807 = vmax.xlane.f32.xlu0 %v806
        %v808 = vpop.xlane.xlu0 %807
        %v809 = vmax.f32 %v652, %v654
        %810 = vmax.xlane.f32.xlu0 %v809
        %v811 = vpop.xlane.xlu0 %810
        %v812 = vmax.f32 %v656, %v658
        %813 = vmax.xlane.f32.xlu0 %v812
        %v814 = vpop.xlane.xlu0 %813
        %v815 = vmax.f32 %v662, %v664
        %816 = vmax.xlane.f32.xlu0 %v815
        %v817 = vpop.xlane.xlu0 %816
        %v818 = vmax.f32 %v666, %v668
        %819 = vmax.xlane.f32.xlu0 %v818
        %v820 = vpop.xlane.xlu0 %819
        %v821 = vmax.f32 %v672, %v674
        %822 = vmax.xlane.f32.xlu0 %v821
        %v823 = vpop.xlane.xlu0 %822
        %v824 = vmax.f32 %v676, %v678
        %825 = vmax.xlane.f32.xlu0 %v824
        %v826 = vpop.xlane.xlu0 %825
        %v827 = vmax.f32 %v682, %v684
        %828 = vmax.xlane.f32.xlu0 %v827
        %v829 = vpop.xlane.xlu0 %828
        %v830 = vmax.f32 %v686, %v688
        %831 = vmax.xlane.f32.xlu0 %v830
        %v832 = vpop.xlane.xlu0 %831
        %v833 = vmax.f32 %v692, %v694
        %834 = vmax.xlane.f32.xlu0 %v833
        %v835 = vpop.xlane.xlu0 %834
        %v836 = vmax.f32 %v696, %v698
        %837 = vmax.xlane.f32.xlu0 %v836
        %v838 = vpop.xlane.xlu0 %837
        %v839 = vmax.f32 %v702, %v704
        %840 = vmax.xlane.f32.xlu0 %v839
        %v841 = vpop.xlane.xlu0 %840
        %v842 = vmax.f32 %v706, %v708
        %843 = vmax.xlane.f32.xlu0 %v842
        %v844 = vpop.xlane.xlu0 %843
        %v845 = vmax.f32 %v712, %v714
        %846 = vmax.xlane.f32.xlu0 %v845
        %v847 = vpop.xlane.xlu0 %846
        %v848 = vmax.f32 %v716, %v718
        %849 = vmax.xlane.f32.xlu0 %v848
        %v850 = vpop.xlane.xlu0 %849
        %v851 = vmax.f32 %v722, %v724
        %852 = vmax.xlane.f32.xlu0 %v851
        %v853 = vpop.xlane.xlu0 %852
        %v854 = vmax.f32 %v726, %v728
        %855 = vmax.xlane.f32.xlu0 %v854
        %v856 = vpop.xlane.xlu0 %855
        %v857 = vmax.f32 %v732, %v734
        %858 = vmax.xlane.f32.xlu0 %v857
        %v859 = vpop.xlane.xlu0 %858
        %v860 = vmax.f32 %v736, %v738
        %861 = vmax.xlane.f32.xlu0 %v860
        %v862 = vpop.xlane.xlu0 %861
        %v863 = vmax.f32 %v742, %v744
        %864 = vmax.xlane.f32.xlu0 %v863
        %v865 = vpop.xlane.xlu0 %864
        %v866 = vmax.f32 %v746, %v748
        %867 = vmax.xlane.f32.xlu0 %v866
        %v868 = vpop.xlane.xlu0 %867
        %v869 = vmax.f32 %v752, %v754
        %870 = vmax.xlane.f32.xlu0 %v869
        %v871 = vpop.xlane.xlu0 %870
        %v872 = vmax.f32 %v756, %v758
        %873 = vmax.xlane.f32.xlu0 %v872
        %v874 = vpop.xlane.xlu0 %873
        %v875 = vmax.f32 %v762, %v764
        %876 = vmax.xlane.f32.xlu0 %v875
        %v877 = vpop.xlane.xlu0 %876
        %v878 = vmax.f32 %v766, %v768
        %879 = vmax.xlane.f32.xlu0 %v878
        %v880 = vpop.xlane.xlu0 %879
        %v881 = vmax.f32 %v772, %v774
        %882 = vmax.xlane.f32.xlu0 %v881
        %v883 = vpop.xlane.xlu0 %882
        %v884 = vmax.f32 %v776, %v778
        %885 = vmax.xlane.f32.xlu0 %v884
        %v886 = vpop.xlane.xlu0 %885
        %v887 = vmax.f32 %v782, %v784
        %888 = vmax.xlane.f32.xlu0 %v887
        %v889 = vpop.xlane.xlu0 %888
        %v890 = vmax.f32 %v786, %v788
        %891 = vmax.xlane.f32.xlu0 %v890
        %v892 = vpop.xlane.xlu0 %891
        %v893 = vmax.f32 %v792, %v794
        %894 = vmax.xlane.f32.xlu0 %v893
        %v895 = vpop.xlane.xlu0 %894
        %v896 = vmax.f32 %v796, %v798
        %897 = vmax.xlane.f32.xlu0 %v896
        %v898 = vpop.xlane.xlu0 %897
        %vm899 = vcmp.eq.f32.partialorder %v642, %v805
        %vm900 = vcmp.eq.f32.partialorder %v644, %v805
        %vm901 = vcmp.eq.f32.partialorder %v646, %v808
        %vm902 = vcmp.eq.f32.partialorder %v648, %v808
        %vm903 = vcmp.eq.f32.partialorder %v652, %v811
        %vm904 = vcmp.eq.f32.partialorder %v654, %v811
        %vm905 = vcmp.eq.f32.partialorder %v656, %v814
        %vm906 = vcmp.eq.f32.partialorder %v658, %v814
        %vm907 = vcmp.eq.f32.partialorder %v662, %v817
        %vm908 = vcmp.eq.f32.partialorder %v664, %v817
        %vm909 = vcmp.eq.f32.partialorder %v666, %v820
        %vm910 = vcmp.eq.f32.partialorder %v668, %v820
        %vm911 = vcmp.eq.f32.partialorder %v672, %v823
        %vm912 = vcmp.eq.f32.partialorder %v674, %v823
        %vm913 = vcmp.eq.f32.partialorder %v676, %v826
        %vm914 = vcmp.eq.f32.partialorder %v678, %v826
        %vm915 = vcmp.eq.f32.partialorder %v682, %v829
        %vm916 = vcmp.eq.f32.partialorder %v684, %v829
        %vm917 = vcmp.eq.f32.partialorder %v686, %v832
        %vm918 = vcmp.eq.f32.partialorder %v688, %v832
        %vm919 = vcmp.eq.f32.partialorder %v692, %v835
        %vm920 = vcmp.eq.f32.partialorder %v694, %v835
        %vm921 = vcmp.eq.f32.partialorder %v696, %v838
        %vm922 = vcmp.eq.f32.partialorder %v698, %v838
        %vm923 = vcmp.eq.f32.partialorder %v702, %v841
        %vm924 = vcmp.eq.f32.partialorder %v704, %v841
        %vm925 = vcmp.eq.f32.partialorder %v706, %v844
        %vm926 = vcmp.eq.f32.partialorder %v708, %v844
        %vm927 = vcmp.eq.f32.partialorder %v712, %v847
        %vm928 = vcmp.eq.f32.partialorder %v714, %v847
        %vm929 = vcmp.eq.f32.partialorder %v716, %v850
        %vm930 = vcmp.eq.f32.partialorder %v718, %v850
        %vm931 = vcmp.eq.f32.partialorder %v722, %v853
        %vm932 = vcmp.eq.f32.partialorder %v724, %v853
        %vm933 = vcmp.eq.f32.partialorder %v726, %v856
        %vm934 = vcmp.eq.f32.partialorder %v728, %v856
        %vm935 = vcmp.eq.f32.partialorder %v732, %v859
        %vm936 = vcmp.eq.f32.partialorder %v734, %v859
        %vm937 = vcmp.eq.f32.partialorder %v736, %v862
        %vm938 = vcmp.eq.f32.partialorder %v738, %v862
        %vm939 = vcmp.eq.f32.partialorder %v742, %v865
        %vm940 = vcmp.eq.f32.partialorder %v744, %v865
        %vm941 = vcmp.eq.f32.partialorder %v746, %v868
        %vm942 = vcmp.eq.f32.partialorder %v748, %v868
        %vm943 = vcmp.eq.f32.partialorder %v752, %v871
        %vm944 = vcmp.eq.f32.partialorder %v754, %v871
        %vm945 = vcmp.eq.f32.partialorder %v756, %v874
        %vm946 = vcmp.eq.f32.partialorder %v758, %v874
        %vm947 = vcmp.eq.f32.partialorder %v762, %v877
        %vm948 = vcmp.eq.f32.partialorder %v764, %v877
        %vm949 = vcmp.eq.f32.partialorder %v766, %v880
        %vm950 = vcmp.eq.f32.partialorder %v768, %v880
        %vm951 = vcmp.eq.f32.partialorder %v772, %v883
        %vm952 = vcmp.eq.f32.partialorder %v774, %v883
        %vm953 = vcmp.eq.f32.partialorder %v776, %v886
        %vm954 = vcmp.eq.f32.partialorder %v778, %v886
        %vm955 = vcmp.eq.f32.partialorder %v782, %v889
        %vm956 = vcmp.eq.f32.partialorder %v784, %v889
        %vm957 = vcmp.eq.f32.partialorder %v786, %v892
        %vm958 = vcmp.eq.f32.partialorder %v788, %v892
        %vm959 = vcmp.eq.f32.partialorder %v792, %v895
        %vm960 = vcmp.eq.f32.partialorder %v794, %v895
        %vm961 = vcmp.eq.f32.partialorder %v796, %v898
        %vm962 = vcmp.eq.f32.partialorder %v798, %v898
        %v963 = vsel %vm899, %v801, 256
        %v964 = vsel %vm900, %v802, 256
        %v965 = vsel %vm901, %v801, 256
        %v966 = vsel %vm902, %v802, 256
        %v967 = vsel %vm903, %v801, 256
        %v968 = vsel %vm904, %v802, 256
        %v969 = vsel %vm905, %v801, 256
        %v970 = vsel %vm906, %v802, 256
        %v971 = vsel %vm907, %v801, 256
        %v972 = vsel %vm908, %v802, 256
        %v973 = vsel %vm909, %v801, 256
        %v974 = vsel %vm910, %v802, 256
        %v975 = vsel %vm911, %v801, 256
        %v976 = vsel %vm912, %v802, 256
        %v977 = vsel %vm913, %v801, 256
        %v978 = vsel %vm914, %v802, 256
        %v979 = vsel %vm915, %v801, 256
        %v980 = vsel %vm916, %v802, 256
        %v981 = vsel %vm917, %v801, 256
        %v982 = vsel %vm918, %v802, 256
        %v983 = vsel %vm919, %v801, 256
        %v984 = vsel %vm920, %v802, 256
        %v985 = vsel %vm921, %v801, 256
        %v986 = vsel %vm922, %v802, 256
        %v987 = vsel %vm923, %v801, 256
        %v988 = vsel %vm924, %v802, 256
        %v989 = vsel %vm925, %v801, 256
        %v990 = vsel %vm926, %v802, 256
        %v991 = vsel %vm927, %v801, 256
        %v992 = vsel %vm928, %v802, 256
        %v993 = vsel %vm929, %v801, 256
        %v994 = vsel %vm930, %v802, 256
        %v995 = vsel %vm931, %v801, 256
        %v996 = vsel %vm932, %v802, 256
        %v997 = vsel %vm933, %v801, 256
        %v998 = vsel %vm934, %v802, 256
        %v999 = vsel %vm935, %v801, 256
        %v1000 = vsel %vm936, %v802, 256
        %v1001 = vsel %vm937, %v801, 256
        %v1002 = vsel %vm938, %v802, 256
        %v1003 = vsel %vm939, %v801, 256
        %v1004 = vsel %vm940, %v802, 256
        %v1005 = vsel %vm941, %v801, 256
        %v1006 = vsel %vm942, %v802, 256
        %v1007 = vsel %vm943, %v801, 256
        %v1008 = vsel %vm944, %v802, 256
        %v1009 = vsel %vm945, %v801, 256
        %v1010 = vsel %vm946, %v802, 256
        %v1011 = vsel %vm947, %v801, 256
        %v1012 = vsel %vm948, %v802, 256
        %v1013 = vsel %vm949, %v801, 256
        %v1014 = vsel %vm950, %v802, 256
        %v1015 = vsel %vm951, %v801, 256
        %v1016 = vsel %vm952, %v802, 256
        %v1017 = vsel %vm953, %v801, 256
        %v1018 = vsel %vm954, %v802, 256
        %v1019 = vsel %vm955, %v801, 256
        %v1020 = vsel %vm956, %v802, 256
        %v1021 = vsel %vm957, %v801, 256
        %v1022 = vsel %vm958, %v802, 256
        %v1023 = vsel %vm959, %v801, 256
        %v1024 = vsel %vm960, %v802, 256
        %v1025 = vsel %vm961, %v801, 256
        %v1026 = vsel %vm962, %v802, 256
        %vm1027 = vcmp.lt.s32.totalorder %v963, %v964
        %v1028 = vsel %vm1027, %v963, %v964
        %v1029 = vand.u32 %v1028, 65535
        %v1030 = vshra.s32 %v1028, 16
        %v1031 = vcvt.s32.f32 %v1029
        %v1032 = vcvt.s32.f32 %v1030
        %1033 = vmin.xlane.f32.xlu0 %v1032
        %v1034 = vpop.xlane.xlu0 %1033
        %vm1035 = vcmp.eq.f32.partialorder %v1032, %v1034
        %v1036 = vsel %vm1035, %v1031, inf
        %1037 = vmin.xlane.f32.xlu0 %v1036
        %v1038 = vpop.xlane.xlu0 %1037
        %v1039 = vcvt.f32.s32 %v1038
        %v1040 = vcvt.f32.s32 %v1034
        %v1041 = vshll.u32 %v1040, 16
        %v1042 = vadd.s32 %v1041, %v1039
        %vm1043 = vcmp.lt.s32.totalorder %v965, %v966
        %v1044 = vsel %vm1043, %v965, %v966
        %v1045 = vand.u32 %v1044, 65535
        %v1046 = vshra.s32 %v1044, 16
        %v1047 = vcvt.s32.f32 %v1045
        %v1048 = vcvt.s32.f32 %v1046
        %1049 = vmin.xlane.f32.xlu0 %v1048
        %v1050 = vpop.xlane.xlu0 %1049
        %vm1051 = vcmp.eq.f32.partialorder %v1048, %v1050
        %v1052 = vsel %vm1051, %v1047, inf
        %1053 = vmin.xlane.f32.xlu0 %v1052
        %v1054 = vpop.xlane.xlu0 %1053
        %v1055 = vcvt.f32.s32 %v1054
        %v1056 = vcvt.f32.s32 %v1050
        %v1057 = vshll.u32 %v1056, 16
        %v1058 = vadd.s32 %v1057, %v1055
        %vm1059 = vcmp.lt.s32.totalorder %v967, %v968
        %v1060 = vsel %vm1059, %v967, %v968
        %v1061 = vand.u32 %v1060, 65535
        %v1062 = vshra.s32 %v1060, 16
        %v1063 = vcvt.s32.f32 %v1061
        %v1064 = vcvt.s32.f32 %v1062
        %1065 = vmin.xlane.f32.xlu0 %v1064
        %v1066 = vpop.xlane.xlu0 %1065
        %vm1067 = vcmp.eq.f32.partialorder %v1064, %v1066
        %v1068 = vsel %vm1067, %v1063, inf
        %1069 = vmin.xlane.f32.xlu0 %v1068
        %v1070 = vpop.xlane.xlu0 %1069
        %v1071 = vcvt.f32.s32 %v1070
        %v1072 = vcvt.f32.s32 %v1066
        %v1073 = vshll.u32 %v1072, 16
        %v1074 = vadd.s32 %v1073, %v1071
        %vm1075 = vcmp.lt.s32.totalorder %v969, %v970
        %v1076 = vsel %vm1075, %v969, %v970
        %v1077 = vand.u32 %v1076, 65535
        %v1078 = vshra.s32 %v1076, 16
        %v1079 = vcvt.s32.f32 %v1077
        %v1080 = vcvt.s32.f32 %v1078
        %1081 = vmin.xlane.f32.xlu0 %v1080
        %v1082 = vpop.xlane.xlu0 %1081
        %vm1083 = vcmp.eq.f32.partialorder %v1080, %v1082
        %v1084 = vsel %vm1083, %v1079, inf
        %1085 = vmin.xlane.f32.xlu0 %v1084
        %v1086 = vpop.xlane.xlu0 %1085
        %v1087 = vcvt.f32.s32 %v1086
        %v1088 = vcvt.f32.s32 %v1082
        %v1089 = vshll.u32 %v1088, 16
        %v1090 = vadd.s32 %v1089, %v1087
        %vm1091 = vcmp.lt.s32.totalorder %v971, %v972
        %v1092 = vsel %vm1091, %v971, %v972
        %v1093 = vand.u32 %v1092, 65535
        %v1094 = vshra.s32 %v1092, 16
        %v1095 = vcvt.s32.f32 %v1093
        %v1096 = vcvt.s32.f32 %v1094
        %1097 = vmin.xlane.f32.xlu0 %v1096
        %v1098 = vpop.xlane.xlu0 %1097
        %vm1099 = vcmp.eq.f32.partialorder %v1096, %v1098
        %v1100 = vsel %vm1099, %v1095, inf
        %1101 = vmin.xlane.f32.xlu0 %v1100
        %v1102 = vpop.xlane.xlu0 %1101
        %v1103 = vcvt.f32.s32 %v1102
        %v1104 = vcvt.f32.s32 %v1098
        %v1105 = vshll.u32 %v1104, 16
        %v1106 = vadd.s32 %v1105, %v1103
        %vm1107 = vcmp.lt.s32.totalorder %v973, %v974
        %v1108 = vsel %vm1107, %v973, %v974
        %v1109 = vand.u32 %v1108, 65535
        %v1110 = vshra.s32 %v1108, 16
        %v1111 = vcvt.s32.f32 %v1109
        %v1112 = vcvt.s32.f32 %v1110
        %1113 = vmin.xlane.f32.xlu0 %v1112
        %v1114 = vpop.xlane.xlu0 %1113
        %vm1115 = vcmp.eq.f32.partialorder %v1112, %v1114
        %v1116 = vsel %vm1115, %v1111, inf
        %1117 = vmin.xlane.f32.xlu0 %v1116
        %v1118 = vpop.xlane.xlu0 %1117
        %v1119 = vcvt.f32.s32 %v1118
        %v1120 = vcvt.f32.s32 %v1114
        %v1121 = vshll.u32 %v1120, 16
        %v1122 = vadd.s32 %v1121, %v1119
        %vm1123 = vcmp.lt.s32.totalorder %v975, %v976
        %v1124 = vsel %vm1123, %v975, %v976
        %v1125 = vand.u32 %v1124, 65535
        %v1126 = vshra.s32 %v1124, 16
        %v1127 = vcvt.s32.f32 %v1125
        %v1128 = vcvt.s32.f32 %v1126
        %1129 = vmin.xlane.f32.xlu0 %v1128
        %v1130 = vpop.xlane.xlu0 %1129
        %vm1131 = vcmp.eq.f32.partialorder %v1128, %v1130
        %v1132 = vsel %vm1131, %v1127, inf
        %1133 = vmin.xlane.f32.xlu0 %v1132
        %v1134 = vpop.xlane.xlu0 %1133
        %v1135 = vcvt.f32.s32 %v1134
        %v1136 = vcvt.f32.s32 %v1130
        %v1137 = vshll.u32 %v1136, 16
        %v1138 = vadd.s32 %v1137, %v1135
        %vm1139 = vcmp.lt.s32.totalorder %v977, %v978
        %v1140 = vsel %vm1139, %v977, %v978
        %v1141 = vand.u32 %v1140, 65535
        %v1142 = vshra.s32 %v1140, 16
        %v1143 = vcvt.s32.f32 %v1141
        %v1144 = vcvt.s32.f32 %v1142
        %1145 = vmin.xlane.f32.xlu0 %v1144
        %v1146 = vpop.xlane.xlu0 %1145
        %vm1147 = vcmp.eq.f32.partialorder %v1144, %v1146
        %v1148 = vsel %vm1147, %v1143, inf
        %1149 = vmin.xlane.f32.xlu0 %v1148
        %v1150 = vpop.xlane.xlu0 %1149
        %v1151 = vcvt.f32.s32 %v1150
        %v1152 = vcvt.f32.s32 %v1146
        %v1153 = vshll.u32 %v1152, 16
        %v1154 = vadd.s32 %v1153, %v1151
        %vm1155 = vcmp.lt.s32.totalorder %v979, %v980
        %v1156 = vsel %vm1155, %v979, %v980
        %v1157 = vand.u32 %v1156, 65535
        %v1158 = vshra.s32 %v1156, 16
        %v1159 = vcvt.s32.f32 %v1157
        %v1160 = vcvt.s32.f32 %v1158
        %1161 = vmin.xlane.f32.xlu0 %v1160
        %v1162 = vpop.xlane.xlu0 %1161
        %vm1163 = vcmp.eq.f32.partialorder %v1160, %v1162
        %v1164 = vsel %vm1163, %v1159, inf
        %1165 = vmin.xlane.f32.xlu0 %v1164
        %v1166 = vpop.xlane.xlu0 %1165
        %v1167 = vcvt.f32.s32 %v1166
        %v1168 = vcvt.f32.s32 %v1162
        %v1169 = vshll.u32 %v1168, 16
        %v1170 = vadd.s32 %v1169, %v1167
        %vm1171 = vcmp.lt.s32.totalorder %v981, %v982
        %v1172 = vsel %vm1171, %v981, %v982
        %v1173 = vand.u32 %v1172, 65535
        %v1174 = vshra.s32 %v1172, 16
        %v1175 = vcvt.s32.f32 %v1173
        %v1176 = vcvt.s32.f32 %v1174
        %1177 = vmin.xlane.f32.xlu0 %v1176
        %v1178 = vpop.xlane.xlu0 %1177
        %vm1179 = vcmp.eq.f32.partialorder %v1176, %v1178
        %v1180 = vsel %vm1179, %v1175, inf
        %1181 = vmin.xlane.f32.xlu0 %v1180
        %v1182 = vpop.xlane.xlu0 %1181
        %v1183 = vcvt.f32.s32 %v1182
        %v1184 = vcvt.f32.s32 %v1178
        %v1185 = vshll.u32 %v1184, 16
        %v1186 = vadd.s32 %v1185, %v1183
        %vm1187 = vcmp.lt.s32.totalorder %v983, %v984
        %v1188 = vsel %vm1187, %v983, %v984
        %v1189 = vand.u32 %v1188, 65535
        %v1190 = vshra.s32 %v1188, 16
        %v1191 = vcvt.s32.f32 %v1189
        %v1192 = vcvt.s32.f32 %v1190
        %1193 = vmin.xlane.f32.xlu0 %v1192
        %v1194 = vpop.xlane.xlu0 %1193
        %vm1195 = vcmp.eq.f32.partialorder %v1192, %v1194
        %v1196 = vsel %vm1195, %v1191, inf
        %1197 = vmin.xlane.f32.xlu0 %v1196
        %v1198 = vpop.xlane.xlu0 %1197
        %v1199 = vcvt.f32.s32 %v1198
        %v1200 = vcvt.f32.s32 %v1194
        %v1201 = vshll.u32 %v1200, 16
        %v1202 = vadd.s32 %v1201, %v1199
        %vm1203 = vcmp.lt.s32.totalorder %v985, %v986
        %v1204 = vsel %vm1203, %v985, %v986
        %v1205 = vand.u32 %v1204, 65535
        %v1206 = vshra.s32 %v1204, 16
        %v1207 = vcvt.s32.f32 %v1205
        %v1208 = vcvt.s32.f32 %v1206
        %1209 = vmin.xlane.f32.xlu0 %v1208
        %v1210 = vpop.xlane.xlu0 %1209
        %vm1211 = vcmp.eq.f32.partialorder %v1208, %v1210
        %v1212 = vsel %vm1211, %v1207, inf
        %1213 = vmin.xlane.f32.xlu0 %v1212
        %v1214 = vpop.xlane.xlu0 %1213
        %v1215 = vcvt.f32.s32 %v1214
        %v1216 = vcvt.f32.s32 %v1210
        %v1217 = vshll.u32 %v1216, 16
        %v1218 = vadd.s32 %v1217, %v1215
        %vm1219 = vcmp.lt.s32.totalorder %v987, %v988
        %v1220 = vsel %vm1219, %v987, %v988
        %v1221 = vand.u32 %v1220, 65535
        %v1222 = vshra.s32 %v1220, 16
        %v1223 = vcvt.s32.f32 %v1221
        %v1224 = vcvt.s32.f32 %v1222
        %1225 = vmin.xlane.f32.xlu0 %v1224
        %v1226 = vpop.xlane.xlu0 %1225
        %vm1227 = vcmp.eq.f32.partialorder %v1224, %v1226
        %v1228 = vsel %vm1227, %v1223, inf
        %1229 = vmin.xlane.f32.xlu0 %v1228
        %v1230 = vpop.xlane.xlu0 %1229
        %v1231 = vcvt.f32.s32 %v1230
        %v1232 = vcvt.f32.s32 %v1226
        %v1233 = vshll.u32 %v1232, 16
        %v1234 = vadd.s32 %v1233, %v1231
        %vm1235 = vcmp.lt.s32.totalorder %v989, %v990
        %v1236 = vsel %vm1235, %v989, %v990
        %v1237 = vand.u32 %v1236, 65535
        %v1238 = vshra.s32 %v1236, 16
        %v1239 = vcvt.s32.f32 %v1237
        %v1240 = vcvt.s32.f32 %v1238
        %1241 = vmin.xlane.f32.xlu0 %v1240
        %v1242 = vpop.xlane.xlu0 %1241
        %vm1243 = vcmp.eq.f32.partialorder %v1240, %v1242
        %v1244 = vsel %vm1243, %v1239, inf
        %1245 = vmin.xlane.f32.xlu0 %v1244
        %v1246 = vpop.xlane.xlu0 %1245
        %v1247 = vcvt.f32.s32 %v1246
        %v1248 = vcvt.f32.s32 %v1242
        %v1249 = vshll.u32 %v1248, 16
        %v1250 = vadd.s32 %v1249, %v1247
        %vm1251 = vcmp.lt.s32.totalorder %v991, %v992
        %v1252 = vsel %vm1251, %v991, %v992
        %v1253 = vand.u32 %v1252, 65535
        %v1254 = vshra.s32 %v1252, 16
        %v1255 = vcvt.s32.f32 %v1253
        %v1256 = vcvt.s32.f32 %v1254
        %1257 = vmin.xlane.f32.xlu0 %v1256
        %v1258 = vpop.xlane.xlu0 %1257
        %vm1259 = vcmp.eq.f32.partialorder %v1256, %v1258
        %v1260 = vsel %vm1259, %v1255, inf
        %1261 = vmin.xlane.f32.xlu0 %v1260
        %v1262 = vpop.xlane.xlu0 %1261
        %v1263 = vcvt.f32.s32 %v1262
        %v1264 = vcvt.f32.s32 %v1258
        %v1265 = vshll.u32 %v1264, 16
        %v1266 = vadd.s32 %v1265, %v1263
        %vm1267 = vcmp.lt.s32.totalorder %v993, %v994
        %v1268 = vsel %vm1267, %v993, %v994
        %v1269 = vand.u32 %v1268, 65535
        %v1270 = vshra.s32 %v1268, 16
        %v1271 = vcvt.s32.f32 %v1269
        %v1272 = vcvt.s32.f32 %v1270
        %1273 = vmin.xlane.f32.xlu0 %v1272
        %v1274 = vpop.xlane.xlu0 %1273
        %vm1275 = vcmp.eq.f32.partialorder %v1272, %v1274
        %v1276 = vsel %vm1275, %v1271, inf
        %1277 = vmin.xlane.f32.xlu0 %v1276
        %v1278 = vpop.xlane.xlu0 %1277
        %v1279 = vcvt.f32.s32 %v1278
        %v1280 = vcvt.f32.s32 %v1274
        %v1281 = vshll.u32 %v1280, 16
        %v1282 = vadd.s32 %v1281, %v1279
        %vm1283 = vcmp.lt.s32.totalorder %v995, %v996
        %v1284 = vsel %vm1283, %v995, %v996
        %v1285 = vand.u32 %v1284, 65535
        %v1286 = vshra.s32 %v1284, 16
        %v1287 = vcvt.s32.f32 %v1285
        %v1288 = vcvt.s32.f32 %v1286
        %1289 = vmin.xlane.f32.xlu0 %v1288
        %v1290 = vpop.xlane.xlu0 %1289
        %vm1291 = vcmp.eq.f32.partialorder %v1288, %v1290
        %v1292 = vsel %vm1291, %v1287, inf
        %1293 = vmin.xlane.f32.xlu0 %v1292
        %v1294 = vpop.xlane.xlu0 %1293
        %v1295 = vcvt.f32.s32 %v1294
        %v1296 = vcvt.f32.s32 %v1290
        %v1297 = vshll.u32 %v1296, 16
        %v1298 = vadd.s32 %v1297, %v1295
        %vm1299 = vcmp.lt.s32.totalorder %v997, %v998
        %v1300 = vsel %vm1299, %v997, %v998
        %v1301 = vand.u32 %v1300, 65535
        %v1302 = vshra.s32 %v1300, 16
        %v1303 = vcvt.s32.f32 %v1301
        %v1304 = vcvt.s32.f32 %v1302
        %1305 = vmin.xlane.f32.xlu0 %v1304
        %v1306 = vpop.xlane.xlu0 %1305
        %vm1307 = vcmp.eq.f32.partialorder %v1304, %v1306
        %v1308 = vsel %vm1307, %v1303, inf
        %1309 = vmin.xlane.f32.xlu0 %v1308
        %v1310 = vpop.xlane.xlu0 %1309
        %v1311 = vcvt.f32.s32 %v1310
        %v1312 = vcvt.f32.s32 %v1306
        %v1313 = vshll.u32 %v1312, 16
        %v1314 = vadd.s32 %v1313, %v1311
        %vm1315 = vcmp.lt.s32.totalorder %v999, %v1000
        %v1316 = vsel %vm1315, %v999, %v1000
        %v1317 = vand.u32 %v1316, 65535
        %v1318 = vshra.s32 %v1316, 16
        %v1319 = vcvt.s32.f32 %v1317
        %v1320 = vcvt.s32.f32 %v1318
        %1321 = vmin.xlane.f32.xlu0 %v1320
        %v1322 = vpop.xlane.xlu0 %1321
        %vm1323 = vcmp.eq.f32.partialorder %v1320, %v1322
        %v1324 = vsel %vm1323, %v1319, inf
        %1325 = vmin.xlane.f32.xlu0 %v1324
        %v1326 = vpop.xlane.xlu0 %1325
        %v1327 = vcvt.f32.s32 %v1326
        %v1328 = vcvt.f32.s32 %v1322
        %v1329 = vshll.u32 %v1328, 16
        %v1330 = vadd.s32 %v1329, %v1327
        %vm1331 = vcmp.lt.s32.totalorder %v1001, %v1002
        %v1332 = vsel %vm1331, %v1001, %v1002
        %v1333 = vand.u32 %v1332, 65535
        %v1334 = vshra.s32 %v1332, 16
        %v1335 = vcvt.s32.f32 %v1333
        %v1336 = vcvt.s32.f32 %v1334
        %1337 = vmin.xlane.f32.xlu0 %v1336
        %v1338 = vpop.xlane.xlu0 %1337
        %vm1339 = vcmp.eq.f32.partialorder %v1336, %v1338
        %v1340 = vsel %vm1339, %v1335, inf
        %1341 = vmin.xlane.f32.xlu0 %v1340
        %v1342 = vpop.xlane.xlu0 %1341
        %v1343 = vcvt.f32.s32 %v1342
        %v1344 = vcvt.f32.s32 %v1338
        %v1345 = vshll.u32 %v1344, 16
        %v1346 = vadd.s32 %v1345, %v1343
        %vm1347 = vcmp.lt.s32.totalorder %v1003, %v1004
        %v1348 = vsel %vm1347, %v1003, %v1004
        %v1349 = vand.u32 %v1348, 65535
        %v1350 = vshra.s32 %v1348, 16
        %v1351 = vcvt.s32.f32 %v1349
        %v1352 = vcvt.s32.f32 %v1350
        %1353 = vmin.xlane.f32.xlu0 %v1352
        %v1354 = vpop.xlane.xlu0 %1353
        %vm1355 = vcmp.eq.f32.partialorder %v1352, %v1354
        %v1356 = vsel %vm1355, %v1351, inf
        %1357 = vmin.xlane.f32.xlu0 %v1356
        %v1358 = vpop.xlane.xlu0 %1357
        %v1359 = vcvt.f32.s32 %v1358
        %v1360 = vcvt.f32.s32 %v1354
        %v1361 = vshll.u32 %v1360, 16
        %v1362 = vadd.s32 %v1361, %v1359
        %vm1363 = vcmp.lt.s32.totalorder %v1005, %v1006
        %v1364 = vsel %vm1363, %v1005, %v1006
        %v1365 = vand.u32 %v1364, 65535
        %v1366 = vshra.s32 %v1364, 16
        %v1367 = vcvt.s32.f32 %v1365
        %v1368 = vcvt.s32.f32 %v1366
        %1369 = vmin.xlane.f32.xlu0 %v1368
        %v1370 = vpop.xlane.xlu0 %1369
        %vm1371 = vcmp.eq.f32.partialorder %v1368, %v1370
        %v1372 = vsel %vm1371, %v1367, inf
        %1373 = vmin.xlane.f32.xlu0 %v1372
        %v1374 = vpop.xlane.xlu0 %1373
        %v1375 = vcvt.f32.s32 %v1374
        %v1376 = vcvt.f32.s32 %v1370
        %v1377 = vshll.u32 %v1376, 16
        %v1378 = vadd.s32 %v1377, %v1375
        %vm1379 = vcmp.lt.s32.totalorder %v1007, %v1008
        %v1380 = vsel %vm1379, %v1007, %v1008
        %v1381 = vand.u32 %v1380, 65535
        %v1382 = vshra.s32 %v1380, 16
        %v1383 = vcvt.s32.f32 %v1381
        %v1384 = vcvt.s32.f32 %v1382
        %1385 = vmin.xlane.f32.xlu0 %v1384
        %v1386 = vpop.xlane.xlu0 %1385
        %vm1387 = vcmp.eq.f32.partialorder %v1384, %v1386
        %v1388 = vsel %vm1387, %v1383, inf
        %1389 = vmin.xlane.f32.xlu0 %v1388
        %v1390 = vpop.xlane.xlu0 %1389
        %v1391 = vcvt.f32.s32 %v1390
        %v1392 = vcvt.f32.s32 %v1386
        %v1393 = vshll.u32 %v1392, 16
        %v1394 = vadd.s32 %v1393, %v1391
        %vm1395 = vcmp.lt.s32.totalorder %v1009, %v1010
        %v1396 = vsel %vm1395, %v1009, %v1010
        %v1397 = vand.u32 %v1396, 65535
        %v1398 = vshra.s32 %v1396, 16
        %v1399 = vcvt.s32.f32 %v1397
        %v1400 = vcvt.s32.f32 %v1398
        %1401 = vmin.xlane.f32.xlu0 %v1400
        %v1402 = vpop.xlane.xlu0 %1401
        %vm1403 = vcmp.eq.f32.partialorder %v1400, %v1402
        %v1404 = vsel %vm1403, %v1399, inf
        %1405 = vmin.xlane.f32.xlu0 %v1404
        %v1406 = vpop.xlane.xlu0 %1405
        %v1407 = vcvt.f32.s32 %v1406
        %v1408 = vcvt.f32.s32 %v1402
        %v1409 = vshll.u32 %v1408, 16
        %v1410 = vadd.s32 %v1409, %v1407
        %vm1411 = vcmp.lt.s32.totalorder %v1011, %v1012
        %v1412 = vsel %vm1411, %v1011, %v1012
        %v1413 = vand.u32 %v1412, 65535
        %v1414 = vshra.s32 %v1412, 16
        %v1415 = vcvt.s32.f32 %v1413
        %v1416 = vcvt.s32.f32 %v1414
        %1417 = vmin.xlane.f32.xlu0 %v1416
        %v1418 = vpop.xlane.xlu0 %1417
        %vm1419 = vcmp.eq.f32.partialorder %v1416, %v1418
        %v1420 = vsel %vm1419, %v1415, inf
        %1421 = vmin.xlane.f32.xlu0 %v1420
        %v1422 = vpop.xlane.xlu0 %1421
        %v1423 = vcvt.f32.s32 %v1422
        %v1424 = vcvt.f32.s32 %v1418
        %v1425 = vshll.u32 %v1424, 16
        %v1426 = vadd.s32 %v1425, %v1423
        %vm1427 = vcmp.lt.s32.totalorder %v1013, %v1014
        %v1428 = vsel %vm1427, %v1013, %v1014
        %v1429 = vand.u32 %v1428, 65535
        %v1430 = vshra.s32 %v1428, 16
        %v1431 = vcvt.s32.f32 %v1429
        %v1432 = vcvt.s32.f32 %v1430
        %1433 = vmin.xlane.f32.xlu0 %v1432
        %v1434 = vpop.xlane.xlu0 %1433
        %vm1435 = vcmp.eq.f32.partialorder %v1432, %v1434
        %v1436 = vsel %vm1435, %v1431, inf
        %1437 = vmin.xlane.f32.xlu0 %v1436
        %v1438 = vpop.xlane.xlu0 %1437
        %v1439 = vcvt.f32.s32 %v1438
        %v1440 = vcvt.f32.s32 %v1434
        %v1441 = vshll.u32 %v1440, 16
        %v1442 = vadd.s32 %v1441, %v1439
        %vm1443 = vcmp.lt.s32.totalorder %v1015, %v1016
        %v1444 = vsel %vm1443, %v1015, %v1016
        %v1445 = vand.u32 %v1444, 65535
        %v1446 = vshra.s32 %v1444, 16
        %v1447 = vcvt.s32.f32 %v1445
        %v1448 = vcvt.s32.f32 %v1446
        %1449 = vmin.xlane.f32.xlu0 %v1448
        %v1450 = vpop.xlane.xlu0 %1449
        %vm1451 = vcmp.eq.f32.partialorder %v1448, %v1450
        %v1452 = vsel %vm1451, %v1447, inf
        %1453 = vmin.xlane.f32.xlu0 %v1452
        %v1454 = vpop.xlane.xlu0 %1453
        %v1455 = vcvt.f32.s32 %v1454
        %v1456 = vcvt.f32.s32 %v1450
        %v1457 = vshll.u32 %v1456, 16
        %v1458 = vadd.s32 %v1457, %v1455
        %vm1459 = vcmp.lt.s32.totalorder %v1017, %v1018
        %v1460 = vsel %vm1459, %v1017, %v1018
        %v1461 = vand.u32 %v1460, 65535
        %v1462 = vshra.s32 %v1460, 16
        %v1463 = vcvt.s32.f32 %v1461
        %v1464 = vcvt.s32.f32 %v1462
        %1465 = vmin.xlane.f32.xlu0 %v1464
        %v1466 = vpop.xlane.xlu0 %1465
        %vm1467 = vcmp.eq.f32.partialorder %v1464, %v1466
        %v1468 = vsel %vm1467, %v1463, inf
        %1469 = vmin.xlane.f32.xlu0 %v1468
        %v1470 = vpop.xlane.xlu0 %1469
        %v1471 = vcvt.f32.s32 %v1470
        %v1472 = vcvt.f32.s32 %v1466
        %v1473 = vshll.u32 %v1472, 16
        %v1474 = vadd.s32 %v1473, %v1471
        %vm1475 = vcmp.lt.s32.totalorder %v1019, %v1020
        %v1476 = vsel %vm1475, %v1019, %v1020
        %v1477 = vand.u32 %v1476, 65535
        %v1478 = vshra.s32 %v1476, 16
        %v1479 = vcvt.s32.f32 %v1477
        %v1480 = vcvt.s32.f32 %v1478
        %1481 = vmin.xlane.f32.xlu0 %v1480
        %v1482 = vpop.xlane.xlu0 %1481
        %vm1483 = vcmp.eq.f32.partialorder %v1480, %v1482
        %v1484 = vsel %vm1483, %v1479, inf
        %1485 = vmin.xlane.f32.xlu0 %v1484
        %v1486 = vpop.xlane.xlu0 %1485
        %v1487 = vcvt.f32.s32 %v1486
        %v1488 = vcvt.f32.s32 %v1482
        %v1489 = vshll.u32 %v1488, 16
        %v1490 = vadd.s32 %v1489, %v1487
        %vm1491 = vcmp.lt.s32.totalorder %v1021, %v1022
        %v1492 = vsel %vm1491, %v1021, %v1022
        %v1493 = vand.u32 %v1492, 65535
        %v1494 = vshra.s32 %v1492, 16
        %v1495 = vcvt.s32.f32 %v1493
        %v1496 = vcvt.s32.f32 %v1494
        %1497 = vmin.xlane.f32.xlu0 %v1496
        %v1498 = vpop.xlane.xlu0 %1497
        %vm1499 = vcmp.eq.f32.partialorder %v1496, %v1498
        %v1500 = vsel %vm1499, %v1495, inf
        %1501 = vmin.xlane.f32.xlu0 %v1500
        %v1502 = vpop.xlane.xlu0 %1501
        %v1503 = vcvt.f32.s32 %v1502
        %v1504 = vcvt.f32.s32 %v1498
        %v1505 = vshll.u32 %v1504, 16
        %v1506 = vadd.s32 %v1505, %v1503
        %vm1507 = vcmp.lt.s32.totalorder %v1023, %v1024
        %v1508 = vsel %vm1507, %v1023, %v1024
        %v1509 = vand.u32 %v1508, 65535
        %v1510 = vshra.s32 %v1508, 16
        %v1511 = vcvt.s32.f32 %v1509
        %v1512 = vcvt.s32.f32 %v1510
        %1513 = vmin.xlane.f32.xlu0 %v1512
        %v1514 = vpop.xlane.xlu0 %1513
        %vm1515 = vcmp.eq.f32.partialorder %v1512, %v1514
        %v1516 = vsel %vm1515, %v1511, inf
        %1517 = vmin.xlane.f32.xlu0 %v1516
        %v1518 = vpop.xlane.xlu0 %1517
        %v1519 = vcvt.f32.s32 %v1518
        %v1520 = vcvt.f32.s32 %v1514
        %v1521 = vshll.u32 %v1520, 16
        %v1522 = vadd.s32 %v1521, %v1519
        %vm1523 = vcmp.lt.s32.totalorder %v1025, %v1026
        %v1524 = vsel %vm1523, %v1025, %v1026
        %v1525 = vand.u32 %v1524, 65535
        %v1526 = vshra.s32 %v1524, 16
        %v1527 = vcvt.s32.f32 %v1525
        %v1528 = vcvt.s32.f32 %v1526
        %1529 = vmin.xlane.f32.xlu0 %v1528
        %v1530 = vpop.xlane.xlu0 %1529
        %vm1531 = vcmp.eq.f32.partialorder %v1528, %v1530
        %v1532 = vsel %vm1531, %v1527, inf
        %1533 = vmin.xlane.f32.xlu0 %v1532
        %v1534 = vpop.xlane.xlu0 %1533
        %v1535 = vcvt.f32.s32 %v1534
        %v1536 = vcvt.f32.s32 %v1530
        %v1537 = vshll.u32 %v1536, 16
        %v1538 = vadd.s32 %v1537, %v1535
        %vm1539 = vcmp.eq.s32.totalorder %v801, %v1042
        %vm1540 = vcmp.eq.s32.totalorder %v802, %v1042
        %vm1541 = vcmp.eq.s32.totalorder %v801, %v1058
        %vm1542 = vcmp.eq.s32.totalorder %v802, %v1058
        %vm1543 = vcmp.eq.s32.totalorder %v801, %v1074
        %vm1544 = vcmp.eq.s32.totalorder %v802, %v1074
        %vm1545 = vcmp.eq.s32.totalorder %v801, %v1090
        %vm1546 = vcmp.eq.s32.totalorder %v802, %v1090
        %vm1547 = vcmp.eq.s32.totalorder %v801, %v1106
        %vm1548 = vcmp.eq.s32.totalorder %v802, %v1106
        %vm1549 = vcmp.eq.s32.totalorder %v801, %v1122
        %vm1550 = vcmp.eq.s32.totalorder %v802, %v1122
        %vm1551 = vcmp.eq.s32.totalorder %v801, %v1138
        %vm1552 = vcmp.eq.s32.totalorder %v802, %v1138
        %vm1553 = vcmp.eq.s32.totalorder %v801, %v1154
        %vm1554 = vcmp.eq.s32.totalorder %v802, %v1154
        %vm1555 = vcmp.eq.s32.totalorder %v801, %v1170
        %vm1556 = vcmp.eq.s32.totalorder %v802, %v1170
        %vm1557 = vcmp.eq.s32.totalorder %v801, %v1186
        %vm1558 = vcmp.eq.s32.totalorder %v802, %v1186
        %vm1559 = vcmp.eq.s32.totalorder %v801, %v1202
        %vm1560 = vcmp.eq.s32.totalorder %v802, %v1202
        %vm1561 = vcmp.eq.s32.totalorder %v801, %v1218
        %vm1562 = vcmp.eq.s32.totalorder %v802, %v1218
        %vm1563 = vcmp.eq.s32.totalorder %v801, %v1234
        %vm1564 = vcmp.eq.s32.totalorder %v802, %v1234
        %vm1565 = vcmp.eq.s32.totalorder %v801, %v1250
        %vm1566 = vcmp.eq.s32.totalorder %v802, %v1250
        %vm1567 = vcmp.eq.s32.totalorder %v801, %v1266
        %vm1568 = vcmp.eq.s32.totalorder %v802, %v1266
        %vm1569 = vcmp.eq.s32.totalorder %v801, %v1282
        %vm1570 = vcmp.eq.s32.totalorder %v802, %v1282
        %vm1571 = vcmp.eq.s32.totalorder %v801, %v1298
        %vm1572 = vcmp.eq.s32.totalorder %v802, %v1298
        %vm1573 = vcmp.eq.s32.totalorder %v801, %v1314
        %vm1574 = vcmp.eq.s32.totalorder %v802, %v1314
        %vm1575 = vcmp.eq.s32.totalorder %v801, %v1330
        %vm1576 = vcmp.eq.s32.totalorder %v802, %v1330
        %vm1577 = vcmp.eq.s32.totalorder %v801, %v1346
        %vm1578 = vcmp.eq.s32.totalorder %v802, %v1346
        %vm1579 = vcmp.eq.s32.totalorder %v801, %v1362
        %vm1580 = vcmp.eq.s32.totalorder %v802, %v1362
        %vm1581 = vcmp.eq.s32.totalorder %v801, %v1378
        %vm1582 = vcmp.eq.s32.totalorder %v802, %v1378
        %vm1583 = vcmp.eq.s32.totalorder %v801, %v1394
        %vm1584 = vcmp.eq.s32.totalorder %v802, %v1394
        %vm1585 = vcmp.eq.s32.totalorder %v801, %v1410
        %vm1586 = vcmp.eq.s32.totalorder %v802, %v1410
        %vm1587 = vcmp.eq.s32.totalorder %v801, %v1426
        %vm1588 = vcmp.eq.s32.totalorder %v802, %v1426
        %vm1589 = vcmp.eq.s32.totalorder %v801, %v1442
        %vm1590 = vcmp.eq.s32.totalorder %v802, %v1442
        %vm1591 = vcmp.eq.s32.totalorder %v801, %v1458
        %vm1592 = vcmp.eq.s32.totalorder %v802, %v1458
        %vm1593 = vcmp.eq.s32.totalorder %v801, %v1474
        %vm1594 = vcmp.eq.s32.totalorder %v802, %v1474
        %vm1595 = vcmp.eq.s32.totalorder %v801, %v1490
        %vm1596 = vcmp.eq.s32.totalorder %v802, %v1490
        %vm1597 = vcmp.eq.s32.totalorder %v801, %v1506
        %vm1598 = vcmp.eq.s32.totalorder %v802, %v1506
        %vm1599 = vcmp.eq.s32.totalorder %v801, %v1522
        %vm1600 = vcmp.eq.s32.totalorder %v802, %v1522
        %vm1601 = vcmp.eq.s32.totalorder %v801, %v1538
        %vm1602 = vcmp.eq.s32.totalorder %v802, %v1538
        %v1603 = vsel %vm1539, -3.4028235e+38, %v642
        %v1604 = vsel %vm1540, -3.4028235e+38, %v644
        %v1605 = vsel %vm1541, -3.4028235e+38, %v646
        %v1606 = vsel %vm1542, -3.4028235e+38, %v648
        %v1607 = vsel %vm1543, -3.4028235e+38, %v652
        %v1608 = vsel %vm1544, -3.4028235e+38, %v654
        %v1609 = vsel %vm1545, -3.4028235e+38, %v656
        %v1610 = vsel %vm1546, -3.4028235e+38, %v658
        %v1611 = vsel %vm1547, -3.4028235e+38, %v662
        %v1612 = vsel %vm1548, -3.4028235e+38, %v664
        %v1613 = vsel %vm1549, -3.4028235e+38, %v666
        %v1614 = vsel %vm1550, -3.4028235e+38, %v668
        %v1615 = vsel %vm1551, -3.4028235e+38, %v672
        %v1616 = vsel %vm1552, -3.4028235e+38, %v674
        %v1617 = vsel %vm1553, -3.4028235e+38, %v676
        %v1618 = vsel %vm1554, -3.4028235e+38, %v678
        %v1619 = vsel %vm1555, -3.4028235e+38, %v682
        %v1620 = vsel %vm1556, -3.4028235e+38, %v684
        %v1621 = vsel %vm1557, -3.4028235e+38, %v686
        %v1622 = vsel %vm1558, -3.4028235e+38, %v688
        %v1623 = vsel %vm1559, -3.4028235e+38, %v692
        %v1624 = vsel %vm1560, -3.4028235e+38, %v694
        %v1625 = vsel %vm1561, -3.4028235e+38, %v696
        %v1626 = vsel %vm1562, -3.4028235e+38, %v698
        %v1627 = vsel %vm1563, -3.4028235e+38, %v702
        %v1628 = vsel %vm1564, -3.4028235e+38, %v704
        %v1629 = vsel %vm1565, -3.4028235e+38, %v706
        %v1630 = vsel %vm1566, -3.4028235e+38, %v708
        %v1631 = vsel %vm1567, -3.4028235e+38, %v712
        %v1632 = vsel %vm1568, -3.4028235e+38, %v714
        %v1633 = vsel %vm1569, -3.4028235e+38, %v716
        %v1634 = vsel %vm1570, -3.4028235e+38, %v718
        %v1635 = vsel %vm1571, -3.4028235e+38, %v722
        %v1636 = vsel %vm1572, -3.4028235e+38, %v724
        %v1637 = vsel %vm1573, -3.4028235e+38, %v726
        %v1638 = vsel %vm1574, -3.4028235e+38, %v728
        %v1639 = vsel %vm1575, -3.4028235e+38, %v732
        %v1640 = vsel %vm1576, -3.4028235e+38, %v734
        %v1641 = vsel %vm1577, -3.4028235e+38, %v736
        %v1642 = vsel %vm1578, -3.4028235e+38, %v738
        %v1643 = vsel %vm1579, -3.4028235e+38, %v742
        %v1644 = vsel %vm1580, -3.4028235e+38, %v744
        %v1645 = vsel %vm1581, -3.4028235e+38, %v746
        %v1646 = vsel %vm1582, -3.4028235e+38, %v748
        %v1647 = vsel %vm1583, -3.4028235e+38, %v752
        %v1648 = vsel %vm1584, -3.4028235e+38, %v754
        %v1649 = vsel %vm1585, -3.4028235e+38, %v756
        %v1650 = vsel %vm1586, -3.4028235e+38, %v758
        %v1651 = vsel %vm1587, -3.4028235e+38, %v762
        %v1652 = vsel %vm1588, -3.4028235e+38, %v764
        %v1653 = vsel %vm1589, -3.4028235e+38, %v766
        %v1654 = vsel %vm1590, -3.4028235e+38, %v768
        %v1655 = vsel %vm1591, -3.4028235e+38, %v772
        %v1656 = vsel %vm1592, -3.4028235e+38, %v774
        %v1657 = vsel %vm1593, -3.4028235e+38, %v776
        %v1658 = vsel %vm1594, -3.4028235e+38, %v778
        %v1659 = vsel %vm1595, -3.4028235e+38, %v782
        %v1660 = vsel %vm1596, -3.4028235e+38, %v784
        %v1661 = vsel %vm1597, -3.4028235e+38, %v786
        %v1662 = vsel %vm1598, -3.4028235e+38, %v788
        %v1663 = vsel %vm1599, -3.4028235e+38, %v792
        %v1664 = vsel %vm1600, -3.4028235e+38, %v794
        %v1665 = vsel %vm1601, -3.4028235e+38, %v796
        %v1666 = vsel %vm1602, -3.4028235e+38, %v798
        %v1667 = vmax.f32 %v1603, %v1604
        %1668 = vmax.xlane.f32.xlu0 %v1667
        %v1669 = vpop.xlane.xlu0 %1668
        %v1670 = vmax.f32 %v1605, %v1606
        %1671 = vmax.xlane.f32.xlu0 %v1670
        %v1672 = vpop.xlane.xlu0 %1671
        %v1673 = vmax.f32 %v1607, %v1608
        %1674 = vmax.xlane.f32.xlu0 %v1673
        %v1675 = vpop.xlane.xlu0 %1674
        %v1676 = vmax.f32 %v1609, %v1610
        %1677 = vmax.xlane.f32.xlu0 %v1676
        %v1678 = vpop.xlane.xlu0 %1677
        %v1679 = vmax.f32 %v1611, %v1612
        %1680 = vmax.xlane.f32.xlu0 %v1679
        %v1681 = vpop.xlane.xlu0 %1680
        %v1682 = vmax.f32 %v1613, %v1614
        %1683 = vmax.xlane.f32.xlu0 %v1682
        %v1684 = vpop.xlane.xlu0 %1683
        %v1685 = vmax.f32 %v1615, %v1616
        %1686 = vmax.xlane.f32.xlu0 %v1685
        %v1687 = vpop.xlane.xlu0 %1686
        %v1688 = vmax.f32 %v1617, %v1618
        %1689 = vmax.xlane.f32.xlu0 %v1688
        %v1690 = vpop.xlane.xlu0 %1689
        %v1691 = vmax.f32 %v1619, %v1620
        %1692 = vmax.xlane.f32.xlu0 %v1691
        %v1693 = vpop.xlane.xlu0 %1692
        %v1694 = vmax.f32 %v1621, %v1622
        %1695 = vmax.xlane.f32.xlu0 %v1694
        %v1696 = vpop.xlane.xlu0 %1695
        %v1697 = vmax.f32 %v1623, %v1624
        %1698 = vmax.xlane.f32.xlu0 %v1697
        %v1699 = vpop.xlane.xlu0 %1698
        %v1700 = vmax.f32 %v1625, %v1626
        %1701 = vmax.xlane.f32.xlu0 %v1700
        %v1702 = vpop.xlane.xlu0 %1701
        %v1703 = vmax.f32 %v1627, %v1628
        %1704 = vmax.xlane.f32.xlu0 %v1703
        %v1705 = vpop.xlane.xlu0 %1704
        %v1706 = vmax.f32 %v1629, %v1630
        %1707 = vmax.xlane.f32.xlu0 %v1706
        %v1708 = vpop.xlane.xlu0 %1707
        %v1709 = vmax.f32 %v1631, %v1632
        %1710 = vmax.xlane.f32.xlu0 %v1709
        %v1711 = vpop.xlane.xlu0 %1710
        %v1712 = vmax.f32 %v1633, %v1634
        %1713 = vmax.xlane.f32.xlu0 %v1712
        %v1714 = vpop.xlane.xlu0 %1713
        %v1715 = vmax.f32 %v1635, %v1636
        %1716 = vmax.xlane.f32.xlu0 %v1715
        %v1717 = vpop.xlane.xlu0 %1716
        %v1718 = vmax.f32 %v1637, %v1638
        %1719 = vmax.xlane.f32.xlu0 %v1718
        %v1720 = vpop.xlane.xlu0 %1719
        %v1721 = vmax.f32 %v1639, %v1640
        %1722 = vmax.xlane.f32.xlu0 %v1721
        %v1723 = vpop.xlane.xlu0 %1722
        %v1724 = vmax.f32 %v1641, %v1642
        %1725 = vmax.xlane.f32.xlu0 %v1724
        %v1726 = vpop.xlane.xlu0 %1725
        %v1727 = vmax.f32 %v1643, %v1644
        %1728 = vmax.xlane.f32.xlu0 %v1727
        %v1729 = vpop.xlane.xlu0 %1728
        %v1730 = vmax.f32 %v1645, %v1646
        %1731 = vmax.xlane.f32.xlu0 %v1730
        %v1732 = vpop.xlane.xlu0 %1731
        %v1733 = vmax.f32 %v1647, %v1648
        %1734 = vmax.xlane.f32.xlu0 %v1733
        %v1735 = vpop.xlane.xlu0 %1734
        %v1736 = vmax.f32 %v1649, %v1650
        %1737 = vmax.xlane.f32.xlu0 %v1736
        %v1738 = vpop.xlane.xlu0 %1737
        %v1739 = vmax.f32 %v1651, %v1652
        %1740 = vmax.xlane.f32.xlu0 %v1739
        %v1741 = vpop.xlane.xlu0 %1740
        %v1742 = vmax.f32 %v1653, %v1654
        %1743 = vmax.xlane.f32.xlu0 %v1742
        %v1744 = vpop.xlane.xlu0 %1743
        %v1745 = vmax.f32 %v1655, %v1656
        %1746 = vmax.xlane.f32.xlu0 %v1745
        %v1747 = vpop.xlane.xlu0 %1746
        %v1748 = vmax.f32 %v1657, %v1658
        %1749 = vmax.xlane.f32.xlu0 %v1748
        %v1750 = vpop.xlane.xlu0 %1749
        %v1751 = vmax.f32 %v1659, %v1660
        %1752 = vmax.xlane.f32.xlu0 %v1751
        %v1753 = vpop.xlane.xlu0 %1752
        %v1754 = vmax.f32 %v1661, %v1662
        %1755 = vmax.xlane.f32.xlu0 %v1754
        %v1756 = vpop.xlane.xlu0 %1755
        %v1757 = vmax.f32 %v1663, %v1664
        %1758 = vmax.xlane.f32.xlu0 %v1757
        %v1759 = vpop.xlane.xlu0 %1758
        %v1760 = vmax.f32 %v1665, %v1666
        %1761 = vmax.xlane.f32.xlu0 %v1760
        %v1762 = vpop.xlane.xlu0 %1761
        %vm1763 = vcmp.eq.f32.partialorder %v1603, %v1669
        %vm1764 = vcmp.eq.f32.partialorder %v1604, %v1669
        %vm1765 = vcmp.eq.f32.partialorder %v1605, %v1672
        %vm1766 = vcmp.eq.f32.partialorder %v1606, %v1672
        %vm1767 = vcmp.eq.f32.partialorder %v1607, %v1675
        %vm1768 = vcmp.eq.f32.partialorder %v1608, %v1675
        %vm1769 = vcmp.eq.f32.partialorder %v1609, %v1678
        %vm1770 = vcmp.eq.f32.partialorder %v1610, %v1678
        %vm1771 = vcmp.eq.f32.partialorder %v1611, %v1681
        %vm1772 = vcmp.eq.f32.partialorder %v1612, %v1681
        %vm1773 = vcmp.eq.f32.partialorder %v1613, %v1684
        %vm1774 = vcmp.eq.f32.partialorder %v1614, %v1684
        %vm1775 = vcmp.eq.f32.partialorder %v1615, %v1687
        %vm1776 = vcmp.eq.f32.partialorder %v1616, %v1687
        %vm1777 = vcmp.eq.f32.partialorder %v1617, %v1690
        %vm1778 = vcmp.eq.f32.partialorder %v1618, %v1690
        %vm1779 = vcmp.eq.f32.partialorder %v1619, %v1693
        %vm1780 = vcmp.eq.f32.partialorder %v1620, %v1693
        %vm1781 = vcmp.eq.f32.partialorder %v1621, %v1696
        %vm1782 = vcmp.eq.f32.partialorder %v1622, %v1696
        %vm1783 = vcmp.eq.f32.partialorder %v1623, %v1699
        %vm1784 = vcmp.eq.f32.partialorder %v1624, %v1699
        %vm1785 = vcmp.eq.f32.partialorder %v1625, %v1702
        %vm1786 = vcmp.eq.f32.partialorder %v1626, %v1702
        %vm1787 = vcmp.eq.f32.partialorder %v1627, %v1705
        %vm1788 = vcmp.eq.f32.partialorder %v1628, %v1705
        %vm1789 = vcmp.eq.f32.partialorder %v1629, %v1708
        %vm1790 = vcmp.eq.f32.partialorder %v1630, %v1708
        %vm1791 = vcmp.eq.f32.partialorder %v1631, %v1711
        %vm1792 = vcmp.eq.f32.partialorder %v1632, %v1711
        %vm1793 = vcmp.eq.f32.partialorder %v1633, %v1714
        %vm1794 = vcmp.eq.f32.partialorder %v1634, %v1714
        %vm1795 = vcmp.eq.f32.partialorder %v1635, %v1717
        %vm1796 = vcmp.eq.f32.partialorder %v1636, %v1717
        %vm1797 = vcmp.eq.f32.partialorder %v1637, %v1720
        %vm1798 = vcmp.eq.f32.partialorder %v1638, %v1720
        %vm1799 = vcmp.eq.f32.partialorder %v1639, %v1723
        %vm1800 = vcmp.eq.f32.partialorder %v1640, %v1723
        %vm1801 = vcmp.eq.f32.partialorder %v1641, %v1726
        %vm1802 = vcmp.eq.f32.partialorder %v1642, %v1726
        %vm1803 = vcmp.eq.f32.partialorder %v1643, %v1729
        %vm1804 = vcmp.eq.f32.partialorder %v1644, %v1729
        %vm1805 = vcmp.eq.f32.partialorder %v1645, %v1732
        %vm1806 = vcmp.eq.f32.partialorder %v1646, %v1732
        %vm1807 = vcmp.eq.f32.partialorder %v1647, %v1735
        %vm1808 = vcmp.eq.f32.partialorder %v1648, %v1735
        %vm1809 = vcmp.eq.f32.partialorder %v1649, %v1738
        %vm1810 = vcmp.eq.f32.partialorder %v1650, %v1738
        %vm1811 = vcmp.eq.f32.partialorder %v1651, %v1741
        %vm1812 = vcmp.eq.f32.partialorder %v1652, %v1741
        %vm1813 = vcmp.eq.f32.partialorder %v1653, %v1744
        %vm1814 = vcmp.eq.f32.partialorder %v1654, %v1744
        %vm1815 = vcmp.eq.f32.partialorder %v1655, %v1747
        %vm1816 = vcmp.eq.f32.partialorder %v1656, %v1747
        %vm1817 = vcmp.eq.f32.partialorder %v1657, %v1750
        %vm1818 = vcmp.eq.f32.partialorder %v1658, %v1750
        %vm1819 = vcmp.eq.f32.partialorder %v1659, %v1753
        %vm1820 = vcmp.eq.f32.partialorder %v1660, %v1753
        %vm1821 = vcmp.eq.f32.partialorder %v1661, %v1756
        %vm1822 = vcmp.eq.f32.partialorder %v1662, %v1756
        %vm1823 = vcmp.eq.f32.partialorder %v1663, %v1759
        %vm1824 = vcmp.eq.f32.partialorder %v1664, %v1759
        %vm1825 = vcmp.eq.f32.partialorder %v1665, %v1762
        %vm1826 = vcmp.eq.f32.partialorder %v1666, %v1762
        %v1827 = vsel %vm1763, %v801, 256
        %v1828 = vsel %vm1764, %v802, 256
        %v1829 = vsel %vm1765, %v801, 256
        %v1830 = vsel %vm1766, %v802, 256
        %v1831 = vsel %vm1767, %v801, 256
        %v1832 = vsel %vm1768, %v802, 256
        %v1833 = vsel %vm1769, %v801, 256
        %v1834 = vsel %vm1770, %v802, 256
        %v1835 = vsel %vm1771, %v801, 256
        %v1836 = vsel %vm1772, %v802, 256
        %v1837 = vsel %vm1773, %v801, 256
        %v1838 = vsel %vm1774, %v802, 256
        %v1839 = vsel %vm1775, %v801, 256
        %v1840 = vsel %vm1776, %v802, 256
        %v1841 = vsel %vm1777, %v801, 256
        %v1842 = vsel %vm1778, %v802, 256
        %v1843 = vsel %vm1779, %v801, 256
        %v1844 = vsel %vm1780, %v802, 256
        %v1845 = vsel %vm1781, %v801, 256
        %v1846 = vsel %vm1782, %v802, 256
        %v1847 = vsel %vm1783, %v801, 256
        %v1848 = vsel %vm1784, %v802, 256
        %v1849 = vsel %vm1785, %v801, 256
        %v1850 = vsel %vm1786, %v802, 256
        %v1851 = vsel %vm1787, %v801, 256
        %v1852 = vsel %vm1788, %v802, 256
        %v1853 = vsel %vm1789, %v801, 256
        %v1854 = vsel %vm1790, %v802, 256
        %v1855 = vsel %vm1791, %v801, 256
        %v1856 = vsel %vm1792, %v802, 256
        %v1857 = vsel %vm1793, %v801, 256
        %v1858 = vsel %vm1794, %v802, 256
        %v1859 = vsel %vm1795, %v801, 256
        %v1860 = vsel %vm1796, %v802, 256
        %v1861 = vsel %vm1797, %v801, 256
        %v1862 = vsel %vm1798, %v802, 256
        %v1863 = vsel %vm1799, %v801, 256
        %v1864 = vsel %vm1800, %v802, 256
        %v1865 = vsel %vm1801, %v801, 256
        %v1866 = vsel %vm1802, %v802, 256
        %v1867 = vsel %vm1803, %v801, 256
        %v1868 = vsel %vm1804, %v802, 256
        %v1869 = vsel %vm1805, %v801, 256
        %v1870 = vsel %vm1806, %v802, 256
        %v1871 = vsel %vm1807, %v801, 256
        %v1872 = vsel %vm1808, %v802, 256
        %v1873 = vsel %vm1809, %v801, 256
        %v1874 = vsel %vm1810, %v802, 256
        %v1875 = vsel %vm1811, %v801, 256
        %v1876 = vsel %vm1812, %v802, 256
        %v1877 = vsel %vm1813, %v801, 256
        %v1878 = vsel %vm1814, %v802, 256
        %v1879 = vsel %vm1815, %v801, 256
        %v1880 = vsel %vm1816, %v802, 256
        %v1881 = vsel %vm1817, %v801, 256
        %v1882 = vsel %vm1818, %v802, 256
        %v1883 = vsel %vm1819, %v801, 256
        %v1884 = vsel %vm1820, %v802, 256
        %v1885 = vsel %vm1821, %v801, 256
        %v1886 = vsel %vm1822, %v802, 256
        %v1887 = vsel %vm1823, %v801, 256
        %v1888 = vsel %vm1824, %v802, 256
        %v1889 = vsel %vm1825, %v801, 256
        %v1890 = vsel %vm1826, %v802, 256
        %vm1891 = vcmp.lt.s32.totalorder %v1827, %v1828
        %v1892 = vsel %vm1891, %v1827, %v1828
        %v1893 = vand.u32 %v1892, 65535
        %v1894 = vshra.s32 %v1892, 16
        %v1895 = vcvt.s32.f32 %v1893
        %v1896 = vcvt.s32.f32 %v1894
        %1897 = vmin.xlane.f32.xlu0 %v1896
        %v1898 = vpop.xlane.xlu0 %1897
        %vm1899 = vcmp.eq.f32.partialorder %v1896, %v1898
        %v1900 = vsel %vm1899, %v1895, inf
        %1901 = vmin.xlane.f32.xlu0 %v1900
        %v1902 = vpop.xlane.xlu0 %1901
        %v1903 = vcvt.f32.s32 %v1902
        %v1904 = vcvt.f32.s32 %v1898
        %v1905 = vshll.u32 %v1904, 16
        %v1906 = vadd.s32 %v1905, %v1903
        %vm1907 = vcmp.lt.s32.totalorder %v1829, %v1830
        %v1908 = vsel %vm1907, %v1829, %v1830
        %v1909 = vand.u32 %v1908, 65535
        %v1910 = vshra.s32 %v1908, 16
        %v1911 = vcvt.s32.f32 %v1909
        %v1912 = vcvt.s32.f32 %v1910
        %1913 = vmin.xlane.f32.xlu0 %v1912
        %v1914 = vpop.xlane.xlu0 %1913
        %vm1915 = vcmp.eq.f32.partialorder %v1912, %v1914
        %v1916 = vsel %vm1915, %v1911, inf
        %1917 = vmin.xlane.f32.xlu0 %v1916
        %v1918 = vpop.xlane.xlu0 %1917
        %v1919 = vcvt.f32.s32 %v1918
        %v1920 = vcvt.f32.s32 %v1914
        %v1921 = vshll.u32 %v1920, 16
        %v1922 = vadd.s32 %v1921, %v1919
        %vm1923 = vcmp.lt.s32.totalorder %v1831, %v1832
        %v1924 = vsel %vm1923, %v1831, %v1832
        %v1925 = vand.u32 %v1924, 65535
        %v1926 = vshra.s32 %v1924, 16
        %v1927 = vcvt.s32.f32 %v1925
        %v1928 = vcvt.s32.f32 %v1926
        %1929 = vmin.xlane.f32.xlu0 %v1928
        %v1930 = vpop.xlane.xlu0 %1929
        %vm1931 = vcmp.eq.f32.partialorder %v1928, %v1930
        %v1932 = vsel %vm1931, %v1927, inf
        %1933 = vmin.xlane.f32.xlu0 %v1932
        %v1934 = vpop.xlane.xlu0 %1933
        %v1935 = vcvt.f32.s32 %v1934
        %v1936 = vcvt.f32.s32 %v1930
        %v1937 = vshll.u32 %v1936, 16
        %v1938 = vadd.s32 %v1937, %v1935
        %vm1939 = vcmp.lt.s32.totalorder %v1833, %v1834
        %v1940 = vsel %vm1939, %v1833, %v1834
        %v1941 = vand.u32 %v1940, 65535
        %v1942 = vshra.s32 %v1940, 16
        %v1943 = vcvt.s32.f32 %v1941
        %v1944 = vcvt.s32.f32 %v1942
        %1945 = vmin.xlane.f32.xlu0 %v1944
        %v1946 = vpop.xlane.xlu0 %1945
        %vm1947 = vcmp.eq.f32.partialorder %v1944, %v1946
        %v1948 = vsel %vm1947, %v1943, inf
        %1949 = vmin.xlane.f32.xlu0 %v1948
        %v1950 = vpop.xlane.xlu0 %1949
        %v1951 = vcvt.f32.s32 %v1950
        %v1952 = vcvt.f32.s32 %v1946
        %v1953 = vshll.u32 %v1952, 16
        %v1954 = vadd.s32 %v1953, %v1951
        %vm1955 = vcmp.lt.s32.totalorder %v1835, %v1836
        %v1956 = vsel %vm1955, %v1835, %v1836
        %v1957 = vand.u32 %v1956, 65535
        %v1958 = vshra.s32 %v1956, 16
        %v1959 = vcvt.s32.f32 %v1957
        %v1960 = vcvt.s32.f32 %v1958
        %1961 = vmin.xlane.f32.xlu0 %v1960
        %v1962 = vpop.xlane.xlu0 %1961
        %vm1963 = vcmp.eq.f32.partialorder %v1960, %v1962
        %v1964 = vsel %vm1963, %v1959, inf
        %1965 = vmin.xlane.f32.xlu0 %v1964
        %v1966 = vpop.xlane.xlu0 %1965
        %v1967 = vcvt.f32.s32 %v1966
        %v1968 = vcvt.f32.s32 %v1962
        %v1969 = vshll.u32 %v1968, 16
        %v1970 = vadd.s32 %v1969, %v1967
        %vm1971 = vcmp.lt.s32.totalorder %v1837, %v1838
        %v1972 = vsel %vm1971, %v1837, %v1838
        %v1973 = vand.u32 %v1972, 65535
        %v1974 = vshra.s32 %v1972, 16
        %v1975 = vcvt.s32.f32 %v1973
        %v1976 = vcvt.s32.f32 %v1974
        %1977 = vmin.xlane.f32.xlu0 %v1976
        %v1978 = vpop.xlane.xlu0 %1977
        %vm1979 = vcmp.eq.f32.partialorder %v1976, %v1978
        %v1980 = vsel %vm1979, %v1975, inf
        %1981 = vmin.xlane.f32.xlu0 %v1980
        %v1982 = vpop.xlane.xlu0 %1981
        %v1983 = vcvt.f32.s32 %v1982
        %v1984 = vcvt.f32.s32 %v1978
        %v1985 = vshll.u32 %v1984, 16
        %v1986 = vadd.s32 %v1985, %v1983
        %vm1987 = vcmp.lt.s32.totalorder %v1839, %v1840
        %v1988 = vsel %vm1987, %v1839, %v1840
        %v1989 = vand.u32 %v1988, 65535
        %v1990 = vshra.s32 %v1988, 16
        %v1991 = vcvt.s32.f32 %v1989
        %v1992 = vcvt.s32.f32 %v1990
        %1993 = vmin.xlane.f32.xlu0 %v1992
        %v1994 = vpop.xlane.xlu0 %1993
        %vm1995 = vcmp.eq.f32.partialorder %v1992, %v1994
        %v1996 = vsel %vm1995, %v1991, inf
        %1997 = vmin.xlane.f32.xlu0 %v1996
        %v1998 = vpop.xlane.xlu0 %1997
        %v1999 = vcvt.f32.s32 %v1998
        %v2000 = vcvt.f32.s32 %v1994
        %v2001 = vshll.u32 %v2000, 16
        %v2002 = vadd.s32 %v2001, %v1999
        %vm2003 = vcmp.lt.s32.totalorder %v1841, %v1842
        %v2004 = vsel %vm2003, %v1841, %v1842
        %v2005 = vand.u32 %v2004, 65535
        %v2006 = vshra.s32 %v2004, 16
        %v2007 = vcvt.s32.f32 %v2005
        %v2008 = vcvt.s32.f32 %v2006
        %2009 = vmin.xlane.f32.xlu0 %v2008
        %v2010 = vpop.xlane.xlu0 %2009
        %vm2011 = vcmp.eq.f32.partialorder %v2008, %v2010
        %v2012 = vsel %vm2011, %v2007, inf
        %2013 = vmin.xlane.f32.xlu0 %v2012
        %v2014 = vpop.xlane.xlu0 %2013
        %v2015 = vcvt.f32.s32 %v2014
        %v2016 = vcvt.f32.s32 %v2010
        %v2017 = vshll.u32 %v2016, 16
        %v2018 = vadd.s32 %v2017, %v2015
        %vm2019 = vcmp.lt.s32.totalorder %v1843, %v1844
        %v2020 = vsel %vm2019, %v1843, %v1844
        %v2021 = vand.u32 %v2020, 65535
        %v2022 = vshra.s32 %v2020, 16
        %v2023 = vcvt.s32.f32 %v2021
        %v2024 = vcvt.s32.f32 %v2022
        %2025 = vmin.xlane.f32.xlu0 %v2024
        %v2026 = vpop.xlane.xlu0 %2025
        %vm2027 = vcmp.eq.f32.partialorder %v2024, %v2026
        %v2028 = vsel %vm2027, %v2023, inf
        %2029 = vmin.xlane.f32.xlu0 %v2028
        %v2030 = vpop.xlane.xlu0 %2029
        %v2031 = vcvt.f32.s32 %v2030
        %v2032 = vcvt.f32.s32 %v2026
        %v2033 = vshll.u32 %v2032, 16
        %v2034 = vadd.s32 %v2033, %v2031
        %vm2035 = vcmp.lt.s32.totalorder %v1845, %v1846
        %v2036 = vsel %vm2035, %v1845, %v1846
        %v2037 = vand.u32 %v2036, 65535
        %v2038 = vshra.s32 %v2036, 16
        %v2039 = vcvt.s32.f32 %v2037
        %v2040 = vcvt.s32.f32 %v2038
        %2041 = vmin.xlane.f32.xlu0 %v2040
        %v2042 = vpop.xlane.xlu0 %2041
        %vm2043 = vcmp.eq.f32.partialorder %v2040, %v2042
        %v2044 = vsel %vm2043, %v2039, inf
        %2045 = vmin.xlane.f32.xlu0 %v2044
        %v2046 = vpop.xlane.xlu0 %2045
        %v2047 = vcvt.f32.s32 %v2046
        %v2048 = vcvt.f32.s32 %v2042
        %v2049 = vshll.u32 %v2048, 16
        %v2050 = vadd.s32 %v2049, %v2047
        %vm2051 = vcmp.lt.s32.totalorder %v1847, %v1848
        %v2052 = vsel %vm2051, %v1847, %v1848
        %v2053 = vand.u32 %v2052, 65535
        %v2054 = vshra.s32 %v2052, 16
        %v2055 = vcvt.s32.f32 %v2053
        %v2056 = vcvt.s32.f32 %v2054
        %2057 = vmin.xlane.f32.xlu0 %v2056
        %v2058 = vpop.xlane.xlu0 %2057
        %vm2059 = vcmp.eq.f32.partialorder %v2056, %v2058
        %v2060 = vsel %vm2059, %v2055, inf
        %2061 = vmin.xlane.f32.xlu0 %v2060
        %v2062 = vpop.xlane.xlu0 %2061
        %v2063 = vcvt.f32.s32 %v2062
        %v2064 = vcvt.f32.s32 %v2058
        %v2065 = vshll.u32 %v2064, 16
        %v2066 = vadd.s32 %v2065, %v2063
        %vm2067 = vcmp.lt.s32.totalorder %v1849, %v1850
        %v2068 = vsel %vm2067, %v1849, %v1850
        %v2069 = vand.u32 %v2068, 65535
        %v2070 = vshra.s32 %v2068, 16
        %v2071 = vcvt.s32.f32 %v2069
        %v2072 = vcvt.s32.f32 %v2070
        %2073 = vmin.xlane.f32.xlu0 %v2072
        %v2074 = vpop.xlane.xlu0 %2073
        %vm2075 = vcmp.eq.f32.partialorder %v2072, %v2074
        %v2076 = vsel %vm2075, %v2071, inf
        %2077 = vmin.xlane.f32.xlu0 %v2076
        %v2078 = vpop.xlane.xlu0 %2077
        %v2079 = vcvt.f32.s32 %v2078
        %v2080 = vcvt.f32.s32 %v2074
        %v2081 = vshll.u32 %v2080, 16
        %v2082 = vadd.s32 %v2081, %v2079
        %vm2083 = vcmp.lt.s32.totalorder %v1851, %v1852
        %v2084 = vsel %vm2083, %v1851, %v1852
        %v2085 = vand.u32 %v2084, 65535
        %v2086 = vshra.s32 %v2084, 16
        %v2087 = vcvt.s32.f32 %v2085
        %v2088 = vcvt.s32.f32 %v2086
        %2089 = vmin.xlane.f32.xlu0 %v2088
        %v2090 = vpop.xlane.xlu0 %2089
        %vm2091 = vcmp.eq.f32.partialorder %v2088, %v2090
        %v2092 = vsel %vm2091, %v2087, inf
        %2093 = vmin.xlane.f32.xlu0 %v2092
        %v2094 = vpop.xlane.xlu0 %2093
        %v2095 = vcvt.f32.s32 %v2094
        %v2096 = vcvt.f32.s32 %v2090
        %v2097 = vshll.u32 %v2096, 16
        %v2098 = vadd.s32 %v2097, %v2095
        %vm2099 = vcmp.lt.s32.totalorder %v1853, %v1854
        %v2100 = vsel %vm2099, %v1853, %v1854
        %v2101 = vand.u32 %v2100, 65535
        %v2102 = vshra.s32 %v2100, 16
        %v2103 = vcvt.s32.f32 %v2101
        %v2104 = vcvt.s32.f32 %v2102
        %2105 = vmin.xlane.f32.xlu0 %v2104
        %v2106 = vpop.xlane.xlu0 %2105
        %vm2107 = vcmp.eq.f32.partialorder %v2104, %v2106
        %v2108 = vsel %vm2107, %v2103, inf
        %2109 = vmin.xlane.f32.xlu0 %v2108
        %v2110 = vpop.xlane.xlu0 %2109
        %v2111 = vcvt.f32.s32 %v2110
        %v2112 = vcvt.f32.s32 %v2106
        %v2113 = vshll.u32 %v2112, 16
        %v2114 = vadd.s32 %v2113, %v2111
        %vm2115 = vcmp.lt.s32.totalorder %v1855, %v1856
        %v2116 = vsel %vm2115, %v1855, %v1856
        %v2117 = vand.u32 %v2116, 65535
        %v2118 = vshra.s32 %v2116, 16
        %v2119 = vcvt.s32.f32 %v2117
        %v2120 = vcvt.s32.f32 %v2118
        %2121 = vmin.xlane.f32.xlu0 %v2120
        %v2122 = vpop.xlane.xlu0 %2121
        %vm2123 = vcmp.eq.f32.partialorder %v2120, %v2122
        %v2124 = vsel %vm2123, %v2119, inf
        %2125 = vmin.xlane.f32.xlu0 %v2124
        %v2126 = vpop.xlane.xlu0 %2125
        %v2127 = vcvt.f32.s32 %v2126
        %v2128 = vcvt.f32.s32 %v2122
        %v2129 = vshll.u32 %v2128, 16
        %v2130 = vadd.s32 %v2129, %v2127
        %vm2131 = vcmp.lt.s32.totalorder %v1857, %v1858
        %v2132 = vsel %vm2131, %v1857, %v1858
        %v2133 = vand.u32 %v2132, 65535
        %v2134 = vshra.s32 %v2132, 16
        %v2135 = vcvt.s32.f32 %v2133
        %v2136 = vcvt.s32.f32 %v2134
        %2137 = vmin.xlane.f32.xlu0 %v2136
        %v2138 = vpop.xlane.xlu0 %2137
        %vm2139 = vcmp.eq.f32.partialorder %v2136, %v2138
        %v2140 = vsel %vm2139, %v2135, inf
        %2141 = vmin.xlane.f32.xlu0 %v2140
        %v2142 = vpop.xlane.xlu0 %2141
        %v2143 = vcvt.f32.s32 %v2142
        %v2144 = vcvt.f32.s32 %v2138
        %v2145 = vshll.u32 %v2144, 16
        %v2146 = vadd.s32 %v2145, %v2143
        %vm2147 = vcmp.lt.s32.totalorder %v1859, %v1860
        %v2148 = vsel %vm2147, %v1859, %v1860
        %v2149 = vand.u32 %v2148, 65535
        %v2150 = vshra.s32 %v2148, 16
        %v2151 = vcvt.s32.f32 %v2149
        %v2152 = vcvt.s32.f32 %v2150
        %2153 = vmin.xlane.f32.xlu0 %v2152
        %v2154 = vpop.xlane.xlu0 %2153
        %vm2155 = vcmp.eq.f32.partialorder %v2152, %v2154
        %v2156 = vsel %vm2155, %v2151, inf
        %2157 = vmin.xlane.f32.xlu0 %v2156
        %v2158 = vpop.xlane.xlu0 %2157
        %v2159 = vcvt.f32.s32 %v2158
        %v2160 = vcvt.f32.s32 %v2154
        %v2161 = vshll.u32 %v2160, 16
        %v2162 = vadd.s32 %v2161, %v2159
        %vm2163 = vcmp.lt.s32.totalorder %v1861, %v1862
        %v2164 = vsel %vm2163, %v1861, %v1862
        %v2165 = vand.u32 %v2164, 65535
        %v2166 = vshra.s32 %v2164, 16
        %v2167 = vcvt.s32.f32 %v2165
        %v2168 = vcvt.s32.f32 %v2166
        %2169 = vmin.xlane.f32.xlu0 %v2168
        %v2170 = vpop.xlane.xlu0 %2169
        %vm2171 = vcmp.eq.f32.partialorder %v2168, %v2170
        %v2172 = vsel %vm2171, %v2167, inf
        %2173 = vmin.xlane.f32.xlu0 %v2172
        %v2174 = vpop.xlane.xlu0 %2173
        %v2175 = vcvt.f32.s32 %v2174
        %v2176 = vcvt.f32.s32 %v2170
        %v2177 = vshll.u32 %v2176, 16
        %v2178 = vadd.s32 %v2177, %v2175
        %vm2179 = vcmp.lt.s32.totalorder %v1863, %v1864
        %v2180 = vsel %vm2179, %v1863, %v1864
        %v2181 = vand.u32 %v2180, 65535
        %v2182 = vshra.s32 %v2180, 16
        %v2183 = vcvt.s32.f32 %v2181
        %v2184 = vcvt.s32.f32 %v2182
        %2185 = vmin.xlane.f32.xlu0 %v2184
        %v2186 = vpop.xlane.xlu0 %2185
        %vm2187 = vcmp.eq.f32.partialorder %v2184, %v2186
        %v2188 = vsel %vm2187, %v2183, inf
        %2189 = vmin.xlane.f32.xlu0 %v2188
        %v2190 = vpop.xlane.xlu0 %2189
        %v2191 = vcvt.f32.s32 %v2190
        %v2192 = vcvt.f32.s32 %v2186
        %v2193 = vshll.u32 %v2192, 16
        %v2194 = vadd.s32 %v2193, %v2191
        %vm2195 = vcmp.lt.s32.totalorder %v1865, %v1866
        %v2196 = vsel %vm2195, %v1865, %v1866
        %v2197 = vand.u32 %v2196, 65535
        %v2198 = vshra.s32 %v2196, 16
        %v2199 = vcvt.s32.f32 %v2197
        %v2200 = vcvt.s32.f32 %v2198
        %2201 = vmin.xlane.f32.xlu0 %v2200
        %v2202 = vpop.xlane.xlu0 %2201
        %vm2203 = vcmp.eq.f32.partialorder %v2200, %v2202
        %v2204 = vsel %vm2203, %v2199, inf
        %2205 = vmin.xlane.f32.xlu0 %v2204
        %v2206 = vpop.xlane.xlu0 %2205
        %v2207 = vcvt.f32.s32 %v2206
        %v2208 = vcvt.f32.s32 %v2202
        %v2209 = vshll.u32 %v2208, 16
        %v2210 = vadd.s32 %v2209, %v2207
        %vm2211 = vcmp.lt.s32.totalorder %v1867, %v1868
        %v2212 = vsel %vm2211, %v1867, %v1868
        %v2213 = vand.u32 %v2212, 65535
        %v2214 = vshra.s32 %v2212, 16
        %v2215 = vcvt.s32.f32 %v2213
        %v2216 = vcvt.s32.f32 %v2214
        %2217 = vmin.xlane.f32.xlu0 %v2216
        %v2218 = vpop.xlane.xlu0 %2217
        %vm2219 = vcmp.eq.f32.partialorder %v2216, %v2218
        %v2220 = vsel %vm2219, %v2215, inf
        %2221 = vmin.xlane.f32.xlu0 %v2220
        %v2222 = vpop.xlane.xlu0 %2221
        %v2223 = vcvt.f32.s32 %v2222
        %v2224 = vcvt.f32.s32 %v2218
        %v2225 = vshll.u32 %v2224, 16
        %v2226 = vadd.s32 %v2225, %v2223
        %vm2227 = vcmp.lt.s32.totalorder %v1869, %v1870
        %v2228 = vsel %vm2227, %v1869, %v1870
        %v2229 = vand.u32 %v2228, 65535
        %v2230 = vshra.s32 %v2228, 16
        %v2231 = vcvt.s32.f32 %v2229
        %v2232 = vcvt.s32.f32 %v2230
        %2233 = vmin.xlane.f32.xlu0 %v2232
        %v2234 = vpop.xlane.xlu0 %2233
        %vm2235 = vcmp.eq.f32.partialorder %v2232, %v2234
        %v2236 = vsel %vm2235, %v2231, inf
        %2237 = vmin.xlane.f32.xlu0 %v2236
        %v2238 = vpop.xlane.xlu0 %2237
        %v2239 = vcvt.f32.s32 %v2238
        %v2240 = vcvt.f32.s32 %v2234
        %v2241 = vshll.u32 %v2240, 16
        %v2242 = vadd.s32 %v2241, %v2239
        %vm2243 = vcmp.lt.s32.totalorder %v1871, %v1872
        %v2244 = vsel %vm2243, %v1871, %v1872
        %v2245 = vand.u32 %v2244, 65535
        %v2246 = vshra.s32 %v2244, 16
        %v2247 = vcvt.s32.f32 %v2245
        %v2248 = vcvt.s32.f32 %v2246
        %2249 = vmin.xlane.f32.xlu0 %v2248
        %v2250 = vpop.xlane.xlu0 %2249
        %vm2251 = vcmp.eq.f32.partialorder %v2248, %v2250
        %v2252 = vsel %vm2251, %v2247, inf
        %2253 = vmin.xlane.f32.xlu0 %v2252
        %v2254 = vpop.xlane.xlu0 %2253
        %v2255 = vcvt.f32.s32 %v2254
        %v2256 = vcvt.f32.s32 %v2250
        %v2257 = vshll.u32 %v2256, 16
        %v2258 = vadd.s32 %v2257, %v2255
        %vm2259 = vcmp.lt.s32.totalorder %v1873, %v1874
        %v2260 = vsel %vm2259, %v1873, %v1874
        %v2261 = vand.u32 %v2260, 65535
        %v2262 = vshra.s32 %v2260, 16
        %v2263 = vcvt.s32.f32 %v2261
        %v2264 = vcvt.s32.f32 %v2262
        %2265 = vmin.xlane.f32.xlu0 %v2264
        %v2266 = vpop.xlane.xlu0 %2265
        %vm2267 = vcmp.eq.f32.partialorder %v2264, %v2266
        %v2268 = vsel %vm2267, %v2263, inf
        %2269 = vmin.xlane.f32.xlu0 %v2268
        %v2270 = vpop.xlane.xlu0 %2269
        %v2271 = vcvt.f32.s32 %v2270
        %v2272 = vcvt.f32.s32 %v2266
        %v2273 = vshll.u32 %v2272, 16
        %v2274 = vadd.s32 %v2273, %v2271
        %vm2275 = vcmp.lt.s32.totalorder %v1875, %v1876
        %v2276 = vsel %vm2275, %v1875, %v1876
        %v2277 = vand.u32 %v2276, 65535
        %v2278 = vshra.s32 %v2276, 16
        %v2279 = vcvt.s32.f32 %v2277
        %v2280 = vcvt.s32.f32 %v2278
        %2281 = vmin.xlane.f32.xlu0 %v2280
        %v2282 = vpop.xlane.xlu0 %2281
        %vm2283 = vcmp.eq.f32.partialorder %v2280, %v2282
        %v2284 = vsel %vm2283, %v2279, inf
        %2285 = vmin.xlane.f32.xlu0 %v2284
        %v2286 = vpop.xlane.xlu0 %2285
        %v2287 = vcvt.f32.s32 %v2286
        %v2288 = vcvt.f32.s32 %v2282
        %v2289 = vshll.u32 %v2288, 16
        %v2290 = vadd.s32 %v2289, %v2287
        %vm2291 = vcmp.lt.s32.totalorder %v1877, %v1878
        %v2292 = vsel %vm2291, %v1877, %v1878
        %v2293 = vand.u32 %v2292, 65535
        %v2294 = vshra.s32 %v2292, 16
        %v2295 = vcvt.s32.f32 %v2293
        %v2296 = vcvt.s32.f32 %v2294
        %2297 = vmin.xlane.f32.xlu0 %v2296
        %v2298 = vpop.xlane.xlu0 %2297
        %vm2299 = vcmp.eq.f32.partialorder %v2296, %v2298
        %v2300 = vsel %vm2299, %v2295, inf
        %2301 = vmin.xlane.f32.xlu0 %v2300
        %v2302 = vpop.xlane.xlu0 %2301
        %v2303 = vcvt.f32.s32 %v2302
        %v2304 = vcvt.f32.s32 %v2298
        %v2305 = vshll.u32 %v2304, 16
        %v2306 = vadd.s32 %v2305, %v2303
        %vm2307 = vcmp.lt.s32.totalorder %v1879, %v1880
        %v2308 = vsel %vm2307, %v1879, %v1880
        %v2309 = vand.u32 %v2308, 65535
        %v2310 = vshra.s32 %v2308, 16
        %v2311 = vcvt.s32.f32 %v2309
        %v2312 = vcvt.s32.f32 %v2310
        %2313 = vmin.xlane.f32.xlu0 %v2312
        %v2314 = vpop.xlane.xlu0 %2313
        %vm2315 = vcmp.eq.f32.partialorder %v2312, %v2314
        %v2316 = vsel %vm2315, %v2311, inf
        %2317 = vmin.xlane.f32.xlu0 %v2316
        %v2318 = vpop.xlane.xlu0 %2317
        %v2319 = vcvt.f32.s32 %v2318
        %v2320 = vcvt.f32.s32 %v2314
        %v2321 = vshll.u32 %v2320, 16
        %v2322 = vadd.s32 %v2321, %v2319
        %vm2323 = vcmp.lt.s32.totalorder %v1881, %v1882
        %v2324 = vsel %vm2323, %v1881, %v1882
        %v2325 = vand.u32 %v2324, 65535
        %v2326 = vshra.s32 %v2324, 16
        %v2327 = vcvt.s32.f32 %v2325
        %v2328 = vcvt.s32.f32 %v2326
        %2329 = vmin.xlane.f32.xlu0 %v2328
        %v2330 = vpop.xlane.xlu0 %2329
        %vm2331 = vcmp.eq.f32.partialorder %v2328, %v2330
        %v2332 = vsel %vm2331, %v2327, inf
        %2333 = vmin.xlane.f32.xlu0 %v2332
        %v2334 = vpop.xlane.xlu0 %2333
        %v2335 = vcvt.f32.s32 %v2334
        %v2336 = vcvt.f32.s32 %v2330
        %v2337 = vshll.u32 %v2336, 16
        %v2338 = vadd.s32 %v2337, %v2335
        %vm2339 = vcmp.lt.s32.totalorder %v1883, %v1884
        %v2340 = vsel %vm2339, %v1883, %v1884
        %v2341 = vand.u32 %v2340, 65535
        %v2342 = vshra.s32 %v2340, 16
        %v2343 = vcvt.s32.f32 %v2341
        %v2344 = vcvt.s32.f32 %v2342
        %2345 = vmin.xlane.f32.xlu0 %v2344
        %v2346 = vpop.xlane.xlu0 %2345
        %vm2347 = vcmp.eq.f32.partialorder %v2344, %v2346
        %v2348 = vsel %vm2347, %v2343, inf
        %2349 = vmin.xlane.f32.xlu0 %v2348
        %v2350 = vpop.xlane.xlu0 %2349
        %v2351 = vcvt.f32.s32 %v2350
        %v2352 = vcvt.f32.s32 %v2346
        %v2353 = vshll.u32 %v2352, 16
        %v2354 = vadd.s32 %v2353, %v2351
        %vm2355 = vcmp.lt.s32.totalorder %v1885, %v1886
        %v2356 = vsel %vm2355, %v1885, %v1886
        %v2357 = vand.u32 %v2356, 65535
        %v2358 = vshra.s32 %v2356, 16
        %v2359 = vcvt.s32.f32 %v2357
        %v2360 = vcvt.s32.f32 %v2358
        %2361 = vmin.xlane.f32.xlu0 %v2360
        %v2362 = vpop.xlane.xlu0 %2361
        %vm2363 = vcmp.eq.f32.partialorder %v2360, %v2362
        %v2364 = vsel %vm2363, %v2359, inf
        %2365 = vmin.xlane.f32.xlu0 %v2364
        %v2366 = vpop.xlane.xlu0 %2365
        %v2367 = vcvt.f32.s32 %v2366
        %v2368 = vcvt.f32.s32 %v2362
        %v2369 = vshll.u32 %v2368, 16
        %v2370 = vadd.s32 %v2369, %v2367
        %vm2371 = vcmp.lt.s32.totalorder %v1887, %v1888
        %v2372 = vsel %vm2371, %v1887, %v1888
        %v2373 = vand.u32 %v2372, 65535
        %v2374 = vshra.s32 %v2372, 16
        %v2375 = vcvt.s32.f32 %v2373
        %v2376 = vcvt.s32.f32 %v2374
        %2377 = vmin.xlane.f32.xlu0 %v2376
        %v2378 = vpop.xlane.xlu0 %2377
        %vm2379 = vcmp.eq.f32.partialorder %v2376, %v2378
        %v2380 = vsel %vm2379, %v2375, inf
        %2381 = vmin.xlane.f32.xlu0 %v2380
        %v2382 = vpop.xlane.xlu0 %2381
        %v2383 = vcvt.f32.s32 %v2382
        %v2384 = vcvt.f32.s32 %v2378
        %v2385 = vshll.u32 %v2384, 16
        %v2386 = vadd.s32 %v2385, %v2383
        %vm2387 = vcmp.lt.s32.totalorder %v1889, %v1890
        %v2388 = vsel %vm2387, %v1889, %v1890
        %v2389 = vand.u32 %v2388, 65535
        %v2390 = vshra.s32 %v2388, 16
        %v2391 = vcvt.s32.f32 %v2389
        %v2392 = vcvt.s32.f32 %v2390
        %2393 = vmin.xlane.f32.xlu0 %v2392
        %v2394 = vpop.xlane.xlu0 %2393
        %vm2395 = vcmp.eq.f32.partialorder %v2392, %v2394
        %v2396 = vsel %vm2395, %v2391, inf
        %2397 = vmin.xlane.f32.xlu0 %v2396
        %v2398 = vpop.xlane.xlu0 %2397
        %v2399 = vcvt.f32.s32 %v2398
        %v2400 = vcvt.f32.s32 %v2394
        %v2401 = vshll.u32 %v2400, 16
        %v2402 = vadd.s32 %v2401, %v2399
        %vm2403 = vcmp.eq.s32.totalorder %v801, %v1906
        %vm2404 = vcmp.eq.s32.totalorder %v802, %v1906
        %vm2405 = vcmp.eq.s32.totalorder %v801, %v1922
        %vm2406 = vcmp.eq.s32.totalorder %v802, %v1922
        %vm2407 = vcmp.eq.s32.totalorder %v801, %v1938
        %vm2408 = vcmp.eq.s32.totalorder %v802, %v1938
        %vm2409 = vcmp.eq.s32.totalorder %v801, %v1954
        %vm2410 = vcmp.eq.s32.totalorder %v802, %v1954
        %vm2411 = vcmp.eq.s32.totalorder %v801, %v1970
        %vm2412 = vcmp.eq.s32.totalorder %v802, %v1970
        %vm2413 = vcmp.eq.s32.totalorder %v801, %v1986
        %vm2414 = vcmp.eq.s32.totalorder %v802, %v1986
        %vm2415 = vcmp.eq.s32.totalorder %v801, %v2002
        %vm2416 = vcmp.eq.s32.totalorder %v802, %v2002
        %vm2417 = vcmp.eq.s32.totalorder %v801, %v2018
        %vm2418 = vcmp.eq.s32.totalorder %v802, %v2018
        %vm2419 = vcmp.eq.s32.totalorder %v801, %v2034
        %vm2420 = vcmp.eq.s32.totalorder %v802, %v2034
        %vm2421 = vcmp.eq.s32.totalorder %v801, %v2050
        %vm2422 = vcmp.eq.s32.totalorder %v802, %v2050
        %vm2423 = vcmp.eq.s32.totalorder %v801, %v2066
        %vm2424 = vcmp.eq.s32.totalorder %v802, %v2066
        %vm2425 = vcmp.eq.s32.totalorder %v801, %v2082
        %vm2426 = vcmp.eq.s32.totalorder %v802, %v2082
        %vm2427 = vcmp.eq.s32.totalorder %v801, %v2098
        %vm2428 = vcmp.eq.s32.totalorder %v802, %v2098
        %vm2429 = vcmp.eq.s32.totalorder %v801, %v2114
        %vm2430 = vcmp.eq.s32.totalorder %v802, %v2114
        %vm2431 = vcmp.eq.s32.totalorder %v801, %v2130
        %vm2432 = vcmp.eq.s32.totalorder %v802, %v2130
        %vm2433 = vcmp.eq.s32.totalorder %v801, %v2146
        %vm2434 = vcmp.eq.s32.totalorder %v802, %v2146
        %vm2435 = vcmp.eq.s32.totalorder %v801, %v2162
        %vm2436 = vcmp.eq.s32.totalorder %v802, %v2162
        %vm2437 = vcmp.eq.s32.totalorder %v801, %v2178
        %vm2438 = vcmp.eq.s32.totalorder %v802, %v2178
        %vm2439 = vcmp.eq.s32.totalorder %v801, %v2194
        %vm2440 = vcmp.eq.s32.totalorder %v802, %v2194
        %vm2441 = vcmp.eq.s32.totalorder %v801, %v2210
        %vm2442 = vcmp.eq.s32.totalorder %v802, %v2210
        %vm2443 = vcmp.eq.s32.totalorder %v801, %v2226
        %vm2444 = vcmp.eq.s32.totalorder %v802, %v2226
        %vm2445 = vcmp.eq.s32.totalorder %v801, %v2242
        %vm2446 = vcmp.eq.s32.totalorder %v802, %v2242
        %vm2447 = vcmp.eq.s32.totalorder %v801, %v2258
        %vm2448 = vcmp.eq.s32.totalorder %v802, %v2258
        %vm2449 = vcmp.eq.s32.totalorder %v801, %v2274
        %vm2450 = vcmp.eq.s32.totalorder %v802, %v2274
        %vm2451 = vcmp.eq.s32.totalorder %v801, %v2290
        %vm2452 = vcmp.eq.s32.totalorder %v802, %v2290
        %vm2453 = vcmp.eq.s32.totalorder %v801, %v2306
        %vm2454 = vcmp.eq.s32.totalorder %v802, %v2306
        %vm2455 = vcmp.eq.s32.totalorder %v801, %v2322
        %vm2456 = vcmp.eq.s32.totalorder %v802, %v2322
        %vm2457 = vcmp.eq.s32.totalorder %v801, %v2338
        %vm2458 = vcmp.eq.s32.totalorder %v802, %v2338
        %vm2459 = vcmp.eq.s32.totalorder %v801, %v2354
        %vm2460 = vcmp.eq.s32.totalorder %v802, %v2354
        %vm2461 = vcmp.eq.s32.totalorder %v801, %v2370
        %vm2462 = vcmp.eq.s32.totalorder %v802, %v2370
        %vm2463 = vcmp.eq.s32.totalorder %v801, %v2386
        %vm2464 = vcmp.eq.s32.totalorder %v802, %v2386
        %vm2465 = vcmp.eq.s32.totalorder %v801, %v2402
        %vm2466 = vcmp.eq.s32.totalorder %v802, %v2402
        %v2467 = vsel %vm2403, -3.4028235e+38, %v1603
        %v2468 = vsel %vm2404, -3.4028235e+38, %v1604
        %v2469 = vsel %vm2405, -3.4028235e+38, %v1605
        %v2470 = vsel %vm2406, -3.4028235e+38, %v1606
        %v2471 = vsel %vm2407, -3.4028235e+38, %v1607
        %v2472 = vsel %vm2408, -3.4028235e+38, %v1608
        %v2473 = vsel %vm2409, -3.4028235e+38, %v1609
        %v2474 = vsel %vm2410, -3.4028235e+38, %v1610
        %v2475 = vsel %vm2411, -3.4028235e+38, %v1611
        %v2476 = vsel %vm2412, -3.4028235e+38, %v1612
        %v2477 = vsel %vm2413, -3.4028235e+38, %v1613
        %v2478 = vsel %vm2414, -3.4028235e+38, %v1614
        %v2479 = vsel %vm2415, -3.4028235e+38, %v1615
        %v2480 = vsel %vm2416, -3.4028235e+38, %v1616
        %v2481 = vsel %vm2417, -3.4028235e+38, %v1617
        %v2482 = vsel %vm2418, -3.4028235e+38, %v1618
        %v2483 = vsel %vm2419, -3.4028235e+38, %v1619
        %v2484 = vsel %vm2420, -3.4028235e+38, %v1620
        %v2485 = vsel %vm2421, -3.4028235e+38, %v1621
        %v2486 = vsel %vm2422, -3.4028235e+38, %v1622
        %v2487 = vsel %vm2423, -3.4028235e+38, %v1623
        %v2488 = vsel %vm2424, -3.4028235e+38, %v1624
        %v2489 = vsel %vm2425, -3.4028235e+38, %v1625
        %v2490 = vsel %vm2426, -3.4028235e+38, %v1626
        %v2491 = vsel %vm2427, -3.4028235e+38, %v1627
        %v2492 = vsel %vm2428, -3.4028235e+38, %v1628
        %v2493 = vsel %vm2429, -3.4028235e+38, %v1629
        %v2494 = vsel %vm2430, -3.4028235e+38, %v1630
        %v2495 = vsel %vm2431, -3.4028235e+38, %v1631
        %v2496 = vsel %vm2432, -3.4028235e+38, %v1632
        %v2497 = vsel %vm2433, -3.4028235e+38, %v1633
        %v2498 = vsel %vm2434, -3.4028235e+38, %v1634
        %v2499 = vsel %vm2435, -3.4028235e+38, %v1635
        %v2500 = vsel %vm2436, -3.4028235e+38, %v1636
        %v2501 = vsel %vm2437, -3.4028235e+38, %v1637
        %v2502 = vsel %vm2438, -3.4028235e+38, %v1638
        %v2503 = vsel %vm2439, -3.4028235e+38, %v1639
        %v2504 = vsel %vm2440, -3.4028235e+38, %v1640
        %v2505 = vsel %vm2441, -3.4028235e+38, %v1641
        %v2506 = vsel %vm2442, -3.4028235e+38, %v1642
        %v2507 = vsel %vm2443, -3.4028235e+38, %v1643
        %v2508 = vsel %vm2444, -3.4028235e+38, %v1644
        %v2509 = vsel %vm2445, -3.4028235e+38, %v1645
        %v2510 = vsel %vm2446, -3.4028235e+38, %v1646
        %v2511 = vsel %vm2447, -3.4028235e+38, %v1647
        %v2512 = vsel %vm2448, -3.4028235e+38, %v1648
        %v2513 = vsel %vm2449, -3.4028235e+38, %v1649
        %v2514 = vsel %vm2450, -3.4028235e+38, %v1650
        %v2515 = vsel %vm2451, -3.4028235e+38, %v1651
        %v2516 = vsel %vm2452, -3.4028235e+38, %v1652
        %v2517 = vsel %vm2453, -3.4028235e+38, %v1653
        %v2518 = vsel %vm2454, -3.4028235e+38, %v1654
        %v2519 = vsel %vm2455, -3.4028235e+38, %v1655
        %v2520 = vsel %vm2456, -3.4028235e+38, %v1656
        %v2521 = vsel %vm2457, -3.4028235e+38, %v1657
        %v2522 = vsel %vm2458, -3.4028235e+38, %v1658
        %v2523 = vsel %vm2459, -3.4028235e+38, %v1659
        %v2524 = vsel %vm2460, -3.4028235e+38, %v1660
        %v2525 = vsel %vm2461, -3.4028235e+38, %v1661
        %v2526 = vsel %vm2462, -3.4028235e+38, %v1662
        %v2527 = vsel %vm2463, -3.4028235e+38, %v1663
        %v2528 = vsel %vm2464, -3.4028235e+38, %v1664
        %v2529 = vsel %vm2465, -3.4028235e+38, %v1665
        %v2530 = vsel %vm2466, -3.4028235e+38, %v1666
        %v2531 = vmax.f32 %v2467, %v2468
        %2532 = vmax.xlane.f32.xlu0 %v2531
        %v2533 = vpop.xlane.xlu0 %2532
        %v2534 = vmax.f32 %v2469, %v2470
        %2535 = vmax.xlane.f32.xlu0 %v2534
        %v2536 = vpop.xlane.xlu0 %2535
        %v2537 = vmax.f32 %v2471, %v2472
        %2538 = vmax.xlane.f32.xlu0 %v2537
        %v2539 = vpop.xlane.xlu0 %2538
        %v2540 = vmax.f32 %v2473, %v2474
        %2541 = vmax.xlane.f32.xlu0 %v2540
        %v2542 = vpop.xlane.xlu0 %2541
        %v2543 = vmax.f32 %v2475, %v2476
        %2544 = vmax.xlane.f32.xlu0 %v2543
        %v2545 = vpop.xlane.xlu0 %2544
        %v2546 = vmax.f32 %v2477, %v2478
        %2547 = vmax.xlane.f32.xlu0 %v2546
        %v2548 = vpop.xlane.xlu0 %2547
        %v2549 = vmax.f32 %v2479, %v2480
        %2550 = vmax.xlane.f32.xlu0 %v2549
        %v2551 = vpop.xlane.xlu0 %2550
        %v2552 = vmax.f32 %v2481, %v2482
        %2553 = vmax.xlane.f32.xlu0 %v2552
        %v2554 = vpop.xlane.xlu0 %2553
        %v2555 = vmax.f32 %v2483, %v2484
        %2556 = vmax.xlane.f32.xlu0 %v2555
        %v2557 = vpop.xlane.xlu0 %2556
        %v2558 = vmax.f32 %v2485, %v2486
        %2559 = vmax.xlane.f32.xlu0 %v2558
        %v2560 = vpop.xlane.xlu0 %2559
        %v2561 = vmax.f32 %v2487, %v2488
        %2562 = vmax.xlane.f32.xlu0 %v2561
        %v2563 = vpop.xlane.xlu0 %2562
        %v2564 = vmax.f32 %v2489, %v2490
        %2565 = vmax.xlane.f32.xlu0 %v2564
        %v2566 = vpop.xlane.xlu0 %2565
        %v2567 = vmax.f32 %v2491, %v2492
        %2568 = vmax.xlane.f32.xlu0 %v2567
        %v2569 = vpop.xlane.xlu0 %2568
        %v2570 = vmax.f32 %v2493, %v2494
        %2571 = vmax.xlane.f32.xlu0 %v2570
        %v2572 = vpop.xlane.xlu0 %2571
        %v2573 = vmax.f32 %v2495, %v2496
        %2574 = vmax.xlane.f32.xlu0 %v2573
        %v2575 = vpop.xlane.xlu0 %2574
        %v2576 = vmax.f32 %v2497, %v2498
        %2577 = vmax.xlane.f32.xlu0 %v2576
        %v2578 = vpop.xlane.xlu0 %2577
        %v2579 = vmax.f32 %v2499, %v2500
        %2580 = vmax.xlane.f32.xlu0 %v2579
        %v2581 = vpop.xlane.xlu0 %2580
        %v2582 = vmax.f32 %v2501, %v2502
        %2583 = vmax.xlane.f32.xlu0 %v2582
        %v2584 = vpop.xlane.xlu0 %2583
        %v2585 = vmax.f32 %v2503, %v2504
        %2586 = vmax.xlane.f32.xlu0 %v2585
        %v2587 = vpop.xlane.xlu0 %2586
        %v2588 = vmax.f32 %v2505, %v2506
        %2589 = vmax.xlane.f32.xlu0 %v2588
        %v2590 = vpop.xlane.xlu0 %2589
        %v2591 = vmax.f32 %v2507, %v2508
        %2592 = vmax.xlane.f32.xlu0 %v2591
        %v2593 = vpop.xlane.xlu0 %2592
        %v2594 = vmax.f32 %v2509, %v2510
        %2595 = vmax.xlane.f32.xlu0 %v2594
        %v2596 = vpop.xlane.xlu0 %2595
        %v2597 = vmax.f32 %v2511, %v2512
        %2598 = vmax.xlane.f32.xlu0 %v2597
        %v2599 = vpop.xlane.xlu0 %2598
        %v2600 = vmax.f32 %v2513, %v2514
        %2601 = vmax.xlane.f32.xlu0 %v2600
        %v2602 = vpop.xlane.xlu0 %2601
        %v2603 = vmax.f32 %v2515, %v2516
        %2604 = vmax.xlane.f32.xlu0 %v2603
        %v2605 = vpop.xlane.xlu0 %2604
        %v2606 = vmax.f32 %v2517, %v2518
        %2607 = vmax.xlane.f32.xlu0 %v2606
        %v2608 = vpop.xlane.xlu0 %2607
        %v2609 = vmax.f32 %v2519, %v2520
        %2610 = vmax.xlane.f32.xlu0 %v2609
        %v2611 = vpop.xlane.xlu0 %2610
        %v2612 = vmax.f32 %v2521, %v2522
        %2613 = vmax.xlane.f32.xlu0 %v2612
        %v2614 = vpop.xlane.xlu0 %2613
        %v2615 = vmax.f32 %v2523, %v2524
        %2616 = vmax.xlane.f32.xlu0 %v2615
        %v2617 = vpop.xlane.xlu0 %2616
        %v2618 = vmax.f32 %v2525, %v2526
        %2619 = vmax.xlane.f32.xlu0 %v2618
        %v2620 = vpop.xlane.xlu0 %2619
        %v2621 = vmax.f32 %v2527, %v2528
        %2622 = vmax.xlane.f32.xlu0 %v2621
        %v2623 = vpop.xlane.xlu0 %2622
        %v2624 = vmax.f32 %v2529, %v2530
        %2625 = vmax.xlane.f32.xlu0 %v2624
        %v2626 = vpop.xlane.xlu0 %2625
        %vm2627 = vcmp.eq.f32.partialorder %v2467, %v2533
        %vm2628 = vcmp.eq.f32.partialorder %v2468, %v2533
        %vm2629 = vcmp.eq.f32.partialorder %v2469, %v2536
        %vm2630 = vcmp.eq.f32.partialorder %v2470, %v2536
        %vm2631 = vcmp.eq.f32.partialorder %v2471, %v2539
        %vm2632 = vcmp.eq.f32.partialorder %v2472, %v2539
        %vm2633 = vcmp.eq.f32.partialorder %v2473, %v2542
        %vm2634 = vcmp.eq.f32.partialorder %v2474, %v2542
        %vm2635 = vcmp.eq.f32.partialorder %v2475, %v2545
        %vm2636 = vcmp.eq.f32.partialorder %v2476, %v2545
        %vm2637 = vcmp.eq.f32.partialorder %v2477, %v2548
        %vm2638 = vcmp.eq.f32.partialorder %v2478, %v2548
        %vm2639 = vcmp.eq.f32.partialorder %v2479, %v2551
        %vm2640 = vcmp.eq.f32.partialorder %v2480, %v2551
        %vm2641 = vcmp.eq.f32.partialorder %v2481, %v2554
        %vm2642 = vcmp.eq.f32.partialorder %v2482, %v2554
        %vm2643 = vcmp.eq.f32.partialorder %v2483, %v2557
        %vm2644 = vcmp.eq.f32.partialorder %v2484, %v2557
        %vm2645 = vcmp.eq.f32.partialorder %v2485, %v2560
        %vm2646 = vcmp.eq.f32.partialorder %v2486, %v2560
        %vm2647 = vcmp.eq.f32.partialorder %v2487, %v2563
        %vm2648 = vcmp.eq.f32.partialorder %v2488, %v2563
        %vm2649 = vcmp.eq.f32.partialorder %v2489, %v2566
        %vm2650 = vcmp.eq.f32.partialorder %v2490, %v2566
        %vm2651 = vcmp.eq.f32.partialorder %v2491, %v2569
        %vm2652 = vcmp.eq.f32.partialorder %v2492, %v2569
        %vm2653 = vcmp.eq.f32.partialorder %v2493, %v2572
        %vm2654 = vcmp.eq.f32.partialorder %v2494, %v2572
        %vm2655 = vcmp.eq.f32.partialorder %v2495, %v2575
        %vm2656 = vcmp.eq.f32.partialorder %v2496, %v2575
        %vm2657 = vcmp.eq.f32.partialorder %v2497, %v2578
        %vm2658 = vcmp.eq.f32.partialorder %v2498, %v2578
        %vm2659 = vcmp.eq.f32.partialorder %v2499, %v2581
        %vm2660 = vcmp.eq.f32.partialorder %v2500, %v2581
        %vm2661 = vcmp.eq.f32.partialorder %v2501, %v2584
        %vm2662 = vcmp.eq.f32.partialorder %v2502, %v2584
        %vm2663 = vcmp.eq.f32.partialorder %v2503, %v2587
        %vm2664 = vcmp.eq.f32.partialorder %v2504, %v2587
        %vm2665 = vcmp.eq.f32.partialorder %v2505, %v2590
        %vm2666 = vcmp.eq.f32.partialorder %v2506, %v2590
        %vm2667 = vcmp.eq.f32.partialorder %v2507, %v2593
        %vm2668 = vcmp.eq.f32.partialorder %v2508, %v2593
        %vm2669 = vcmp.eq.f32.partialorder %v2509, %v2596
        %vm2670 = vcmp.eq.f32.partialorder %v2510, %v2596
        %vm2671 = vcmp.eq.f32.partialorder %v2511, %v2599
        %vm2672 = vcmp.eq.f32.partialorder %v2512, %v2599
        %vm2673 = vcmp.eq.f32.partialorder %v2513, %v2602
        %vm2674 = vcmp.eq.f32.partialorder %v2514, %v2602
        %vm2675 = vcmp.eq.f32.partialorder %v2515, %v2605
        %vm2676 = vcmp.eq.f32.partialorder %v2516, %v2605
        %vm2677 = vcmp.eq.f32.partialorder %v2517, %v2608
        %vm2678 = vcmp.eq.f32.partialorder %v2518, %v2608
        %vm2679 = vcmp.eq.f32.partialorder %v2519, %v2611
        %vm2680 = vcmp.eq.f32.partialorder %v2520, %v2611
        %vm2681 = vcmp.eq.f32.partialorder %v2521, %v2614
        %vm2682 = vcmp.eq.f32.partialorder %v2522, %v2614
        %vm2683 = vcmp.eq.f32.partialorder %v2523, %v2617
        %vm2684 = vcmp.eq.f32.partialorder %v2524, %v2617
        %vm2685 = vcmp.eq.f32.partialorder %v2525, %v2620
        %vm2686 = vcmp.eq.f32.partialorder %v2526, %v2620
        %vm2687 = vcmp.eq.f32.partialorder %v2527, %v2623
        %vm2688 = vcmp.eq.f32.partialorder %v2528, %v2623
        %vm2689 = vcmp.eq.f32.partialorder %v2529, %v2626
        %vm2690 = vcmp.eq.f32.partialorder %v2530, %v2626
        %v2691 = vsel %vm2627, %v801, 256
        %v2692 = vsel %vm2628, %v802, 256
        %v2693 = vsel %vm2629, %v801, 256
        %v2694 = vsel %vm2630, %v802, 256
        %v2695 = vsel %vm2631, %v801, 256
        %v2696 = vsel %vm2632, %v802, 256
        %v2697 = vsel %vm2633, %v801, 256
        %v2698 = vsel %vm2634, %v802, 256
        %v2699 = vsel %vm2635, %v801, 256
        %v2700 = vsel %vm2636, %v802, 256
        %v2701 = vsel %vm2637, %v801, 256
        %v2702 = vsel %vm2638, %v802, 256
        %v2703 = vsel %vm2639, %v801, 256
        %v2704 = vsel %vm2640, %v802, 256
        %v2705 = vsel %vm2641, %v801, 256
        %v2706 = vsel %vm2642, %v802, 256
        %v2707 = vsel %vm2643, %v801, 256
        %v2708 = vsel %vm2644, %v802, 256
        %v2709 = vsel %vm2645, %v801, 256
        %v2710 = vsel %vm2646, %v802, 256
        %v2711 = vsel %vm2647, %v801, 256
        %v2712 = vsel %vm2648, %v802, 256
        %v2713 = vsel %vm2649, %v801, 256
        %v2714 = vsel %vm2650, %v802, 256
        %v2715 = vsel %vm2651, %v801, 256
        %v2716 = vsel %vm2652, %v802, 256
        %v2717 = vsel %vm2653, %v801, 256
        %v2718 = vsel %vm2654, %v802, 256
        %v2719 = vsel %vm2655, %v801, 256
        %v2720 = vsel %vm2656, %v802, 256
        %v2721 = vsel %vm2657, %v801, 256
        %v2722 = vsel %vm2658, %v802, 256
        %v2723 = vsel %vm2659, %v801, 256
        %v2724 = vsel %vm2660, %v802, 256
        %v2725 = vsel %vm2661, %v801, 256
        %v2726 = vsel %vm2662, %v802, 256
        %v2727 = vsel %vm2663, %v801, 256
        %v2728 = vsel %vm2664, %v802, 256
        %v2729 = vsel %vm2665, %v801, 256
        %v2730 = vsel %vm2666, %v802, 256
        %v2731 = vsel %vm2667, %v801, 256
        %v2732 = vsel %vm2668, %v802, 256
        %v2733 = vsel %vm2669, %v801, 256
        %v2734 = vsel %vm2670, %v802, 256
        %v2735 = vsel %vm2671, %v801, 256
        %v2736 = vsel %vm2672, %v802, 256
        %v2737 = vsel %vm2673, %v801, 256
        %v2738 = vsel %vm2674, %v802, 256
        %v2739 = vsel %vm2675, %v801, 256
        %v2740 = vsel %vm2676, %v802, 256
        %v2741 = vsel %vm2677, %v801, 256
        %v2742 = vsel %vm2678, %v802, 256
        %v2743 = vsel %vm2679, %v801, 256
        %v2744 = vsel %vm2680, %v802, 256
        %v2745 = vsel %vm2681, %v801, 256
        %v2746 = vsel %vm2682, %v802, 256
        %v2747 = vsel %vm2683, %v801, 256
        %v2748 = vsel %vm2684, %v802, 256
        %v2749 = vsel %vm2685, %v801, 256
        %v2750 = vsel %vm2686, %v802, 256
        %v2751 = vsel %vm2687, %v801, 256
        %v2752 = vsel %vm2688, %v802, 256
        %v2753 = vsel %vm2689, %v801, 256
        %v2754 = vsel %vm2690, %v802, 256
        %vm2755 = vcmp.lt.s32.totalorder %v2691, %v2692
        %v2756 = vsel %vm2755, %v2691, %v2692
        %v2757 = vand.u32 %v2756, 65535
        %v2758 = vshra.s32 %v2756, 16
        %v2759 = vcvt.s32.f32 %v2757
        %v2760 = vcvt.s32.f32 %v2758
        %2761 = vmin.xlane.f32.xlu0 %v2760
        %v2762 = vpop.xlane.xlu0 %2761
        %vm2763 = vcmp.eq.f32.partialorder %v2760, %v2762
        %v2764 = vsel %vm2763, %v2759, inf
        %2765 = vmin.xlane.f32.xlu0 %v2764
        %v2766 = vpop.xlane.xlu0 %2765
        %v2767 = vcvt.f32.s32 %v2766
        %v2768 = vcvt.f32.s32 %v2762
        %v2769 = vshll.u32 %v2768, 16
        %v2770 = vadd.s32 %v2769, %v2767
        %vm2771 = vcmp.lt.s32.totalorder %v2693, %v2694
        %v2772 = vsel %vm2771, %v2693, %v2694
        %v2773 = vand.u32 %v2772, 65535
        %v2774 = vshra.s32 %v2772, 16
        %v2775 = vcvt.s32.f32 %v2773
        %v2776 = vcvt.s32.f32 %v2774
        %2777 = vmin.xlane.f32.xlu0 %v2776
        %v2778 = vpop.xlane.xlu0 %2777
        %vm2779 = vcmp.eq.f32.partialorder %v2776, %v2778
        %v2780 = vsel %vm2779, %v2775, inf
        %2781 = vmin.xlane.f32.xlu0 %v2780
        %v2782 = vpop.xlane.xlu0 %2781
        %v2783 = vcvt.f32.s32 %v2782
        %v2784 = vcvt.f32.s32 %v2778
        %v2785 = vshll.u32 %v2784, 16
        %v2786 = vadd.s32 %v2785, %v2783
        %vm2787 = vcmp.lt.s32.totalorder %v2695, %v2696
        %v2788 = vsel %vm2787, %v2695, %v2696
        %v2789 = vand.u32 %v2788, 65535
        %v2790 = vshra.s32 %v2788, 16
        %v2791 = vcvt.s32.f32 %v2789
        %v2792 = vcvt.s32.f32 %v2790
        %2793 = vmin.xlane.f32.xlu0 %v2792
        %v2794 = vpop.xlane.xlu0 %2793
        %vm2795 = vcmp.eq.f32.partialorder %v2792, %v2794
        %v2796 = vsel %vm2795, %v2791, inf
        %2797 = vmin.xlane.f32.xlu0 %v2796
        %v2798 = vpop.xlane.xlu0 %2797
        %v2799 = vcvt.f32.s32 %v2798
        %v2800 = vcvt.f32.s32 %v2794
        %v2801 = vshll.u32 %v2800, 16
        %v2802 = vadd.s32 %v2801, %v2799
        %vm2803 = vcmp.lt.s32.totalorder %v2697, %v2698
        %v2804 = vsel %vm2803, %v2697, %v2698
        %v2805 = vand.u32 %v2804, 65535
        %v2806 = vshra.s32 %v2804, 16
        %v2807 = vcvt.s32.f32 %v2805
        %v2808 = vcvt.s32.f32 %v2806
        %2809 = vmin.xlane.f32.xlu0 %v2808
        %v2810 = vpop.xlane.xlu0 %2809
        %vm2811 = vcmp.eq.f32.partialorder %v2808, %v2810
        %v2812 = vsel %vm2811, %v2807, inf
        %2813 = vmin.xlane.f32.xlu0 %v2812
        %v2814 = vpop.xlane.xlu0 %2813
        %v2815 = vcvt.f32.s32 %v2814
        %v2816 = vcvt.f32.s32 %v2810
        %v2817 = vshll.u32 %v2816, 16
        %v2818 = vadd.s32 %v2817, %v2815
        %vm2819 = vcmp.lt.s32.totalorder %v2699, %v2700
        %v2820 = vsel %vm2819, %v2699, %v2700
        %v2821 = vand.u32 %v2820, 65535
        %v2822 = vshra.s32 %v2820, 16
        %v2823 = vcvt.s32.f32 %v2821
        %v2824 = vcvt.s32.f32 %v2822
        %2825 = vmin.xlane.f32.xlu0 %v2824
        %v2826 = vpop.xlane.xlu0 %2825
        %vm2827 = vcmp.eq.f32.partialorder %v2824, %v2826
        %v2828 = vsel %vm2827, %v2823, inf
        %2829 = vmin.xlane.f32.xlu0 %v2828
        %v2830 = vpop.xlane.xlu0 %2829
        %v2831 = vcvt.f32.s32 %v2830
        %v2832 = vcvt.f32.s32 %v2826
        %v2833 = vshll.u32 %v2832, 16
        %v2834 = vadd.s32 %v2833, %v2831
        %vm2835 = vcmp.lt.s32.totalorder %v2701, %v2702
        %v2836 = vsel %vm2835, %v2701, %v2702
        %v2837 = vand.u32 %v2836, 65535
        %v2838 = vshra.s32 %v2836, 16
        %v2839 = vcvt.s32.f32 %v2837
        %v2840 = vcvt.s32.f32 %v2838
        %2841 = vmin.xlane.f32.xlu0 %v2840
        %v2842 = vpop.xlane.xlu0 %2841
        %vm2843 = vcmp.eq.f32.partialorder %v2840, %v2842
        %v2844 = vsel %vm2843, %v2839, inf
        %2845 = vmin.xlane.f32.xlu0 %v2844
        %v2846 = vpop.xlane.xlu0 %2845
        %v2847 = vcvt.f32.s32 %v2846
        %v2848 = vcvt.f32.s32 %v2842
        %v2849 = vshll.u32 %v2848, 16
        %v2850 = vadd.s32 %v2849, %v2847
        %vm2851 = vcmp.lt.s32.totalorder %v2703, %v2704
        %v2852 = vsel %vm2851, %v2703, %v2704
        %v2853 = vand.u32 %v2852, 65535
        %v2854 = vshra.s32 %v2852, 16
        %v2855 = vcvt.s32.f32 %v2853
        %v2856 = vcvt.s32.f32 %v2854
        %2857 = vmin.xlane.f32.xlu0 %v2856
        %v2858 = vpop.xlane.xlu0 %2857
        %vm2859 = vcmp.eq.f32.partialorder %v2856, %v2858
        %v2860 = vsel %vm2859, %v2855, inf
        %2861 = vmin.xlane.f32.xlu0 %v2860
        %v2862 = vpop.xlane.xlu0 %2861
        %v2863 = vcvt.f32.s32 %v2862
        %v2864 = vcvt.f32.s32 %v2858
        %v2865 = vshll.u32 %v2864, 16
        %v2866 = vadd.s32 %v2865, %v2863
        %vm2867 = vcmp.lt.s32.totalorder %v2705, %v2706
        %v2868 = vsel %vm2867, %v2705, %v2706
        %v2869 = vand.u32 %v2868, 65535
        %v2870 = vshra.s32 %v2868, 16
        %v2871 = vcvt.s32.f32 %v2869
        %v2872 = vcvt.s32.f32 %v2870
        %2873 = vmin.xlane.f32.xlu0 %v2872
        %v2874 = vpop.xlane.xlu0 %2873
        %vm2875 = vcmp.eq.f32.partialorder %v2872, %v2874
        %v2876 = vsel %vm2875, %v2871, inf
        %2877 = vmin.xlane.f32.xlu0 %v2876
        %v2878 = vpop.xlane.xlu0 %2877
        %v2879 = vcvt.f32.s32 %v2878
        %v2880 = vcvt.f32.s32 %v2874
        %v2881 = vshll.u32 %v2880, 16
        %v2882 = vadd.s32 %v2881, %v2879
        %vm2883 = vcmp.lt.s32.totalorder %v2707, %v2708
        %v2884 = vsel %vm2883, %v2707, %v2708
        %v2885 = vand.u32 %v2884, 65535
        %v2886 = vshra.s32 %v2884, 16
        %v2887 = vcvt.s32.f32 %v2885
        %v2888 = vcvt.s32.f32 %v2886
        %2889 = vmin.xlane.f32.xlu0 %v2888
        %v2890 = vpop.xlane.xlu0 %2889
        %vm2891 = vcmp.eq.f32.partialorder %v2888, %v2890
        %v2892 = vsel %vm2891, %v2887, inf
        %2893 = vmin.xlane.f32.xlu0 %v2892
        %v2894 = vpop.xlane.xlu0 %2893
        %v2895 = vcvt.f32.s32 %v2894
        %v2896 = vcvt.f32.s32 %v2890
        %v2897 = vshll.u32 %v2896, 16
        %v2898 = vadd.s32 %v2897, %v2895
        %vm2899 = vcmp.lt.s32.totalorder %v2709, %v2710
        %v2900 = vsel %vm2899, %v2709, %v2710
        %v2901 = vand.u32 %v2900, 65535
        %v2902 = vshra.s32 %v2900, 16
        %v2903 = vcvt.s32.f32 %v2901
        %v2904 = vcvt.s32.f32 %v2902
        %2905 = vmin.xlane.f32.xlu0 %v2904
        %v2906 = vpop.xlane.xlu0 %2905
        %vm2907 = vcmp.eq.f32.partialorder %v2904, %v2906
        %v2908 = vsel %vm2907, %v2903, inf
        %2909 = vmin.xlane.f32.xlu0 %v2908
        %v2910 = vpop.xlane.xlu0 %2909
        %v2911 = vcvt.f32.s32 %v2910
        %v2912 = vcvt.f32.s32 %v2906
        %v2913 = vshll.u32 %v2912, 16
        %v2914 = vadd.s32 %v2913, %v2911
        %vm2915 = vcmp.lt.s32.totalorder %v2711, %v2712
        %v2916 = vsel %vm2915, %v2711, %v2712
        %v2917 = vand.u32 %v2916, 65535
        %v2918 = vshra.s32 %v2916, 16
        %v2919 = vcvt.s32.f32 %v2917
        %v2920 = vcvt.s32.f32 %v2918
        %2921 = vmin.xlane.f32.xlu0 %v2920
        %v2922 = vpop.xlane.xlu0 %2921
        %vm2923 = vcmp.eq.f32.partialorder %v2920, %v2922
        %v2924 = vsel %vm2923, %v2919, inf
        %2925 = vmin.xlane.f32.xlu0 %v2924
        %v2926 = vpop.xlane.xlu0 %2925
        %v2927 = vcvt.f32.s32 %v2926
        %v2928 = vcvt.f32.s32 %v2922
        %v2929 = vshll.u32 %v2928, 16
        %v2930 = vadd.s32 %v2929, %v2927
        %vm2931 = vcmp.lt.s32.totalorder %v2713, %v2714
        %v2932 = vsel %vm2931, %v2713, %v2714
        %v2933 = vand.u32 %v2932, 65535
        %v2934 = vshra.s32 %v2932, 16
        %v2935 = vcvt.s32.f32 %v2933
        %v2936 = vcvt.s32.f32 %v2934
        %2937 = vmin.xlane.f32.xlu0 %v2936
        %v2938 = vpop.xlane.xlu0 %2937
        %vm2939 = vcmp.eq.f32.partialorder %v2936, %v2938
        %v2940 = vsel %vm2939, %v2935, inf
        %2941 = vmin.xlane.f32.xlu0 %v2940
        %v2942 = vpop.xlane.xlu0 %2941
        %v2943 = vcvt.f32.s32 %v2942
        %v2944 = vcvt.f32.s32 %v2938
        %v2945 = vshll.u32 %v2944, 16
        %v2946 = vadd.s32 %v2945, %v2943
        %vm2947 = vcmp.lt.s32.totalorder %v2715, %v2716
        %v2948 = vsel %vm2947, %v2715, %v2716
        %v2949 = vand.u32 %v2948, 65535
        %v2950 = vshra.s32 %v2948, 16
        %v2951 = vcvt.s32.f32 %v2949
        %v2952 = vcvt.s32.f32 %v2950
        %2953 = vmin.xlane.f32.xlu0 %v2952
        %v2954 = vpop.xlane.xlu0 %2953
        %vm2955 = vcmp.eq.f32.partialorder %v2952, %v2954
        %v2956 = vsel %vm2955, %v2951, inf
        %2957 = vmin.xlane.f32.xlu0 %v2956
        %v2958 = vpop.xlane.xlu0 %2957
        %v2959 = vcvt.f32.s32 %v2958
        %v2960 = vcvt.f32.s32 %v2954
        %v2961 = vshll.u32 %v2960, 16
        %v2962 = vadd.s32 %v2961, %v2959
        %vm2963 = vcmp.lt.s32.totalorder %v2717, %v2718
        %v2964 = vsel %vm2963, %v2717, %v2718
        %v2965 = vand.u32 %v2964, 65535
        %v2966 = vshra.s32 %v2964, 16
        %v2967 = vcvt.s32.f32 %v2965
        %v2968 = vcvt.s32.f32 %v2966
        %2969 = vmin.xlane.f32.xlu0 %v2968
        %v2970 = vpop.xlane.xlu0 %2969
        %vm2971 = vcmp.eq.f32.partialorder %v2968, %v2970
        %v2972 = vsel %vm2971, %v2967, inf
        %2973 = vmin.xlane.f32.xlu0 %v2972
        %v2974 = vpop.xlane.xlu0 %2973
        %v2975 = vcvt.f32.s32 %v2974
        %v2976 = vcvt.f32.s32 %v2970
        %v2977 = vshll.u32 %v2976, 16
        %v2978 = vadd.s32 %v2977, %v2975
        %vm2979 = vcmp.lt.s32.totalorder %v2719, %v2720
        %v2980 = vsel %vm2979, %v2719, %v2720
        %v2981 = vand.u32 %v2980, 65535
        %v2982 = vshra.s32 %v2980, 16
        %v2983 = vcvt.s32.f32 %v2981
        %v2984 = vcvt.s32.f32 %v2982
        %2985 = vmin.xlane.f32.xlu0 %v2984
        %v2986 = vpop.xlane.xlu0 %2985
        %vm2987 = vcmp.eq.f32.partialorder %v2984, %v2986
        %v2988 = vsel %vm2987, %v2983, inf
        %2989 = vmin.xlane.f32.xlu0 %v2988
        %v2990 = vpop.xlane.xlu0 %2989
        %v2991 = vcvt.f32.s32 %v2990
        %v2992 = vcvt.f32.s32 %v2986
        %v2993 = vshll.u32 %v2992, 16
        %v2994 = vadd.s32 %v2993, %v2991
        %vm2995 = vcmp.lt.s32.totalorder %v2721, %v2722
        %v2996 = vsel %vm2995, %v2721, %v2722
        %v2997 = vand.u32 %v2996, 65535
        %v2998 = vshra.s32 %v2996, 16
        %v2999 = vcvt.s32.f32 %v2997
        %v3000 = vcvt.s32.f32 %v2998
        %3001 = vmin.xlane.f32.xlu0 %v3000
        %v3002 = vpop.xlane.xlu0 %3001
        %vm3003 = vcmp.eq.f32.partialorder %v3000, %v3002
        %v3004 = vsel %vm3003, %v2999, inf
        %3005 = vmin.xlane.f32.xlu0 %v3004
        %v3006 = vpop.xlane.xlu0 %3005
        %v3007 = vcvt.f32.s32 %v3006
        %v3008 = vcvt.f32.s32 %v3002
        %v3009 = vshll.u32 %v3008, 16
        %v3010 = vadd.s32 %v3009, %v3007
        %vm3011 = vcmp.lt.s32.totalorder %v2723, %v2724
        %v3012 = vsel %vm3011, %v2723, %v2724
        %v3013 = vand.u32 %v3012, 65535
        %v3014 = vshra.s32 %v3012, 16
        %v3015 = vcvt.s32.f32 %v3013
        %v3016 = vcvt.s32.f32 %v3014
        %3017 = vmin.xlane.f32.xlu0 %v3016
        %v3018 = vpop.xlane.xlu0 %3017
        %vm3019 = vcmp.eq.f32.partialorder %v3016, %v3018
        %v3020 = vsel %vm3019, %v3015, inf
        %3021 = vmin.xlane.f32.xlu0 %v3020
        %v3022 = vpop.xlane.xlu0 %3021
        %v3023 = vcvt.f32.s32 %v3022
        %v3024 = vcvt.f32.s32 %v3018
        %v3025 = vshll.u32 %v3024, 16
        %v3026 = vadd.s32 %v3025, %v3023
        %vm3027 = vcmp.lt.s32.totalorder %v2725, %v2726
        %v3028 = vsel %vm3027, %v2725, %v2726
        %v3029 = vand.u32 %v3028, 65535
        %v3030 = vshra.s32 %v3028, 16
        %v3031 = vcvt.s32.f32 %v3029
        %v3032 = vcvt.s32.f32 %v3030
        %3033 = vmin.xlane.f32.xlu0 %v3032
        %v3034 = vpop.xlane.xlu0 %3033
        %vm3035 = vcmp.eq.f32.partialorder %v3032, %v3034
        %v3036 = vsel %vm3035, %v3031, inf
        %3037 = vmin.xlane.f32.xlu0 %v3036
        %v3038 = vpop.xlane.xlu0 %3037
        %v3039 = vcvt.f32.s32 %v3038
        %v3040 = vcvt.f32.s32 %v3034
        %v3041 = vshll.u32 %v3040, 16
        %v3042 = vadd.s32 %v3041, %v3039
        %vm3043 = vcmp.lt.s32.totalorder %v2727, %v2728
        %v3044 = vsel %vm3043, %v2727, %v2728
        %v3045 = vand.u32 %v3044, 65535
        %v3046 = vshra.s32 %v3044, 16
        %v3047 = vcvt.s32.f32 %v3045
        %v3048 = vcvt.s32.f32 %v3046
        %3049 = vmin.xlane.f32.xlu0 %v3048
        %v3050 = vpop.xlane.xlu0 %3049
        %vm3051 = vcmp.eq.f32.partialorder %v3048, %v3050
        %v3052 = vsel %vm3051, %v3047, inf
        %3053 = vmin.xlane.f32.xlu0 %v3052
        %v3054 = vpop.xlane.xlu0 %3053
        %v3055 = vcvt.f32.s32 %v3054
        %v3056 = vcvt.f32.s32 %v3050
        %v3057 = vshll.u32 %v3056, 16
        %v3058 = vadd.s32 %v3057, %v3055
        %vm3059 = vcmp.lt.s32.totalorder %v2729, %v2730
        %v3060 = vsel %vm3059, %v2729, %v2730
        %v3061 = vand.u32 %v3060, 65535
        %v3062 = vshra.s32 %v3060, 16
        %v3063 = vcvt.s32.f32 %v3061
        %v3064 = vcvt.s32.f32 %v3062
        %3065 = vmin.xlane.f32.xlu0 %v3064
        %v3066 = vpop.xlane.xlu0 %3065
        %vm3067 = vcmp.eq.f32.partialorder %v3064, %v3066
        %v3068 = vsel %vm3067, %v3063, inf
        %3069 = vmin.xlane.f32.xlu0 %v3068
        %v3070 = vpop.xlane.xlu0 %3069
        %v3071 = vcvt.f32.s32 %v3070
        %v3072 = vcvt.f32.s32 %v3066
        %v3073 = vshll.u32 %v3072, 16
        %v3074 = vadd.s32 %v3073, %v3071
        %vm3075 = vcmp.lt.s32.totalorder %v2731, %v2732
        %v3076 = vsel %vm3075, %v2731, %v2732
        %v3077 = vand.u32 %v3076, 65535
        %v3078 = vshra.s32 %v3076, 16
        %v3079 = vcvt.s32.f32 %v3077
        %v3080 = vcvt.s32.f32 %v3078
        %3081 = vmin.xlane.f32.xlu0 %v3080
        %v3082 = vpop.xlane.xlu0 %3081
        %vm3083 = vcmp.eq.f32.partialorder %v3080, %v3082
        %v3084 = vsel %vm3083, %v3079, inf
        %3085 = vmin.xlane.f32.xlu0 %v3084
        %v3086 = vpop.xlane.xlu0 %3085
        %v3087 = vcvt.f32.s32 %v3086
        %v3088 = vcvt.f32.s32 %v3082
        %v3089 = vshll.u32 %v3088, 16
        %v3090 = vadd.s32 %v3089, %v3087
        %vm3091 = vcmp.lt.s32.totalorder %v2733, %v2734
        %v3092 = vsel %vm3091, %v2733, %v2734
        %v3093 = vand.u32 %v3092, 65535
        %v3094 = vshra.s32 %v3092, 16
        %v3095 = vcvt.s32.f32 %v3093
        %v3096 = vcvt.s32.f32 %v3094
        %3097 = vmin.xlane.f32.xlu0 %v3096
        %v3098 = vpop.xlane.xlu0 %3097
        %vm3099 = vcmp.eq.f32.partialorder %v3096, %v3098
        %v3100 = vsel %vm3099, %v3095, inf
        %3101 = vmin.xlane.f32.xlu0 %v3100
        %v3102 = vpop.xlane.xlu0 %3101
        %v3103 = vcvt.f32.s32 %v3102
        %v3104 = vcvt.f32.s32 %v3098
        %v3105 = vshll.u32 %v3104, 16
        %v3106 = vadd.s32 %v3105, %v3103
        %vm3107 = vcmp.lt.s32.totalorder %v2735, %v2736
        %v3108 = vsel %vm3107, %v2735, %v2736
        %v3109 = vand.u32 %v3108, 65535
        %v3110 = vshra.s32 %v3108, 16
        %v3111 = vcvt.s32.f32 %v3109
        %v3112 = vcvt.s32.f32 %v3110
        %3113 = vmin.xlane.f32.xlu0 %v3112
        %v3114 = vpop.xlane.xlu0 %3113
        %vm3115 = vcmp.eq.f32.partialorder %v3112, %v3114
        %v3116 = vsel %vm3115, %v3111, inf
        %3117 = vmin.xlane.f32.xlu0 %v3116
        %v3118 = vpop.xlane.xlu0 %3117
        %v3119 = vcvt.f32.s32 %v3118
        %v3120 = vcvt.f32.s32 %v3114
        %v3121 = vshll.u32 %v3120, 16
        %v3122 = vadd.s32 %v3121, %v3119
        %vm3123 = vcmp.lt.s32.totalorder %v2737, %v2738
        %v3124 = vsel %vm3123, %v2737, %v2738
        %v3125 = vand.u32 %v3124, 65535
        %v3126 = vshra.s32 %v3124, 16
        %v3127 = vcvt.s32.f32 %v3125
        %v3128 = vcvt.s32.f32 %v3126
        %3129 = vmin.xlane.f32.xlu0 %v3128
        %v3130 = vpop.xlane.xlu0 %3129
        %vm3131 = vcmp.eq.f32.partialorder %v3128, %v3130
        %v3132 = vsel %vm3131, %v3127, inf
        %3133 = vmin.xlane.f32.xlu0 %v3132
        %v3134 = vpop.xlane.xlu0 %3133
        %v3135 = vcvt.f32.s32 %v3134
        %v3136 = vcvt.f32.s32 %v3130
        %v3137 = vshll.u32 %v3136, 16
        %v3138 = vadd.s32 %v3137, %v3135
        %vm3139 = vcmp.lt.s32.totalorder %v2739, %v2740
        %v3140 = vsel %vm3139, %v2739, %v2740
        %v3141 = vand.u32 %v3140, 65535
        %v3142 = vshra.s32 %v3140, 16
        %v3143 = vcvt.s32.f32 %v3141
        %v3144 = vcvt.s32.f32 %v3142
        %3145 = vmin.xlane.f32.xlu0 %v3144
        %v3146 = vpop.xlane.xlu0 %3145
        %vm3147 = vcmp.eq.f32.partialorder %v3144, %v3146
        %v3148 = vsel %vm3147, %v3143, inf
        %3149 = vmin.xlane.f32.xlu0 %v3148
        %v3150 = vpop.xlane.xlu0 %3149
        %v3151 = vcvt.f32.s32 %v3150
        %v3152 = vcvt.f32.s32 %v3146
        %v3153 = vshll.u32 %v3152, 16
        %v3154 = vadd.s32 %v3153, %v3151
        %vm3155 = vcmp.lt.s32.totalorder %v2741, %v2742
        %v3156 = vsel %vm3155, %v2741, %v2742
        %v3157 = vand.u32 %v3156, 65535
        %v3158 = vshra.s32 %v3156, 16
        %v3159 = vcvt.s32.f32 %v3157
        %v3160 = vcvt.s32.f32 %v3158
        %3161 = vmin.xlane.f32.xlu0 %v3160
        %v3162 = vpop.xlane.xlu0 %3161
        %vm3163 = vcmp.eq.f32.partialorder %v3160, %v3162
        %v3164 = vsel %vm3163, %v3159, inf
        %3165 = vmin.xlane.f32.xlu0 %v3164
        %v3166 = vpop.xlane.xlu0 %3165
        %v3167 = vcvt.f32.s32 %v3166
        %v3168 = vcvt.f32.s32 %v3162
        %v3169 = vshll.u32 %v3168, 16
        %v3170 = vadd.s32 %v3169, %v3167
        %vm3171 = vcmp.lt.s32.totalorder %v2743, %v2744
        %v3172 = vsel %vm3171, %v2743, %v2744
        %v3173 = vand.u32 %v3172, 65535
        %v3174 = vshra.s32 %v3172, 16
        %v3175 = vcvt.s32.f32 %v3173
        %v3176 = vcvt.s32.f32 %v3174
        %3177 = vmin.xlane.f32.xlu0 %v3176
        %v3178 = vpop.xlane.xlu0 %3177
        %vm3179 = vcmp.eq.f32.partialorder %v3176, %v3178
        %v3180 = vsel %vm3179, %v3175, inf
        %3181 = vmin.xlane.f32.xlu0 %v3180
        %v3182 = vpop.xlane.xlu0 %3181
        %v3183 = vcvt.f32.s32 %v3182
        %v3184 = vcvt.f32.s32 %v3178
        %v3185 = vshll.u32 %v3184, 16
        %v3186 = vadd.s32 %v3185, %v3183
        %vm3187 = vcmp.lt.s32.totalorder %v2745, %v2746
        %v3188 = vsel %vm3187, %v2745, %v2746
        %v3189 = vand.u32 %v3188, 65535
        %v3190 = vshra.s32 %v3188, 16
        %v3191 = vcvt.s32.f32 %v3189
        %v3192 = vcvt.s32.f32 %v3190
        %3193 = vmin.xlane.f32.xlu0 %v3192
        %v3194 = vpop.xlane.xlu0 %3193
        %vm3195 = vcmp.eq.f32.partialorder %v3192, %v3194
        %v3196 = vsel %vm3195, %v3191, inf
        %3197 = vmin.xlane.f32.xlu0 %v3196
        %v3198 = vpop.xlane.xlu0 %3197
        %v3199 = vcvt.f32.s32 %v3198
        %v3200 = vcvt.f32.s32 %v3194
        %v3201 = vshll.u32 %v3200, 16
        %v3202 = vadd.s32 %v3201, %v3199
        %vm3203 = vcmp.lt.s32.totalorder %v2747, %v2748
        %v3204 = vsel %vm3203, %v2747, %v2748
        %v3205 = vand.u32 %v3204, 65535
        %v3206 = vshra.s32 %v3204, 16
        %v3207 = vcvt.s32.f32 %v3205
        %v3208 = vcvt.s32.f32 %v3206
        %3209 = vmin.xlane.f32.xlu0 %v3208
        %v3210 = vpop.xlane.xlu0 %3209
        %vm3211 = vcmp.eq.f32.partialorder %v3208, %v3210
        %v3212 = vsel %vm3211, %v3207, inf
        %3213 = vmin.xlane.f32.xlu0 %v3212
        %v3214 = vpop.xlane.xlu0 %3213
        %v3215 = vcvt.f32.s32 %v3214
        %v3216 = vcvt.f32.s32 %v3210
        %v3217 = vshll.u32 %v3216, 16
        %v3218 = vadd.s32 %v3217, %v3215
        %vm3219 = vcmp.lt.s32.totalorder %v2749, %v2750
        %v3220 = vsel %vm3219, %v2749, %v2750
        %v3221 = vand.u32 %v3220, 65535
        %v3222 = vshra.s32 %v3220, 16
        %v3223 = vcvt.s32.f32 %v3221
        %v3224 = vcvt.s32.f32 %v3222
        %3225 = vmin.xlane.f32.xlu0 %v3224
        %v3226 = vpop.xlane.xlu0 %3225
        %vm3227 = vcmp.eq.f32.partialorder %v3224, %v3226
        %v3228 = vsel %vm3227, %v3223, inf
        %3229 = vmin.xlane.f32.xlu0 %v3228
        %v3230 = vpop.xlane.xlu0 %3229
        %v3231 = vcvt.f32.s32 %v3230
        %v3232 = vcvt.f32.s32 %v3226
        %v3233 = vshll.u32 %v3232, 16
        %v3234 = vadd.s32 %v3233, %v3231
        %vm3235 = vcmp.lt.s32.totalorder %v2751, %v2752
        %v3236 = vsel %vm3235, %v2751, %v2752
        %v3237 = vand.u32 %v3236, 65535
        %v3238 = vshra.s32 %v3236, 16
        %v3239 = vcvt.s32.f32 %v3237
        %v3240 = vcvt.s32.f32 %v3238
        %3241 = vmin.xlane.f32.xlu0 %v3240
        %v3242 = vpop.xlane.xlu0 %3241
        %vm3243 = vcmp.eq.f32.partialorder %v3240, %v3242
        %v3244 = vsel %vm3243, %v3239, inf
        %3245 = vmin.xlane.f32.xlu0 %v3244
        %v3246 = vpop.xlane.xlu0 %3245
        %v3247 = vcvt.f32.s32 %v3246
        %v3248 = vcvt.f32.s32 %v3242
        %v3249 = vshll.u32 %v3248, 16
        %v3250 = vadd.s32 %v3249, %v3247
        %vm3251 = vcmp.lt.s32.totalorder %v2753, %v2754
        %v3252 = vsel %vm3251, %v2753, %v2754
        %v3253 = vand.u32 %v3252, 65535
        %v3254 = vshra.s32 %v3252, 16
        %v3255 = vcvt.s32.f32 %v3253
        %v3256 = vcvt.s32.f32 %v3254
        %3257 = vmin.xlane.f32.xlu0 %v3256
        %v3258 = vpop.xlane.xlu0 %3257
        %vm3259 = vcmp.eq.f32.partialorder %v3256, %v3258
        %v3260 = vsel %vm3259, %v3255, inf
        %3261 = vmin.xlane.f32.xlu0 %v3260
        %v3262 = vpop.xlane.xlu0 %3261
        %v3263 = vcvt.f32.s32 %v3262
        %v3264 = vcvt.f32.s32 %v3258
        %v3265 = vshll.u32 %v3264, 16
        %v3266 = vadd.s32 %v3265, %v3263
        %vm3267 = vcmp.eq.s32.totalorder %v801, %v2770
        %vm3268 = vcmp.eq.s32.totalorder %v802, %v2770
        %vm3269 = vcmp.eq.s32.totalorder %v801, %v2786
        %vm3270 = vcmp.eq.s32.totalorder %v802, %v2786
        %vm3271 = vcmp.eq.s32.totalorder %v801, %v2802
        %vm3272 = vcmp.eq.s32.totalorder %v802, %v2802
        %vm3273 = vcmp.eq.s32.totalorder %v801, %v2818
        %vm3274 = vcmp.eq.s32.totalorder %v802, %v2818
        %vm3275 = vcmp.eq.s32.totalorder %v801, %v2834
        %vm3276 = vcmp.eq.s32.totalorder %v802, %v2834
        %vm3277 = vcmp.eq.s32.totalorder %v801, %v2850
        %vm3278 = vcmp.eq.s32.totalorder %v802, %v2850
        %vm3279 = vcmp.eq.s32.totalorder %v801, %v2866
        %vm3280 = vcmp.eq.s32.totalorder %v802, %v2866
        %vm3281 = vcmp.eq.s32.totalorder %v801, %v2882
        %vm3282 = vcmp.eq.s32.totalorder %v802, %v2882
        %vm3283 = vcmp.eq.s32.totalorder %v801, %v2898
        %vm3284 = vcmp.eq.s32.totalorder %v802, %v2898
        %vm3285 = vcmp.eq.s32.totalorder %v801, %v2914
        %vm3286 = vcmp.eq.s32.totalorder %v802, %v2914
        %vm3287 = vcmp.eq.s32.totalorder %v801, %v2930
        %vm3288 = vcmp.eq.s32.totalorder %v802, %v2930
        %vm3289 = vcmp.eq.s32.totalorder %v801, %v2946
        %vm3290 = vcmp.eq.s32.totalorder %v802, %v2946
        %vm3291 = vcmp.eq.s32.totalorder %v801, %v2962
        %vm3292 = vcmp.eq.s32.totalorder %v802, %v2962
        %vm3293 = vcmp.eq.s32.totalorder %v801, %v2978
        %vm3294 = vcmp.eq.s32.totalorder %v802, %v2978
        %vm3295 = vcmp.eq.s32.totalorder %v801, %v2994
        %vm3296 = vcmp.eq.s32.totalorder %v802, %v2994
        %vm3297 = vcmp.eq.s32.totalorder %v801, %v3010
        %vm3298 = vcmp.eq.s32.totalorder %v802, %v3010
        %vm3299 = vcmp.eq.s32.totalorder %v801, %v3026
        %vm3300 = vcmp.eq.s32.totalorder %v802, %v3026
        %vm3301 = vcmp.eq.s32.totalorder %v801, %v3042
        %vm3302 = vcmp.eq.s32.totalorder %v802, %v3042
        %vm3303 = vcmp.eq.s32.totalorder %v801, %v3058
        %vm3304 = vcmp.eq.s32.totalorder %v802, %v3058
        %vm3305 = vcmp.eq.s32.totalorder %v801, %v3074
        %vm3306 = vcmp.eq.s32.totalorder %v802, %v3074
        %vm3307 = vcmp.eq.s32.totalorder %v801, %v3090
        %vm3308 = vcmp.eq.s32.totalorder %v802, %v3090
        %vm3309 = vcmp.eq.s32.totalorder %v801, %v3106
        %vm3310 = vcmp.eq.s32.totalorder %v802, %v3106
        %vm3311 = vcmp.eq.s32.totalorder %v801, %v3122
        %vm3312 = vcmp.eq.s32.totalorder %v802, %v3122
        %vm3313 = vcmp.eq.s32.totalorder %v801, %v3138
        %vm3314 = vcmp.eq.s32.totalorder %v802, %v3138
        %vm3315 = vcmp.eq.s32.totalorder %v801, %v3154
        %vm3316 = vcmp.eq.s32.totalorder %v802, %v3154
        %vm3317 = vcmp.eq.s32.totalorder %v801, %v3170
        %vm3318 = vcmp.eq.s32.totalorder %v802, %v3170
        %vm3319 = vcmp.eq.s32.totalorder %v801, %v3186
        %vm3320 = vcmp.eq.s32.totalorder %v802, %v3186
        %vm3321 = vcmp.eq.s32.totalorder %v801, %v3202
        %vm3322 = vcmp.eq.s32.totalorder %v802, %v3202
        %vm3323 = vcmp.eq.s32.totalorder %v801, %v3218
        %vm3324 = vcmp.eq.s32.totalorder %v802, %v3218
        %vm3325 = vcmp.eq.s32.totalorder %v801, %v3234
        %vm3326 = vcmp.eq.s32.totalorder %v802, %v3234
        %vm3327 = vcmp.eq.s32.totalorder %v801, %v3250
        %vm3328 = vcmp.eq.s32.totalorder %v802, %v3250
        %vm3329 = vcmp.eq.s32.totalorder %v801, %v3266
        %vm3330 = vcmp.eq.s32.totalorder %v802, %v3266
        %v3331 = vsel %vm3267, -3.4028235e+38, %v2467
        %v3332 = vsel %vm3268, -3.4028235e+38, %v2468
        %v3333 = vsel %vm3269, -3.4028235e+38, %v2469
        %v3334 = vsel %vm3270, -3.4028235e+38, %v2470
        %v3335 = vsel %vm3271, -3.4028235e+38, %v2471
        %v3336 = vsel %vm3272, -3.4028235e+38, %v2472
        %v3337 = vsel %vm3273, -3.4028235e+38, %v2473
        %v3338 = vsel %vm3274, -3.4028235e+38, %v2474
        %v3339 = vsel %vm3275, -3.4028235e+38, %v2475
        %v3340 = vsel %vm3276, -3.4028235e+38, %v2476
        %v3341 = vsel %vm3277, -3.4028235e+38, %v2477
        %v3342 = vsel %vm3278, -3.4028235e+38, %v2478
        %v3343 = vsel %vm3279, -3.4028235e+38, %v2479
        %v3344 = vsel %vm3280, -3.4028235e+38, %v2480
        %v3345 = vsel %vm3281, -3.4028235e+38, %v2481
        %v3346 = vsel %vm3282, -3.4028235e+38, %v2482
        %v3347 = vsel %vm3283, -3.4028235e+38, %v2483
        %v3348 = vsel %vm3284, -3.4028235e+38, %v2484
        %v3349 = vsel %vm3285, -3.4028235e+38, %v2485
        %v3350 = vsel %vm3286, -3.4028235e+38, %v2486
        %v3351 = vsel %vm3287, -3.4028235e+38, %v2487
        %v3352 = vsel %vm3288, -3.4028235e+38, %v2488
        %v3353 = vsel %vm3289, -3.4028235e+38, %v2489
        %v3354 = vsel %vm3290, -3.4028235e+38, %v2490
        %v3355 = vsel %vm3291, -3.4028235e+38, %v2491
        %v3356 = vsel %vm3292, -3.4028235e+38, %v2492
        %v3357 = vsel %vm3293, -3.4028235e+38, %v2493
        %v3358 = vsel %vm3294, -3.4028235e+38, %v2494
        %v3359 = vsel %vm3295, -3.4028235e+38, %v2495
        %v3360 = vsel %vm3296, -3.4028235e+38, %v2496
        %v3361 = vsel %vm3297, -3.4028235e+38, %v2497
        %v3362 = vsel %vm3298, -3.4028235e+38, %v2498
        %v3363 = vsel %vm3299, -3.4028235e+38, %v2499
        %v3364 = vsel %vm3300, -3.4028235e+38, %v2500
        %v3365 = vsel %vm3301, -3.4028235e+38, %v2501
        %v3366 = vsel %vm3302, -3.4028235e+38, %v2502
        %v3367 = vsel %vm3303, -3.4028235e+38, %v2503
        %v3368 = vsel %vm3304, -3.4028235e+38, %v2504
        %v3369 = vsel %vm3305, -3.4028235e+38, %v2505
        %v3370 = vsel %vm3306, -3.4028235e+38, %v2506
        %v3371 = vsel %vm3307, -3.4028235e+38, %v2507
        %v3372 = vsel %vm3308, -3.4028235e+38, %v2508
        %v3373 = vsel %vm3309, -3.4028235e+38, %v2509
        %v3374 = vsel %vm3310, -3.4028235e+38, %v2510
        %v3375 = vsel %vm3311, -3.4028235e+38, %v2511
        %v3376 = vsel %vm3312, -3.4028235e+38, %v2512
        %v3377 = vsel %vm3313, -3.4028235e+38, %v2513
        %v3378 = vsel %vm3314, -3.4028235e+38, %v2514
        %v3379 = vsel %vm3315, -3.4028235e+38, %v2515
        %v3380 = vsel %vm3316, -3.4028235e+38, %v2516
        %v3381 = vsel %vm3317, -3.4028235e+38, %v2517
        %v3382 = vsel %vm3318, -3.4028235e+38, %v2518
        %v3383 = vsel %vm3319, -3.4028235e+38, %v2519
        %v3384 = vsel %vm3320, -3.4028235e+38, %v2520
        %v3385 = vsel %vm3321, -3.4028235e+38, %v2521
        %v3386 = vsel %vm3322, -3.4028235e+38, %v2522
        %v3387 = vsel %vm3323, -3.4028235e+38, %v2523
        %v3388 = vsel %vm3324, -3.4028235e+38, %v2524
        %v3389 = vsel %vm3325, -3.4028235e+38, %v2525
        %v3390 = vsel %vm3326, -3.4028235e+38, %v2526
        %v3391 = vsel %vm3327, -3.4028235e+38, %v2527
        %v3392 = vsel %vm3328, -3.4028235e+38, %v2528
        %v3393 = vsel %vm3329, -3.4028235e+38, %v2529
        %v3394 = vsel %vm3330, -3.4028235e+38, %v2530
        %v3395 = vmax.f32 %v3331, %v3332
        %3396 = vmax.xlane.f32.xlu0 %v3395
        %v3397 = vpop.xlane.xlu0 %3396
        %v3398 = vmax.f32 %v3333, %v3334
        %3399 = vmax.xlane.f32.xlu0 %v3398
        %v3400 = vpop.xlane.xlu0 %3399
        %v3401 = vmax.f32 %v3335, %v3336
        %3402 = vmax.xlane.f32.xlu0 %v3401
        %v3403 = vpop.xlane.xlu0 %3402
        %v3404 = vmax.f32 %v3337, %v3338
        %3405 = vmax.xlane.f32.xlu0 %v3404
        %v3406 = vpop.xlane.xlu0 %3405
        %v3407 = vmax.f32 %v3339, %v3340
        %3408 = vmax.xlane.f32.xlu0 %v3407
        %v3409 = vpop.xlane.xlu0 %3408
        %v3410 = vmax.f32 %v3341, %v3342
        %3411 = vmax.xlane.f32.xlu0 %v3410
        %v3412 = vpop.xlane.xlu0 %3411
        %v3413 = vmax.f32 %v3343, %v3344
        %3414 = vmax.xlane.f32.xlu0 %v3413
        %v3415 = vpop.xlane.xlu0 %3414
        %v3416 = vmax.f32 %v3345, %v3346
        %3417 = vmax.xlane.f32.xlu0 %v3416
        %v3418 = vpop.xlane.xlu0 %3417
        %v3419 = vmax.f32 %v3347, %v3348
        %3420 = vmax.xlane.f32.xlu0 %v3419
        %v3421 = vpop.xlane.xlu0 %3420
        %v3422 = vmax.f32 %v3349, %v3350
        %3423 = vmax.xlane.f32.xlu0 %v3422
        %v3424 = vpop.xlane.xlu0 %3423
        %v3425 = vmax.f32 %v3351, %v3352
        %3426 = vmax.xlane.f32.xlu0 %v3425
        %v3427 = vpop.xlane.xlu0 %3426
        %v3428 = vmax.f32 %v3353, %v3354
        %3429 = vmax.xlane.f32.xlu0 %v3428
        %v3430 = vpop.xlane.xlu0 %3429
        %v3431 = vmax.f32 %v3355, %v3356
        %3432 = vmax.xlane.f32.xlu0 %v3431
        %v3433 = vpop.xlane.xlu0 %3432
        %v3434 = vmax.f32 %v3357, %v3358
        %3435 = vmax.xlane.f32.xlu0 %v3434
        %v3436 = vpop.xlane.xlu0 %3435
        %v3437 = vmax.f32 %v3359, %v3360
        %3438 = vmax.xlane.f32.xlu0 %v3437
        %v3439 = vpop.xlane.xlu0 %3438
        %v3440 = vmax.f32 %v3361, %v3362
        %3441 = vmax.xlane.f32.xlu0 %v3440
        %v3442 = vpop.xlane.xlu0 %3441
        %v3443 = vmax.f32 %v3363, %v3364
        %3444 = vmax.xlane.f32.xlu0 %v3443
        %v3445 = vpop.xlane.xlu0 %3444
        %v3446 = vmax.f32 %v3365, %v3366
        %3447 = vmax.xlane.f32.xlu0 %v3446
        %v3448 = vpop.xlane.xlu0 %3447
        %v3449 = vmax.f32 %v3367, %v3368
        %3450 = vmax.xlane.f32.xlu0 %v3449
        %v3451 = vpop.xlane.xlu0 %3450
        %v3452 = vmax.f32 %v3369, %v3370
        %3453 = vmax.xlane.f32.xlu0 %v3452
        %v3454 = vpop.xlane.xlu0 %3453
        %v3455 = vmax.f32 %v3371, %v3372
        %3456 = vmax.xlane.f32.xlu0 %v3455
        %v3457 = vpop.xlane.xlu0 %3456
        %v3458 = vmax.f32 %v3373, %v3374
        %3459 = vmax.xlane.f32.xlu0 %v3458
        %v3460 = vpop.xlane.xlu0 %3459
        %v3461 = vmax.f32 %v3375, %v3376
        %3462 = vmax.xlane.f32.xlu0 %v3461
        %v3463 = vpop.xlane.xlu0 %3462
        %v3464 = vmax.f32 %v3377, %v3378
        %3465 = vmax.xlane.f32.xlu0 %v3464
        %v3466 = vpop.xlane.xlu0 %3465
        %v3467 = vmax.f32 %v3379, %v3380
        %3468 = vmax.xlane.f32.xlu0 %v3467
        %v3469 = vpop.xlane.xlu0 %3468
        %v3470 = vmax.f32 %v3381, %v3382
        %3471 = vmax.xlane.f32.xlu0 %v3470
        %v3472 = vpop.xlane.xlu0 %3471
        %v3473 = vmax.f32 %v3383, %v3384
        %3474 = vmax.xlane.f32.xlu0 %v3473
        %v3475 = vpop.xlane.xlu0 %3474
        %v3476 = vmax.f32 %v3385, %v3386
        %3477 = vmax.xlane.f32.xlu0 %v3476
        %v3478 = vpop.xlane.xlu0 %3477
        %v3479 = vmax.f32 %v3387, %v3388
        %3480 = vmax.xlane.f32.xlu0 %v3479
        %v3481 = vpop.xlane.xlu0 %3480
        %v3482 = vmax.f32 %v3389, %v3390
        %3483 = vmax.xlane.f32.xlu0 %v3482
        %v3484 = vpop.xlane.xlu0 %3483
        %v3485 = vmax.f32 %v3391, %v3392
        %3486 = vmax.xlane.f32.xlu0 %v3485
        %v3487 = vpop.xlane.xlu0 %3486
        %v3488 = vmax.f32 %v3393, %v3394
        %3489 = vmax.xlane.f32.xlu0 %v3488
        %v3490 = vpop.xlane.xlu0 %3489
        %vm3491 = vcmp.eq.f32.partialorder %v3331, %v3397
        %vm3492 = vcmp.eq.f32.partialorder %v3332, %v3397
        %vm3493 = vcmp.eq.f32.partialorder %v3333, %v3400
        %vm3494 = vcmp.eq.f32.partialorder %v3334, %v3400
        %vm3495 = vcmp.eq.f32.partialorder %v3335, %v3403
        %vm3496 = vcmp.eq.f32.partialorder %v3336, %v3403
        %vm3497 = vcmp.eq.f32.partialorder %v3337, %v3406
        %vm3498 = vcmp.eq.f32.partialorder %v3338, %v3406
        %vm3499 = vcmp.eq.f32.partialorder %v3339, %v3409
        %vm3500 = vcmp.eq.f32.partialorder %v3340, %v3409
        %vm3501 = vcmp.eq.f32.partialorder %v3341, %v3412
        %vm3502 = vcmp.eq.f32.partialorder %v3342, %v3412
        %vm3503 = vcmp.eq.f32.partialorder %v3343, %v3415
        %vm3504 = vcmp.eq.f32.partialorder %v3344, %v3415
        %vm3505 = vcmp.eq.f32.partialorder %v3345, %v3418
        %vm3506 = vcmp.eq.f32.partialorder %v3346, %v3418
        %vm3507 = vcmp.eq.f32.partialorder %v3347, %v3421
        %vm3508 = vcmp.eq.f32.partialorder %v3348, %v3421
        %vm3509 = vcmp.eq.f32.partialorder %v3349, %v3424
        %vm3510 = vcmp.eq.f32.partialorder %v3350, %v3424
        %vm3511 = vcmp.eq.f32.partialorder %v3351, %v3427
        %vm3512 = vcmp.eq.f32.partialorder %v3352, %v3427
        %vm3513 = vcmp.eq.f32.partialorder %v3353, %v3430
        %vm3514 = vcmp.eq.f32.partialorder %v3354, %v3430
        %vm3515 = vcmp.eq.f32.partialorder %v3355, %v3433
        %vm3516 = vcmp.eq.f32.partialorder %v3356, %v3433
        %vm3517 = vcmp.eq.f32.partialorder %v3357, %v3436
        %vm3518 = vcmp.eq.f32.partialorder %v3358, %v3436
        %vm3519 = vcmp.eq.f32.partialorder %v3359, %v3439
        %vm3520 = vcmp.eq.f32.partialorder %v3360, %v3439
        %vm3521 = vcmp.eq.f32.partialorder %v3361, %v3442
        %vm3522 = vcmp.eq.f32.partialorder %v3362, %v3442
        %vm3523 = vcmp.eq.f32.partialorder %v3363, %v3445
        %vm3524 = vcmp.eq.f32.partialorder %v3364, %v3445
        %vm3525 = vcmp.eq.f32.partialorder %v3365, %v3448
        %vm3526 = vcmp.eq.f32.partialorder %v3366, %v3448
        %vm3527 = vcmp.eq.f32.partialorder %v3367, %v3451
        %vm3528 = vcmp.eq.f32.partialorder %v3368, %v3451
        %vm3529 = vcmp.eq.f32.partialorder %v3369, %v3454
        %vm3530 = vcmp.eq.f32.partialorder %v3370, %v3454
        %vm3531 = vcmp.eq.f32.partialorder %v3371, %v3457
        %vm3532 = vcmp.eq.f32.partialorder %v3372, %v3457
        %vm3533 = vcmp.eq.f32.partialorder %v3373, %v3460
        %vm3534 = vcmp.eq.f32.partialorder %v3374, %v3460
        %vm3535 = vcmp.eq.f32.partialorder %v3375, %v3463
        %vm3536 = vcmp.eq.f32.partialorder %v3376, %v3463
        %vm3537 = vcmp.eq.f32.partialorder %v3377, %v3466
        %vm3538 = vcmp.eq.f32.partialorder %v3378, %v3466
        %vm3539 = vcmp.eq.f32.partialorder %v3379, %v3469
        %vm3540 = vcmp.eq.f32.partialorder %v3380, %v3469
        %vm3541 = vcmp.eq.f32.partialorder %v3381, %v3472
        %vm3542 = vcmp.eq.f32.partialorder %v3382, %v3472
        %vm3543 = vcmp.eq.f32.partialorder %v3383, %v3475
        %vm3544 = vcmp.eq.f32.partialorder %v3384, %v3475
        %vm3545 = vcmp.eq.f32.partialorder %v3385, %v3478
        %vm3546 = vcmp.eq.f32.partialorder %v3386, %v3478
        %vm3547 = vcmp.eq.f32.partialorder %v3387, %v3481
        %vm3548 = vcmp.eq.f32.partialorder %v3388, %v3481
        %vm3549 = vcmp.eq.f32.partialorder %v3389, %v3484
        %vm3550 = vcmp.eq.f32.partialorder %v3390, %v3484
        %vm3551 = vcmp.eq.f32.partialorder %v3391, %v3487
        %vm3552 = vcmp.eq.f32.partialorder %v3392, %v3487
        %vm3553 = vcmp.eq.f32.partialorder %v3393, %v3490
        %vm3554 = vcmp.eq.f32.partialorder %v3394, %v3490
        %v3555 = vsel %vm3491, %v801, 256
        %v3556 = vsel %vm3492, %v802, 256
        %v3557 = vsel %vm3493, %v801, 256
        %v3558 = vsel %vm3494, %v802, 256
        %v3559 = vsel %vm3495, %v801, 256
        %v3560 = vsel %vm3496, %v802, 256
        %v3561 = vsel %vm3497, %v801, 256
        %v3562 = vsel %vm3498, %v802, 256
        %v3563 = vsel %vm3499, %v801, 256
        %v3564 = vsel %vm3500, %v802, 256
        %v3565 = vsel %vm3501, %v801, 256
        %v3566 = vsel %vm3502, %v802, 256
        %v3567 = vsel %vm3503, %v801, 256
        %v3568 = vsel %vm3504, %v802, 256
        %v3569 = vsel %vm3505, %v801, 256
        %v3570 = vsel %vm3506, %v802, 256
        %v3571 = vsel %vm3507, %v801, 256
        %v3572 = vsel %vm3508, %v802, 256
        %v3573 = vsel %vm3509, %v801, 256
        %v3574 = vsel %vm3510, %v802, 256
        %v3575 = vsel %vm3511, %v801, 256
        %v3576 = vsel %vm3512, %v802, 256
        %v3577 = vsel %vm3513, %v801, 256
        %v3578 = vsel %vm3514, %v802, 256
        %v3579 = vsel %vm3515, %v801, 256
        %v3580 = vsel %vm3516, %v802, 256
        %v3581 = vsel %vm3517, %v801, 256
        %v3582 = vsel %vm3518, %v802, 256
        %v3583 = vsel %vm3519, %v801, 256
        %v3584 = vsel %vm3520, %v802, 256
        %v3585 = vsel %vm3521, %v801, 256
        %v3586 = vsel %vm3522, %v802, 256
        %v3587 = vsel %vm3523, %v801, 256
        %v3588 = vsel %vm3524, %v802, 256
        %v3589 = vsel %vm3525, %v801, 256
        %v3590 = vsel %vm3526, %v802, 256
        %v3591 = vsel %vm3527, %v801, 256
        %v3592 = vsel %vm3528, %v802, 256
        %v3593 = vsel %vm3529, %v801, 256
        %v3594 = vsel %vm3530, %v802, 256
        %v3595 = vsel %vm3531, %v801, 256
        %v3596 = vsel %vm3532, %v802, 256
        %v3597 = vsel %vm3533, %v801, 256
        %v3598 = vsel %vm3534, %v802, 256
        %v3599 = vsel %vm3535, %v801, 256
        %v3600 = vsel %vm3536, %v802, 256
        %v3601 = vsel %vm3537, %v801, 256
        %v3602 = vsel %vm3538, %v802, 256
        %v3603 = vsel %vm3539, %v801, 256
        %v3604 = vsel %vm3540, %v802, 256
        %v3605 = vsel %vm3541, %v801, 256
        %v3606 = vsel %vm3542, %v802, 256
        %v3607 = vsel %vm3543, %v801, 256
        %v3608 = vsel %vm3544, %v802, 256
        %v3609 = vsel %vm3545, %v801, 256
        %v3610 = vsel %vm3546, %v802, 256
        %v3611 = vsel %vm3547, %v801, 256
        %v3612 = vsel %vm3548, %v802, 256
        %v3613 = vsel %vm3549, %v801, 256
        %v3614 = vsel %vm3550, %v802, 256
        %v3615 = vsel %vm3551, %v801, 256
        %v3616 = vsel %vm3552, %v802, 256
        %v3617 = vsel %vm3553, %v801, 256
        %v3618 = vsel %vm3554, %v802, 256
        %vm3619 = vcmp.lt.s32.totalorder %v3555, %v3556
        %v3620 = vsel %vm3619, %v3555, %v3556
        %v3621 = vand.u32 %v3620, 65535
        %v3622 = vshra.s32 %v3620, 16
        %v3623 = vcvt.s32.f32 %v3621
        %v3624 = vcvt.s32.f32 %v3622
        %3625 = vmin.xlane.f32.xlu0 %v3624
        %v3626 = vpop.xlane.xlu0 %3625
        %vm3627 = vcmp.eq.f32.partialorder %v3624, %v3626
        %v3628 = vsel %vm3627, %v3623, inf
        %3629 = vmin.xlane.f32.xlu0 %v3628
        %v3630 = vpop.xlane.xlu0 %3629
        %v3631 = vcvt.f32.s32 %v3630
        %v3632 = vcvt.f32.s32 %v3626
        %v3633 = vshll.u32 %v3632, 16
        %v3634 = vadd.s32 %v3633, %v3631
        %vm3635 = vcmp.lt.s32.totalorder %v3557, %v3558
        %v3636 = vsel %vm3635, %v3557, %v3558
        %v3637 = vand.u32 %v3636, 65535
        %v3638 = vshra.s32 %v3636, 16
        %v3639 = vcvt.s32.f32 %v3637
        %v3640 = vcvt.s32.f32 %v3638
        %3641 = vmin.xlane.f32.xlu0 %v3640
        %v3642 = vpop.xlane.xlu0 %3641
        %vm3643 = vcmp.eq.f32.partialorder %v3640, %v3642
        %v3644 = vsel %vm3643, %v3639, inf
        %3645 = vmin.xlane.f32.xlu0 %v3644
        %v3646 = vpop.xlane.xlu0 %3645
        %v3647 = vcvt.f32.s32 %v3646
        %v3648 = vcvt.f32.s32 %v3642
        %v3649 = vshll.u32 %v3648, 16
        %v3650 = vadd.s32 %v3649, %v3647
        %vm3651 = vcmp.lt.s32.totalorder %v3559, %v3560
        %v3652 = vsel %vm3651, %v3559, %v3560
        %v3653 = vand.u32 %v3652, 65535
        %v3654 = vshra.s32 %v3652, 16
        %v3655 = vcvt.s32.f32 %v3653
        %v3656 = vcvt.s32.f32 %v3654
        %3657 = vmin.xlane.f32.xlu0 %v3656
        %v3658 = vpop.xlane.xlu0 %3657
        %vm3659 = vcmp.eq.f32.partialorder %v3656, %v3658
        %v3660 = vsel %vm3659, %v3655, inf
        %3661 = vmin.xlane.f32.xlu0 %v3660
        %v3662 = vpop.xlane.xlu0 %3661
        %v3663 = vcvt.f32.s32 %v3662
        %v3664 = vcvt.f32.s32 %v3658
        %v3665 = vshll.u32 %v3664, 16
        %v3666 = vadd.s32 %v3665, %v3663
        %vm3667 = vcmp.lt.s32.totalorder %v3561, %v3562
        %v3668 = vsel %vm3667, %v3561, %v3562
        %v3669 = vand.u32 %v3668, 65535
        %v3670 = vshra.s32 %v3668, 16
        %v3671 = vcvt.s32.f32 %v3669
        %v3672 = vcvt.s32.f32 %v3670
        %3673 = vmin.xlane.f32.xlu0 %v3672
        %v3674 = vpop.xlane.xlu0 %3673
        %vm3675 = vcmp.eq.f32.partialorder %v3672, %v3674
        %v3676 = vsel %vm3675, %v3671, inf
        %3677 = vmin.xlane.f32.xlu0 %v3676
        %v3678 = vpop.xlane.xlu0 %3677
        %v3679 = vcvt.f32.s32 %v3678
        %v3680 = vcvt.f32.s32 %v3674
        %v3681 = vshll.u32 %v3680, 16
        %v3682 = vadd.s32 %v3681, %v3679
        %vm3683 = vcmp.lt.s32.totalorder %v3563, %v3564
        %v3684 = vsel %vm3683, %v3563, %v3564
        %v3685 = vand.u32 %v3684, 65535
        %v3686 = vshra.s32 %v3684, 16
        %v3687 = vcvt.s32.f32 %v3685
        %v3688 = vcvt.s32.f32 %v3686
        %3689 = vmin.xlane.f32.xlu0 %v3688
        %v3690 = vpop.xlane.xlu0 %3689
        %vm3691 = vcmp.eq.f32.partialorder %v3688, %v3690
        %v3692 = vsel %vm3691, %v3687, inf
        %3693 = vmin.xlane.f32.xlu0 %v3692
        %v3694 = vpop.xlane.xlu0 %3693
        %v3695 = vcvt.f32.s32 %v3694
        %v3696 = vcvt.f32.s32 %v3690
        %v3697 = vshll.u32 %v3696, 16
        %v3698 = vadd.s32 %v3697, %v3695
        %vm3699 = vcmp.lt.s32.totalorder %v3565, %v3566
        %v3700 = vsel %vm3699, %v3565, %v3566
        %v3701 = vand.u32 %v3700, 65535
        %v3702 = vshra.s32 %v3700, 16
        %v3703 = vcvt.s32.f32 %v3701
        %v3704 = vcvt.s32.f32 %v3702
        %3705 = vmin.xlane.f32.xlu0 %v3704
        %v3706 = vpop.xlane.xlu0 %3705
        %vm3707 = vcmp.eq.f32.partialorder %v3704, %v3706
        %v3708 = vsel %vm3707, %v3703, inf
        %3709 = vmin.xlane.f32.xlu0 %v3708
        %v3710 = vpop.xlane.xlu0 %3709
        %v3711 = vcvt.f32.s32 %v3710
        %v3712 = vcvt.f32.s32 %v3706
        %v3713 = vshll.u32 %v3712, 16
        %v3714 = vadd.s32 %v3713, %v3711
        %vm3715 = vcmp.lt.s32.totalorder %v3567, %v3568
        %v3716 = vsel %vm3715, %v3567, %v3568
        %v3717 = vand.u32 %v3716, 65535
        %v3718 = vshra.s32 %v3716, 16
        %v3719 = vcvt.s32.f32 %v3717
        %v3720 = vcvt.s32.f32 %v3718
        %3721 = vmin.xlane.f32.xlu0 %v3720
        %v3722 = vpop.xlane.xlu0 %3721
        %vm3723 = vcmp.eq.f32.partialorder %v3720, %v3722
        %v3724 = vsel %vm3723, %v3719, inf
        %3725 = vmin.xlane.f32.xlu0 %v3724
        %v3726 = vpop.xlane.xlu0 %3725
        %v3727 = vcvt.f32.s32 %v3726
        %v3728 = vcvt.f32.s32 %v3722
        %v3729 = vshll.u32 %v3728, 16
        %v3730 = vadd.s32 %v3729, %v3727
        %vm3731 = vcmp.lt.s32.totalorder %v3569, %v3570
        %v3732 = vsel %vm3731, %v3569, %v3570
        %v3733 = vand.u32 %v3732, 65535
        %v3734 = vshra.s32 %v3732, 16
        %v3735 = vcvt.s32.f32 %v3733
        %v3736 = vcvt.s32.f32 %v3734
        %3737 = vmin.xlane.f32.xlu0 %v3736
        %v3738 = vpop.xlane.xlu0 %3737
        %vm3739 = vcmp.eq.f32.partialorder %v3736, %v3738
        %v3740 = vsel %vm3739, %v3735, inf
        %3741 = vmin.xlane.f32.xlu0 %v3740
        %v3742 = vpop.xlane.xlu0 %3741
        %v3743 = vcvt.f32.s32 %v3742
        %v3744 = vcvt.f32.s32 %v3738
        %v3745 = vshll.u32 %v3744, 16
        %v3746 = vadd.s32 %v3745, %v3743
        %vm3747 = vcmp.lt.s32.totalorder %v3571, %v3572
        %v3748 = vsel %vm3747, %v3571, %v3572
        %v3749 = vand.u32 %v3748, 65535
        %v3750 = vshra.s32 %v3748, 16
        %v3751 = vcvt.s32.f32 %v3749
        %v3752 = vcvt.s32.f32 %v3750
        %3753 = vmin.xlane.f32.xlu0 %v3752
        %v3754 = vpop.xlane.xlu0 %3753
        %vm3755 = vcmp.eq.f32.partialorder %v3752, %v3754
        %v3756 = vsel %vm3755, %v3751, inf
        %3757 = vmin.xlane.f32.xlu0 %v3756
        %v3758 = vpop.xlane.xlu0 %3757
        %v3759 = vcvt.f32.s32 %v3758
        %v3760 = vcvt.f32.s32 %v3754
        %v3761 = vshll.u32 %v3760, 16
        %v3762 = vadd.s32 %v3761, %v3759
        %vm3763 = vcmp.lt.s32.totalorder %v3573, %v3574
        %v3764 = vsel %vm3763, %v3573, %v3574
        %v3765 = vand.u32 %v3764, 65535
        %v3766 = vshra.s32 %v3764, 16
        %v3767 = vcvt.s32.f32 %v3765
        %v3768 = vcvt.s32.f32 %v3766
        %3769 = vmin.xlane.f32.xlu0 %v3768
        %v3770 = vpop.xlane.xlu0 %3769
        %vm3771 = vcmp.eq.f32.partialorder %v3768, %v3770
        %v3772 = vsel %vm3771, %v3767, inf
        %3773 = vmin.xlane.f32.xlu0 %v3772
        %v3774 = vpop.xlane.xlu0 %3773
        %v3775 = vcvt.f32.s32 %v3774
        %v3776 = vcvt.f32.s32 %v3770
        %v3777 = vshll.u32 %v3776, 16
        %v3778 = vadd.s32 %v3777, %v3775
        %vm3779 = vcmp.lt.s32.totalorder %v3575, %v3576
        %v3780 = vsel %vm3779, %v3575, %v3576
        %v3781 = vand.u32 %v3780, 65535
        %v3782 = vshra.s32 %v3780, 16
        %v3783 = vcvt.s32.f32 %v3781
        %v3784 = vcvt.s32.f32 %v3782
        %3785 = vmin.xlane.f32.xlu0 %v3784
        %v3786 = vpop.xlane.xlu0 %3785
        %vm3787 = vcmp.eq.f32.partialorder %v3784, %v3786
        %v3788 = vsel %vm3787, %v3783, inf
        %3789 = vmin.xlane.f32.xlu0 %v3788
        %v3790 = vpop.xlane.xlu0 %3789
        %v3791 = vcvt.f32.s32 %v3790
        %v3792 = vcvt.f32.s32 %v3786
        %v3793 = vshll.u32 %v3792, 16
        %v3794 = vadd.s32 %v3793, %v3791
        %vm3795 = vcmp.lt.s32.totalorder %v3577, %v3578
        %v3796 = vsel %vm3795, %v3577, %v3578
        %v3797 = vand.u32 %v3796, 65535
        %v3798 = vshra.s32 %v3796, 16
        %v3799 = vcvt.s32.f32 %v3797
        %v3800 = vcvt.s32.f32 %v3798
        %3801 = vmin.xlane.f32.xlu0 %v3800
        %v3802 = vpop.xlane.xlu0 %3801
        %vm3803 = vcmp.eq.f32.partialorder %v3800, %v3802
        %v3804 = vsel %vm3803, %v3799, inf
        %3805 = vmin.xlane.f32.xlu0 %v3804
        %v3806 = vpop.xlane.xlu0 %3805
        %v3807 = vcvt.f32.s32 %v3806
        %v3808 = vcvt.f32.s32 %v3802
        %v3809 = vshll.u32 %v3808, 16
        %v3810 = vadd.s32 %v3809, %v3807
        %vm3811 = vcmp.lt.s32.totalorder %v3579, %v3580
        %v3812 = vsel %vm3811, %v3579, %v3580
        %v3813 = vand.u32 %v3812, 65535
        %v3814 = vshra.s32 %v3812, 16
        %v3815 = vcvt.s32.f32 %v3813
        %v3816 = vcvt.s32.f32 %v3814
        %3817 = vmin.xlane.f32.xlu0 %v3816
        %v3818 = vpop.xlane.xlu0 %3817
        %vm3819 = vcmp.eq.f32.partialorder %v3816, %v3818
        %v3820 = vsel %vm3819, %v3815, inf
        %3821 = vmin.xlane.f32.xlu0 %v3820
        %v3822 = vpop.xlane.xlu0 %3821
        %v3823 = vcvt.f32.s32 %v3822
        %v3824 = vcvt.f32.s32 %v3818
        %v3825 = vshll.u32 %v3824, 16
        %v3826 = vadd.s32 %v3825, %v3823
        %vm3827 = vcmp.lt.s32.totalorder %v3581, %v3582
        %v3828 = vsel %vm3827, %v3581, %v3582
        %v3829 = vand.u32 %v3828, 65535
        %v3830 = vshra.s32 %v3828, 16
        %v3831 = vcvt.s32.f32 %v3829
        %v3832 = vcvt.s32.f32 %v3830
        %3833 = vmin.xlane.f32.xlu0 %v3832
        %v3834 = vpop.xlane.xlu0 %3833
        %vm3835 = vcmp.eq.f32.partialorder %v3832, %v3834
        %v3836 = vsel %vm3835, %v3831, inf
        %3837 = vmin.xlane.f32.xlu0 %v3836
        %v3838 = vpop.xlane.xlu0 %3837
        %v3839 = vcvt.f32.s32 %v3838
        %v3840 = vcvt.f32.s32 %v3834
        %v3841 = vshll.u32 %v3840, 16
        %v3842 = vadd.s32 %v3841, %v3839
        %vm3843 = vcmp.lt.s32.totalorder %v3583, %v3584
        %v3844 = vsel %vm3843, %v3583, %v3584
        %v3845 = vand.u32 %v3844, 65535
        %v3846 = vshra.s32 %v3844, 16
        %v3847 = vcvt.s32.f32 %v3845
        %v3848 = vcvt.s32.f32 %v3846
        %3849 = vmin.xlane.f32.xlu0 %v3848
        %v3850 = vpop.xlane.xlu0 %3849
        %vm3851 = vcmp.eq.f32.partialorder %v3848, %v3850
        %v3852 = vsel %vm3851, %v3847, inf
        %3853 = vmin.xlane.f32.xlu0 %v3852
        %v3854 = vpop.xlane.xlu0 %3853
        %v3855 = vcvt.f32.s32 %v3854
        %v3856 = vcvt.f32.s32 %v3850
        %v3857 = vshll.u32 %v3856, 16
        %v3858 = vadd.s32 %v3857, %v3855
        %vm3859 = vcmp.lt.s32.totalorder %v3585, %v3586
        %v3860 = vsel %vm3859, %v3585, %v3586
        %v3861 = vand.u32 %v3860, 65535
        %v3862 = vshra.s32 %v3860, 16
        %v3863 = vcvt.s32.f32 %v3861
        %v3864 = vcvt.s32.f32 %v3862
        %3865 = vmin.xlane.f32.xlu0 %v3864
        %v3866 = vpop.xlane.xlu0 %3865
        %vm3867 = vcmp.eq.f32.partialorder %v3864, %v3866
        %v3868 = vsel %vm3867, %v3863, inf
        %3869 = vmin.xlane.f32.xlu0 %v3868
        %v3870 = vpop.xlane.xlu0 %3869
        %v3871 = vcvt.f32.s32 %v3870
        %v3872 = vcvt.f32.s32 %v3866
        %v3873 = vshll.u32 %v3872, 16
        %v3874 = vadd.s32 %v3873, %v3871
        %vm3875 = vcmp.lt.s32.totalorder %v3587, %v3588
        %v3876 = vsel %vm3875, %v3587, %v3588
        %v3877 = vand.u32 %v3876, 65535
        %v3878 = vshra.s32 %v3876, 16
        %v3879 = vcvt.s32.f32 %v3877
        %v3880 = vcvt.s32.f32 %v3878
        %3881 = vmin.xlane.f32.xlu0 %v3880
        %v3882 = vpop.xlane.xlu0 %3881
        %vm3883 = vcmp.eq.f32.partialorder %v3880, %v3882
        %v3884 = vsel %vm3883, %v3879, inf
        %3885 = vmin.xlane.f32.xlu0 %v3884
        %v3886 = vpop.xlane.xlu0 %3885
        %v3887 = vcvt.f32.s32 %v3886
        %v3888 = vcvt.f32.s32 %v3882
        %v3889 = vshll.u32 %v3888, 16
        %v3890 = vadd.s32 %v3889, %v3887
        %vm3891 = vcmp.lt.s32.totalorder %v3589, %v3590
        %v3892 = vsel %vm3891, %v3589, %v3590
        %v3893 = vand.u32 %v3892, 65535
        %v3894 = vshra.s32 %v3892, 16
        %v3895 = vcvt.s32.f32 %v3893
        %v3896 = vcvt.s32.f32 %v3894
        %3897 = vmin.xlane.f32.xlu0 %v3896
        %v3898 = vpop.xlane.xlu0 %3897
        %vm3899 = vcmp.eq.f32.partialorder %v3896, %v3898
        %v3900 = vsel %vm3899, %v3895, inf
        %3901 = vmin.xlane.f32.xlu0 %v3900
        %v3902 = vpop.xlane.xlu0 %3901
        %v3903 = vcvt.f32.s32 %v3902
        %v3904 = vcvt.f32.s32 %v3898
        %v3905 = vshll.u32 %v3904, 16
        %v3906 = vadd.s32 %v3905, %v3903
        %vm3907 = vcmp.lt.s32.totalorder %v3591, %v3592
        %v3908 = vsel %vm3907, %v3591, %v3592
        %v3909 = vand.u32 %v3908, 65535
        %v3910 = vshra.s32 %v3908, 16
        %v3911 = vcvt.s32.f32 %v3909
        %v3912 = vcvt.s32.f32 %v3910
        %3913 = vmin.xlane.f32.xlu0 %v3912
        %v3914 = vpop.xlane.xlu0 %3913
        %vm3915 = vcmp.eq.f32.partialorder %v3912, %v3914
        %v3916 = vsel %vm3915, %v3911, inf
        %3917 = vmin.xlane.f32.xlu0 %v3916
        %v3918 = vpop.xlane.xlu0 %3917
        %v3919 = vcvt.f32.s32 %v3918
        %v3920 = vcvt.f32.s32 %v3914
        %v3921 = vshll.u32 %v3920, 16
        %v3922 = vadd.s32 %v3921, %v3919
        %vm3923 = vcmp.lt.s32.totalorder %v3593, %v3594
        %v3924 = vsel %vm3923, %v3593, %v3594
        %v3925 = vand.u32 %v3924, 65535
        %v3926 = vshra.s32 %v3924, 16
        %v3927 = vcvt.s32.f32 %v3925
        %v3928 = vcvt.s32.f32 %v3926
        %3929 = vmin.xlane.f32.xlu0 %v3928
        %v3930 = vpop.xlane.xlu0 %3929
        %vm3931 = vcmp.eq.f32.partialorder %v3928, %v3930
        %v3932 = vsel %vm3931, %v3927, inf
        %3933 = vmin.xlane.f32.xlu0 %v3932
        %v3934 = vpop.xlane.xlu0 %3933
        %v3935 = vcvt.f32.s32 %v3934
        %v3936 = vcvt.f32.s32 %v3930
        %v3937 = vshll.u32 %v3936, 16
        %v3938 = vadd.s32 %v3937, %v3935
        %vm3939 = vcmp.lt.s32.totalorder %v3595, %v3596
        %v3940 = vsel %vm3939, %v3595, %v3596
        %v3941 = vand.u32 %v3940, 65535
        %v3942 = vshra.s32 %v3940, 16
        %v3943 = vcvt.s32.f32 %v3941
        %v3944 = vcvt.s32.f32 %v3942
        %3945 = vmin.xlane.f32.xlu0 %v3944
        %v3946 = vpop.xlane.xlu0 %3945
        %vm3947 = vcmp.eq.f32.partialorder %v3944, %v3946
        %v3948 = vsel %vm3947, %v3943, inf
        %3949 = vmin.xlane.f32.xlu0 %v3948
        %v3950 = vpop.xlane.xlu0 %3949
        %v3951 = vcvt.f32.s32 %v3950
        %v3952 = vcvt.f32.s32 %v3946
        %v3953 = vshll.u32 %v3952, 16
        %v3954 = vadd.s32 %v3953, %v3951
        %vm3955 = vcmp.lt.s32.totalorder %v3597, %v3598
        %v3956 = vsel %vm3955, %v3597, %v3598
        %v3957 = vand.u32 %v3956, 65535
        %v3958 = vshra.s32 %v3956, 16
        %v3959 = vcvt.s32.f32 %v3957
        %v3960 = vcvt.s32.f32 %v3958
        %3961 = vmin.xlane.f32.xlu0 %v3960
        %v3962 = vpop.xlane.xlu0 %3961
        %vm3963 = vcmp.eq.f32.partialorder %v3960, %v3962
        %v3964 = vsel %vm3963, %v3959, inf
        %3965 = vmin.xlane.f32.xlu0 %v3964
        %v3966 = vpop.xlane.xlu0 %3965
        %v3967 = vcvt.f32.s32 %v3966
        %v3968 = vcvt.f32.s32 %v3962
        %v3969 = vshll.u32 %v3968, 16
        %v3970 = vadd.s32 %v3969, %v3967
        %vm3971 = vcmp.lt.s32.totalorder %v3599, %v3600
        %v3972 = vsel %vm3971, %v3599, %v3600
        %v3973 = vand.u32 %v3972, 65535
        %v3974 = vshra.s32 %v3972, 16
        %v3975 = vcvt.s32.f32 %v3973
        %v3976 = vcvt.s32.f32 %v3974
        %3977 = vmin.xlane.f32.xlu0 %v3976
        %v3978 = vpop.xlane.xlu0 %3977
        %vm3979 = vcmp.eq.f32.partialorder %v3976, %v3978
        %v3980 = vsel %vm3979, %v3975, inf
        %3981 = vmin.xlane.f32.xlu0 %v3980
        %v3982 = vpop.xlane.xlu0 %3981
        %v3983 = vcvt.f32.s32 %v3982
        %v3984 = vcvt.f32.s32 %v3978
        %v3985 = vshll.u32 %v3984, 16
        %v3986 = vadd.s32 %v3985, %v3983
        %vm3987 = vcmp.lt.s32.totalorder %v3601, %v3602
        %v3988 = vsel %vm3987, %v3601, %v3602
        %v3989 = vand.u32 %v3988, 65535
        %v3990 = vshra.s32 %v3988, 16
        %v3991 = vcvt.s32.f32 %v3989
        %v3992 = vcvt.s32.f32 %v3990
        %3993 = vmin.xlane.f32.xlu0 %v3992
        %v3994 = vpop.xlane.xlu0 %3993
        %vm3995 = vcmp.eq.f32.partialorder %v3992, %v3994
        %v3996 = vsel %vm3995, %v3991, inf
        %3997 = vmin.xlane.f32.xlu0 %v3996
        %v3998 = vpop.xlane.xlu0 %3997
        %v3999 = vcvt.f32.s32 %v3998
        %v4000 = vcvt.f32.s32 %v3994
        %v4001 = vshll.u32 %v4000, 16
        %v4002 = vadd.s32 %v4001, %v3999
        %vm4003 = vcmp.lt.s32.totalorder %v3603, %v3604
        %v4004 = vsel %vm4003, %v3603, %v3604
        %v4005 = vand.u32 %v4004, 65535
        %v4006 = vshra.s32 %v4004, 16
        %v4007 = vcvt.s32.f32 %v4005
        %v4008 = vcvt.s32.f32 %v4006
        %4009 = vmin.xlane.f32.xlu0 %v4008
        %v4010 = vpop.xlane.xlu0 %4009
        %vm4011 = vcmp.eq.f32.partialorder %v4008, %v4010
        %v4012 = vsel %vm4011, %v4007, inf
        %4013 = vmin.xlane.f32.xlu0 %v4012
        %v4014 = vpop.xlane.xlu0 %4013
        %v4015 = vcvt.f32.s32 %v4014
        %v4016 = vcvt.f32.s32 %v4010
        %v4017 = vshll.u32 %v4016, 16
        %v4018 = vadd.s32 %v4017, %v4015
        %vm4019 = vcmp.lt.s32.totalorder %v3605, %v3606
        %v4020 = vsel %vm4019, %v3605, %v3606
        %v4021 = vand.u32 %v4020, 65535
        %v4022 = vshra.s32 %v4020, 16
        %v4023 = vcvt.s32.f32 %v4021
        %v4024 = vcvt.s32.f32 %v4022
        %4025 = vmin.xlane.f32.xlu0 %v4024
        %v4026 = vpop.xlane.xlu0 %4025
        %vm4027 = vcmp.eq.f32.partialorder %v4024, %v4026
        %v4028 = vsel %vm4027, %v4023, inf
        %4029 = vmin.xlane.f32.xlu0 %v4028
        %v4030 = vpop.xlane.xlu0 %4029
        %v4031 = vcvt.f32.s32 %v4030
        %v4032 = vcvt.f32.s32 %v4026
        %v4033 = vshll.u32 %v4032, 16
        %v4034 = vadd.s32 %v4033, %v4031
        %vm4035 = vcmp.lt.s32.totalorder %v3607, %v3608
        %v4036 = vsel %vm4035, %v3607, %v3608
        %v4037 = vand.u32 %v4036, 65535
        %v4038 = vshra.s32 %v4036, 16
        %v4039 = vcvt.s32.f32 %v4037
        %v4040 = vcvt.s32.f32 %v4038
        %4041 = vmin.xlane.f32.xlu0 %v4040
        %v4042 = vpop.xlane.xlu0 %4041
        %vm4043 = vcmp.eq.f32.partialorder %v4040, %v4042
        %v4044 = vsel %vm4043, %v4039, inf
        %4045 = vmin.xlane.f32.xlu0 %v4044
        %v4046 = vpop.xlane.xlu0 %4045
        %v4047 = vcvt.f32.s32 %v4046
        %v4048 = vcvt.f32.s32 %v4042
        %v4049 = vshll.u32 %v4048, 16
        %v4050 = vadd.s32 %v4049, %v4047
        %vm4051 = vcmp.lt.s32.totalorder %v3609, %v3610
        %v4052 = vsel %vm4051, %v3609, %v3610
        %v4053 = vand.u32 %v4052, 65535
        %v4054 = vshra.s32 %v4052, 16
        %v4055 = vcvt.s32.f32 %v4053
        %v4056 = vcvt.s32.f32 %v4054
        %4057 = vmin.xlane.f32.xlu0 %v4056
        %v4058 = vpop.xlane.xlu0 %4057
        %vm4059 = vcmp.eq.f32.partialorder %v4056, %v4058
        %v4060 = vsel %vm4059, %v4055, inf
        %4061 = vmin.xlane.f32.xlu0 %v4060
        %v4062 = vpop.xlane.xlu0 %4061
        %v4063 = vcvt.f32.s32 %v4062
        %v4064 = vcvt.f32.s32 %v4058
        %v4065 = vshll.u32 %v4064, 16
        %v4066 = vadd.s32 %v4065, %v4063
        %vm4067 = vcmp.lt.s32.totalorder %v3611, %v3612
        %v4068 = vsel %vm4067, %v3611, %v3612
        %v4069 = vand.u32 %v4068, 65535
        %v4070 = vshra.s32 %v4068, 16
        %v4071 = vcvt.s32.f32 %v4069
        %v4072 = vcvt.s32.f32 %v4070
        %4073 = vmin.xlane.f32.xlu0 %v4072
        %v4074 = vpop.xlane.xlu0 %4073
        %vm4075 = vcmp.eq.f32.partialorder %v4072, %v4074
        %v4076 = vsel %vm4075, %v4071, inf
        %4077 = vmin.xlane.f32.xlu0 %v4076
        %v4078 = vpop.xlane.xlu0 %4077
        %v4079 = vcvt.f32.s32 %v4078
        %v4080 = vcvt.f32.s32 %v4074
        %v4081 = vshll.u32 %v4080, 16
        %v4082 = vadd.s32 %v4081, %v4079
        %vm4083 = vcmp.lt.s32.totalorder %v3613, %v3614
        %v4084 = vsel %vm4083, %v3613, %v3614
        %v4085 = vand.u32 %v4084, 65535
        %v4086 = vshra.s32 %v4084, 16
        %v4087 = vcvt.s32.f32 %v4085
        %v4088 = vcvt.s32.f32 %v4086
        %4089 = vmin.xlane.f32.xlu0 %v4088
        %v4090 = vpop.xlane.xlu0 %4089
        %vm4091 = vcmp.eq.f32.partialorder %v4088, %v4090
        %v4092 = vsel %vm4091, %v4087, inf
        %4093 = vmin.xlane.f32.xlu0 %v4092
        %v4094 = vpop.xlane.xlu0 %4093
        %v4095 = vcvt.f32.s32 %v4094
        %v4096 = vcvt.f32.s32 %v4090
        %v4097 = vshll.u32 %v4096, 16
        %v4098 = vadd.s32 %v4097, %v4095
        %vm4099 = vcmp.lt.s32.totalorder %v3615, %v3616
        %v4100 = vsel %vm4099, %v3615, %v3616
        %v4101 = vand.u32 %v4100, 65535
        %v4102 = vshra.s32 %v4100, 16
        %v4103 = vcvt.s32.f32 %v4101
        %v4104 = vcvt.s32.f32 %v4102
        %4105 = vmin.xlane.f32.xlu0 %v4104
        %v4106 = vpop.xlane.xlu0 %4105
        %vm4107 = vcmp.eq.f32.partialorder %v4104, %v4106
        %v4108 = vsel %vm4107, %v4103, inf
        %4109 = vmin.xlane.f32.xlu0 %v4108
        %v4110 = vpop.xlane.xlu0 %4109
        %v4111 = vcvt.f32.s32 %v4110
        %v4112 = vcvt.f32.s32 %v4106
        %v4113 = vshll.u32 %v4112, 16
        %v4114 = vadd.s32 %v4113, %v4111
        %vm4115 = vcmp.lt.s32.totalorder %v3617, %v3618
        %v4116 = vsel %vm4115, %v3617, %v3618
        %v4117 = vand.u32 %v4116, 65535
        %v4118 = vshra.s32 %v4116, 16
        %v4119 = vcvt.s32.f32 %v4117
        %v4120 = vcvt.s32.f32 %v4118
        %4121 = vmin.xlane.f32.xlu0 %v4120
        %v4122 = vpop.xlane.xlu0 %4121
        %vm4123 = vcmp.eq.f32.partialorder %v4120, %v4122
        %v4124 = vsel %vm4123, %v4119, inf
        %4125 = vmin.xlane.f32.xlu0 %v4124
        %v4126 = vpop.xlane.xlu0 %4125
        %v4127 = vcvt.f32.s32 %v4126
        %v4128 = vcvt.f32.s32 %v4122
        %v4129 = vshll.u32 %v4128, 16
        %v4130 = vadd.s32 %v4129, %v4127
        %vm4131 = vcmask 7168
        %v4132 = vsel %vm4131, %v1042, %v1906
        %v4133 = vsel %vm4131, %v1058, %v1922
        %v4134 = vsel %vm4131, %v1074, %v1938
        %v4135 = vsel %vm4131, %v1090, %v1954
        %v4136 = vsel %vm4131, %v1106, %v1970
        %v4137 = vsel %vm4131, %v1122, %v1986
        %v4138 = vsel %vm4131, %v1138, %v2002
        %v4139 = vsel %vm4131, %v1154, %v2018
        %v4140 = vsel %vm4131, %v1170, %v2034
        %v4141 = vsel %vm4131, %v1186, %v2050
        %v4142 = vsel %vm4131, %v1202, %v2066
        %v4143 = vsel %vm4131, %v1218, %v2082
        %v4144 = vsel %vm4131, %v1234, %v2098
        %v4145 = vsel %vm4131, %v1250, %v2114
        %v4146 = vsel %vm4131, %v1266, %v2130
        %v4147 = vsel %vm4131, %v1282, %v2146
        %v4148 = vsel %vm4131, %v1298, %v2162
        %v4149 = vsel %vm4131, %v1314, %v2178
        %v4150 = vsel %vm4131, %v1330, %v2194
        %v4151 = vsel %vm4131, %v1346, %v2210
        %v4152 = vsel %vm4131, %v1362, %v2226
        %v4153 = vsel %vm4131, %v1378, %v2242
        %v4154 = vsel %vm4131, %v1394, %v2258
        %v4155 = vsel %vm4131, %v1410, %v2274
        %v4156 = vsel %vm4131, %v1426, %v2290
        %v4157 = vsel %vm4131, %v1442, %v2306
        %v4158 = vsel %vm4131, %v1458, %v2322
        %v4159 = vsel %vm4131, %v1474, %v2338
        %v4160 = vsel %vm4131, %v1490, %v2354
        %v4161 = vsel %vm4131, %v1506, %v2370
        %v4162 = vsel %vm4131, %v1522, %v2386
        %v4163 = vsel %vm4131, %v1538, %v2402
        %vm4164 = vcmask 15360
        %v4165 = vsel %vm4164, %v4132, %v2770
        %v4166 = vsel %vm4164, %v4133, %v2786
        %v4167 = vsel %vm4164, %v4134, %v2802
        %v4168 = vsel %vm4164, %v4135, %v2818
        %v4169 = vsel %vm4164, %v4136, %v2834
        %v4170 = vsel %vm4164, %v4137, %v2850
        %v4171 = vsel %vm4164, %v4138, %v2866
        %v4172 = vsel %vm4164, %v4139, %v2882
        %v4173 = vsel %vm4164, %v4140, %v2898
        %v4174 = vsel %vm4164, %v4141, %v2914
        %v4175 = vsel %vm4164, %v4142, %v2930
        %v4176 = vsel %vm4164, %v4143, %v2946
        %v4177 = vsel %vm4164, %v4144, %v2962
        %v4178 = vsel %vm4164, %v4145, %v2978
        %v4179 = vsel %vm4164, %v4146, %v2994
        %v4180 = vsel %vm4164, %v4147, %v3010
        %v4181 = vsel %vm4164, %v4148, %v3026
        %v4182 = vsel %vm4164, %v4149, %v3042
        %v4183 = vsel %vm4164, %v4150, %v3058
        %v4184 = vsel %vm4164, %v4151, %v3074
        %v4185 = vsel %vm4164, %v4152, %v3090
        %v4186 = vsel %vm4164, %v4153, %v3106
        %v4187 = vsel %vm4164, %v4154, %v3122
        %v4188 = vsel %vm4164, %v4155, %v3138
        %v4189 = vsel %vm4164, %v4156, %v3154
        %v4190 = vsel %vm4164, %v4157, %v3170
        %v4191 = vsel %vm4164, %v4158, %v3186
        %v4192 = vsel %vm4164, %v4159, %v3202
        %v4193 = vsel %vm4164, %v4160, %v3218
        %v4194 = vsel %vm4164, %v4161, %v3234
        %v4195 = vsel %vm4164, %v4162, %v3250
        %v4196 = vsel %vm4164, %v4163, %v3266
        %vm4197 = vcmask 23552
        %v4198 = vsel %vm4197, %v4165, %v3634
        %v4199 = vsel %vm4197, %v4166, %v3650
        %v4200 = vsel %vm4197, %v4167, %v3666
        %v4201 = vsel %vm4197, %v4168, %v3682
        %v4202 = vsel %vm4197, %v4169, %v3698
        %v4203 = vsel %vm4197, %v4170, %v3714
        %v4204 = vsel %vm4197, %v4171, %v3730
        %v4205 = vsel %vm4197, %v4172, %v3746
        %v4206 = vsel %vm4197, %v4173, %v3762
        %v4207 = vsel %vm4197, %v4174, %v3778
        %v4208 = vsel %vm4197, %v4175, %v3794
        %v4209 = vsel %vm4197, %v4176, %v3810
        %v4210 = vsel %vm4197, %v4177, %v3826
        %v4211 = vsel %vm4197, %v4178, %v3842
        %v4212 = vsel %vm4197, %v4179, %v3858
        %v4213 = vsel %vm4197, %v4180, %v3874
        %v4214 = vsel %vm4197, %v4181, %v3890
        %v4215 = vsel %vm4197, %v4182, %v3906
        %v4216 = vsel %vm4197, %v4183, %v3922
        %v4217 = vsel %vm4197, %v4184, %v3938
        %v4218 = vsel %vm4197, %v4185, %v3954
        %v4219 = vsel %vm4197, %v4186, %v3970
        %v4220 = vsel %vm4197, %v4187, %v3986
        %v4221 = vsel %vm4197, %v4188, %v4002
        %v4222 = vsel %vm4197, %v4189, %v4018
        %v4223 = vsel %vm4197, %v4190, %v4034
        %v4224 = vsel %vm4197, %v4191, %v4050
        %v4225 = vsel %vm4197, %v4192, %v4066
        %v4226 = vsel %vm4197, %v4193, %v4082
        %v4227 = vsel %vm4197, %v4194, %v4098
        %v4228 = vsel %vm4197, %v4195, %v4114
        %v4229 = vsel %vm4197, %v4196, %v4130
        %4230 = vxpose.xlu0.b32.start [1/16] %v4198, 128
        %4231 = vxpose.xlu0.b32.cont [2/16] %v4199, 128
        %4232 = vxpose.xlu0.b32.cont [3/16] %v4200, 128
        %4233 = vxpose.xlu0.b32.cont [4/16] %v4201, 128
        %4234 = vxpose.xlu0.b32.cont [5/16] %v4202, 128
        %4235 = vxpose.xlu0.b32.cont [6/16] %v4203, 128
        %4236 = vxpose.xlu0.b32.cont [7/16] %v4204, 128
        %4237 = vxpose.xlu0.b32.cont [8/16] %v4205, 128
        %4238 = vxpose.xlu0.b32.cont [9/16] %v4206, 128
        %4239 = vxpose.xlu0.b32.cont [10/16] %v4207, 128
        %4240 = vxpose.xlu0.b32.cont [11/16] %v4208, 128
        %4241 = vxpose.xlu0.b32.cont [12/16] %v4209, 128
        %4242 = vxpose.xlu0.b32.cont [13/16] %v4210, 128
        %4243 = vxpose.xlu0.b32.cont [14/16] %v4211, 128
        %4244 = vxpose.xlu0.b32.cont [15/16] %v4212, 128
        %4245 = vxpose.xlu0.b32.end [16/16] %v4213, 128
        %v4246 = vpop.trf.xlu0
        %v4247 = vpop.trf.xlu0
        %v4248 = vpop.trf.xlu0
        %v4249 = vpop.trf.xlu0
        %v4250 = vpop.trf.xlu0
        %v4251 = vpop.trf.xlu0
        %v4252 = vpop.trf.xlu0
        %v4253 = vpop.trf.xlu0
        %v4254 = vpop.trf.xlu0
        %v4255 = vpop.trf.xlu0
        %v4256 = vpop.trf.xlu0
        %v4257 = vpop.trf.xlu0
        %v4258 = vpop.trf.xlu0
        %v4259 = vpop.trf.xlu0
        %v4260 = vpop.trf.xlu0
        %v4261 = vpop.trf.xlu0
        %4262 = vxpose.xlu0.b32.start [1/16] %v4214, 128
        %4263 = vxpose.xlu0.b32.cont [2/16] %v4215, 128
        %4264 = vxpose.xlu0.b32.cont [3/16] %v4216, 128
        %4265 = vxpose.xlu0.b32.cont [4/16] %v4217, 128
        %4266 = vxpose.xlu0.b32.cont [5/16] %v4218, 128
        %4267 = vxpose.xlu0.b32.cont [6/16] %v4219, 128
        %4268 = vxpose.xlu0.b32.cont [7/16] %v4220, 128
        %4269 = vxpose.xlu0.b32.cont [8/16] %v4221, 128
        %4270 = vxpose.xlu0.b32.cont [9/16] %v4222, 128
        %4271 = vxpose.xlu0.b32.cont [10/16] %v4223, 128
        %4272 = vxpose.xlu0.b32.cont [11/16] %v4224, 128
        %4273 = vxpose.xlu0.b32.cont [12/16] %v4225, 128
        %4274 = vxpose.xlu0.b32.cont [13/16] %v4226, 128
        %4275 = vxpose.xlu0.b32.cont [14/16] %v4227, 128
        %4276 = vxpose.xlu0.b32.cont [15/16] %v4228, 128
        %4277 = vxpose.xlu0.b32.end [16/16] %v4229, 128
        %v4278 = vpop.trf.xlu0
        %v4279 = vpop.trf.xlu0
        %v4280 = vpop.trf.xlu0
        %v4281 = vpop.trf.xlu0
        %v4282 = vpop.trf.xlu0
        %v4283 = vpop.trf.xlu0
        %v4284 = vpop.trf.xlu0
        %v4285 = vpop.trf.xlu0
        %v4286 = vpop.trf.xlu0
        %v4287 = vpop.trf.xlu0
        %v4288 = vpop.trf.xlu0
        %v4289 = vpop.trf.xlu0
        %v4290 = vpop.trf.xlu0
        %v4291 = vpop.trf.xlu0
        %v4292 = vpop.trf.xlu0
        %v4293 = vpop.trf.xlu0
        %v4294 = vcombine.low %v4246, %v4278
        %4295 = vst [vmem:[%s251] sm:$0xff] %v4294
        %v4296 = vsub.f32 %v642, %v805
        %v4297 = vsub.f32 %v644, %v805
        %v4298 = vsub.f32 %v646, %v808
        %v4299 = vsub.f32 %v648, %v808
        %v4300 = vsub.f32 %v652, %v811
        %v4301 = vsub.f32 %v654, %v811
        %v4302 = vsub.f32 %v656, %v814
        %v4303 = vsub.f32 %v658, %v814
        %v4304 = vsub.f32 %v662, %v817
        %v4305 = vsub.f32 %v664, %v817
        %v4306 = vsub.f32 %v666, %v820
        %v4307 = vsub.f32 %v668, %v820
        %v4308 = vsub.f32 %v672, %v823
        %v4309 = vsub.f32 %v674, %v823
        %v4310 = vsub.f32 %v676, %v826
        %v4311 = vsub.f32 %v678, %v826
        %v4312 = vsub.f32 %v682, %v829
        %v4313 = vsub.f32 %v684, %v829
        %v4314 = vsub.f32 %v686, %v832
        %v4315 = vsub.f32 %v688, %v832
        %v4316 = vsub.f32 %v692, %v835
        %v4317 = vsub.f32 %v694, %v835
        %v4318 = vsub.f32 %v696, %v838
        %v4319 = vsub.f32 %v698, %v838
        %v4320 = vsub.f32 %v702, %v841
        %v4321 = vsub.f32 %v704, %v841
        %v4322 = vsub.f32 %v706, %v844
        %v4323 = vsub.f32 %v708, %v844
        %v4324 = vsub.f32 %v712, %v847
        %v4325 = vsub.f32 %v714, %v847
        %v4326 = vsub.f32 %v716, %v850
        %v4327 = vsub.f32 %v718, %v850
        %v4328 = vsub.f32 %v722, %v853
        %v4329 = vsub.f32 %v724, %v853
        %v4330 = vsub.f32 %v726, %v856
        %v4331 = vsub.f32 %v728, %v856
        %v4332 = vsub.f32 %v732, %v859
        %v4333 = vsub.f32 %v734, %v859
        %v4334 = vsub.f32 %v736, %v862
        %v4335 = vsub.f32 %v738, %v862
        %v4336 = vsub.f32 %v742, %v865
        %v4337 = vsub.f32 %v744, %v865
        %v4338 = vsub.f32 %v746, %v868
        %v4339 = vsub.f32 %v748, %v868
        %v4340 = vsub.f32 %v752, %v871
        %v4341 = vsub.f32 %v754, %v871
        %v4342 = vsub.f32 %v756, %v874
        %v4343 = vsub.f32 %v758, %v874
        %v4344 = vsub.f32 %v762, %v877
        %v4345 = vsub.f32 %v764, %v877
        %v4346 = vsub.f32 %v766, %v880
        %v4347 = vsub.f32 %v768, %v880
        %v4348 = vsub.f32 %v772, %v883
        %v4349 = vsub.f32 %v774, %v883
        %v4350 = vsub.f32 %v776, %v886
        %v4351 = vsub.f32 %v778, %v886
        %v4352 = vsub.f32 %v782, %v889
        %v4353 = vsub.f32 %v784, %v889
        %v4354 = vsub.f32 %v786, %v892
        %v4355 = vsub.f32 %v788, %v892
        %v4356 = vsub.f32 %v792, %v895
        %v4357 = vsub.f32 %v794, %v895
        %v4358 = vsub.f32 %v796, %v898
        %v4359 = vsub.f32 %v798, %v898
        %v4360 = vmul.f32 %v4296, 1.442695
        %v4361 = vpow.pop %v4360
        %v4362 = vmul.f32 %v4297, 1.442695
        %v4363 = vpow.pop %v4362
        %v4364 = vmul.f32 %v4298, 1.442695
        %v4365 = vpow.pop %v4364
        %v4366 = vmul.f32 %v4299, 1.442695
        %v4367 = vpow.pop %v4366
        %v4368 = vmul.f32 %v4300, 1.442695
        %v4369 = vpow.pop %v4368
        %v4370 = vmul.f32 %v4301, 1.442695
        %v4371 = vpow.pop %v4370
        %v4372 = vmul.f32 %v4302, 1.442695
        %v4373 = vpow.pop %v4372
        %v4374 = vmul.f32 %v4303, 1.442695
        %v4375 = vpow.pop %v4374
        %v4376 = vmul.f32 %v4304, 1.442695
        %v4377 = vpow.pop %v4376
        %v4378 = vmul.f32 %v4305, 1.442695
        %v4379 = vpow.pop %v4378
        %v4380 = vmul.f32 %v4306, 1.442695
        %v4381 = vpow.pop %v4380
        %v4382 = vmul.f32 %v4307, 1.442695
        %v4383 = vpow.pop %v4382
        %v4384 = vmul.f32 %v4308, 1.442695
        %v4385 = vpow.pop %v4384
        %v4386 = vmul.f32 %v4309, 1.442695
        %v4387 = vpow.pop %v4386
        %v4388 = vmul.f32 %v4310, 1.442695
        %v4389 = vpow.pop %v4388
        %v4390 = vmul.f32 %v4311, 1.442695
        %v4391 = vpow.pop %v4390
        %v4392 = vmul.f32 %v4312, 1.442695
        %v4393 = vpow.pop %v4392
        %v4394 = vmul.f32 %v4313, 1.442695
        %v4395 = vpow.pop %v4394
        %v4396 = vmul.f32 %v4314, 1.442695
        %v4397 = vpow.pop %v4396
        %v4398 = vmul.f32 %v4315, 1.442695
        %v4399 = vpow.pop %v4398
        %v4400 = vmul.f32 %v4316, 1.442695
        %v4401 = vpow.pop %v4400
        %v4402 = vmul.f32 %v4317, 1.442695
        %v4403 = vpow.pop %v4402
        %v4404 = vmul.f32 %v4318, 1.442695
        %v4405 = vpow.pop %v4404
        %v4406 = vmul.f32 %v4319, 1.442695
        %v4407 = vpow.pop %v4406
        %v4408 = vmul.f32 %v4320, 1.442695
        %v4409 = vpow.pop %v4408
        %v4410 = vmul.f32 %v4321, 1.442695
        %v4411 = vpow.pop %v4410
        %v4412 = vmul.f32 %v4322, 1.442695
        %v4413 = vpow.pop %v4412
        %v4414 = vmul.f32 %v4323, 1.442695
        %v4415 = vpow.pop %v4414
        %v4416 = vmul.f32 %v4324, 1.442695
        %v4417 = vpow.pop %v4416
        %v4418 = vmul.f32 %v4325, 1.442695
        %v4419 = vpow.pop %v4418
        %v4420 = vmul.f32 %v4326, 1.442695
        %v4421 = vpow.pop %v4420
        %v4422 = vmul.f32 %v4327, 1.442695
        %v4423 = vpow.pop %v4422
        %v4424 = vmul.f32 %v4328, 1.442695
        %v4425 = vpow.pop %v4424
        %v4426 = vmul.f32 %v4329, 1.442695
        %v4427 = vpow.pop %v4426
        %v4428 = vmul.f32 %v4330, 1.442695
        %v4429 = vpow.pop %v4428
        %v4430 = vmul.f32 %v4331, 1.442695
        %v4431 = vpow.pop %v4430
        %v4432 = vmul.f32 %v4332, 1.442695
        %v4433 = vpow.pop %v4432
        %v4434 = vmul.f32 %v4333, 1.442695
        %v4435 = vpow.pop %v4434
        %v4436 = vmul.f32 %v4334, 1.442695
        %v4437 = vpow.pop %v4436
        %v4438 = vmul.f32 %v4335, 1.442695
        %v4439 = vpow.pop %v4438
        %v4440 = vmul.f32 %v4336, 1.442695
        %v4441 = vpow.pop %v4440
        %v4442 = vmul.f32 %v4337, 1.442695
        %v4443 = vpow.pop %v4442
        %v4444 = vmul.f32 %v4338, 1.442695
        %v4445 = vpow.pop %v4444
        %v4446 = vmul.f32 %v4339, 1.442695
        %v4447 = vpow.pop %v4446
        %v4448 = vmul.f32 %v4340, 1.442695
        %v4449 = vpow.pop %v4448
        %v4450 = vmul.f32 %v4341, 1.442695
        %v4451 = vpow.pop %v4450
        %v4452 = vmul.f32 %v4342, 1.442695
        %v4453 = vpow.pop %v4452
        %v4454 = vmul.f32 %v4343, 1.442695
        %v4455 = vpow.pop %v4454
        %v4456 = vmul.f32 %v4344, 1.442695
        %v4457 = vpow.pop %v4456
        %v4458 = vmul.f32 %v4345, 1.442695
        %v4459 = vpow.pop %v4458
        %v4460 = vmul.f32 %v4346, 1.442695
        %v4461 = vpow.pop %v4460
        %v4462 = vmul.f32 %v4347, 1.442695
        %v4463 = vpow.pop %v4462
        %v4464 = vmul.f32 %v4348, 1.442695
        %v4465 = vpow.pop %v4464
        %v4466 = vmul.f32 %v4349, 1.442695
        %v4467 = vpow.pop %v4466
        %v4468 = vmul.f32 %v4350, 1.442695
        %v4469 = vpow.pop %v4468
        %v4470 = vmul.f32 %v4351, 1.442695
        %v4471 = vpow.pop %v4470
        %v4472 = vmul.f32 %v4352, 1.442695
        %v4473 = vpow.pop %v4472
        %v4474 = vmul.f32 %v4353, 1.442695
        %v4475 = vpow.pop %v4474
        %v4476 = vmul.f32 %v4354, 1.442695
        %v4477 = vpow.pop %v4476
        %v4478 = vmul.f32 %v4355, 1.442695
        %v4479 = vpow.pop %v4478
        %v4480 = vmul.f32 %v4356, 1.442695
        %v4481 = vpow.pop %v4480
        %v4482 = vmul.f32 %v4357, 1.442695
        %v4483 = vpow.pop %v4482
        %v4484 = vmul.f32 %v4358, 1.442695
        %v4485 = vpow.pop %v4484
        %v4486 = vmul.f32 %v4359, 1.442695
        %v4487 = vpow.pop %v4486
        %v4488 = vadd.f32 %v4361, %v4363
        %4489 = vadd.xlane.f32.xlu0 %v4488
        %v4490 = vpop.xlane.xlu0 %4489
        %v4491 = vadd.f32 %v4365, %v4367
        %4492 = vadd.xlane.f32.xlu0 %v4491
        %v4493 = vpop.xlane.xlu0 %4492
        %v4494 = vadd.f32 %v4369, %v4371
        %4495 = vadd.xlane.f32.xlu0 %v4494
        %v4496 = vpop.xlane.xlu0 %4495
        %v4497 = vadd.f32 %v4373, %v4375
        %4498 = vadd.xlane.f32.xlu0 %v4497
        %v4499 = vpop.xlane.xlu0 %4498
        %v4500 = vadd.f32 %v4377, %v4379
        %4501 = vadd.xlane.f32.xlu0 %v4500
        %v4502 = vpop.xlane.xlu0 %4501
        %v4503 = vadd.f32 %v4381, %v4383
        %4504 = vadd.xlane.f32.xlu0 %v4503
        %v4505 = vpop.xlane.xlu0 %4504
        %v4506 = vadd.f32 %v4385, %v4387
        %4507 = vadd.xlane.f32.xlu0 %v4506
        %v4508 = vpop.xlane.xlu0 %4507
        %v4509 = vadd.f32 %v4389, %v4391
        %4510 = vadd.xlane.f32.xlu0 %v4509
        %v4511 = vpop.xlane.xlu0 %4510
        %v4512 = vadd.f32 %v4393, %v4395
        %4513 = vadd.xlane.f32.xlu0 %v4512
        %v4514 = vpop.xlane.xlu0 %4513
        %v4515 = vadd.f32 %v4397, %v4399
        %4516 = vadd.xlane.f32.xlu0 %v4515
        %v4517 = vpop.xlane.xlu0 %4516
        %v4518 = vadd.f32 %v4401, %v4403
        %4519 = vadd.xlane.f32.xlu0 %v4518
        %v4520 = vpop.xlane.xlu0 %4519
        %v4521 = vadd.f32 %v4405, %v4407
        %4522 = vadd.xlane.f32.xlu0 %v4521
        %v4523 = vpop.xlane.xlu0 %4522
        %v4524 = vadd.f32 %v4409, %v4411
        %4525 = vadd.xlane.f32.xlu0 %v4524
        %v4526 = vpop.xlane.xlu0 %4525
        %v4527 = vadd.f32 %v4413, %v4415
        %4528 = vadd.xlane.f32.xlu0 %v4527
        %v4529 = vpop.xlane.xlu0 %4528
        %v4530 = vadd.f32 %v4417, %v4419
        %4531 = vadd.xlane.f32.xlu0 %v4530
        %v4532 = vpop.xlane.xlu0 %4531
        %v4533 = vadd.f32 %v4421, %v4423
        %4534 = vadd.xlane.f32.xlu0 %v4533
        %v4535 = vpop.xlane.xlu0 %4534
        %v4536 = vadd.f32 %v4425, %v4427
        %4537 = vadd.xlane.f32.xlu0 %v4536
        %v4538 = vpop.xlane.xlu0 %4537
        %v4539 = vadd.f32 %v4429, %v4431
        %4540 = vadd.xlane.f32.xlu0 %v4539
        %v4541 = vpop.xlane.xlu0 %4540
        %v4542 = vadd.f32 %v4433, %v4435
        %4543 = vadd.xlane.f32.xlu0 %v4542
        %v4544 = vpop.xlane.xlu0 %4543
        %v4545 = vadd.f32 %v4437, %v4439
        %4546 = vadd.xlane.f32.xlu0 %v4545
        %v4547 = vpop.xlane.xlu0 %4546
        %v4548 = vadd.f32 %v4441, %v4443
        %4549 = vadd.xlane.f32.xlu0 %v4548
        %v4550 = vpop.xlane.xlu0 %4549
        %v4551 = vadd.f32 %v4445, %v4447
        %4552 = vadd.xlane.f32.xlu0 %v4551
        %v4553 = vpop.xlane.xlu0 %4552
        %v4554 = vadd.f32 %v4449, %v4451
        %4555 = vadd.xlane.f32.xlu0 %v4554
        %v4556 = vpop.xlane.xlu0 %4555
        %v4557 = vadd.f32 %v4453, %v4455
        %4558 = vadd.xlane.f32.xlu0 %v4557
        %v4559 = vpop.xlane.xlu0 %4558
        %v4560 = vadd.f32 %v4457, %v4459
        %4561 = vadd.xlane.f32.xlu0 %v4560
        %v4562 = vpop.xlane.xlu0 %4561
        %v4563 = vadd.f32 %v4461, %v4463
        %4564 = vadd.xlane.f32.xlu0 %v4563
        %v4565 = vpop.xlane.xlu0 %4564
        %v4566 = vadd.f32 %v4465, %v4467
        %4567 = vadd.xlane.f32.xlu0 %v4566
        %v4568 = vpop.xlane.xlu0 %4567
        %v4569 = vadd.f32 %v4469, %v4471
        %4570 = vadd.xlane.f32.xlu0 %v4569
        %v4571 = vpop.xlane.xlu0 %4570
        %v4572 = vadd.f32 %v4473, %v4475
        %4573 = vadd.xlane.f32.xlu0 %v4572
        %v4574 = vpop.xlane.xlu0 %4573
        %v4575 = vadd.f32 %v4477, %v4479
        %4576 = vadd.xlane.f32.xlu0 %v4575
        %v4577 = vpop.xlane.xlu0 %4576
        %v4578 = vadd.f32 %v4481, %v4483
        %4579 = vadd.xlane.f32.xlu0 %v4578
        %v4580 = vpop.xlane.xlu0 %4579
        %v4581 = vadd.f32 %v4485, %v4487
        %4582 = vadd.xlane.f32.xlu0 %v4581
        %v4583 = vpop.xlane.xlu0 %4582
        %v4584 = vpack.c.bf16 %v4365, %v4361
        %v4585 = vpack.c.bf16 %v4367, %v4363
        %v4586 = vpack.c.bf16 %v4373, %v4369
        %v4587 = vpack.c.bf16 %v4375, %v4371
        %v4588 = vpack.c.bf16 %v4381, %v4377
        %v4589 = vpack.c.bf16 %v4383, %v4379
        %v4590 = vpack.c.bf16 %v4389, %v4385
        %v4591 = vpack.c.bf16 %v4391, %v4387
        %v4592 = vpack.c.bf16 %v4397, %v4393
        %v4593 = vpack.c.bf16 %v4399, %v4395
        %v4594 = vpack.c.bf16 %v4405, %v4401
        %v4595 = vpack.c.bf16 %v4407, %v4403
        %v4596 = vpack.c.bf16 %v4413, %v4409
        %v4597 = vpack.c.bf16 %v4415, %v4411
        %v4598 = vpack.c.bf16 %v4421, %v4417
        %v4599 = vpack.c.bf16 %v4423, %v4419
        %v4600 = vpack.c.bf16 %v4429, %v4425
        %v4601 = vpack.c.bf16 %v4431, %v4427
        %v4602 = vpack.c.bf16 %v4437, %v4433
        %v4603 = vpack.c.bf16 %v4439, %v4435
        %v4604 = vpack.c.bf16 %v4445, %v4441
        %v4605 = vpack.c.bf16 %v4447, %v4443
        %v4606 = vpack.c.bf16 %v4453, %v4449
        %v4607 = vpack.c.bf16 %v4455, %v4451
        %v4608 = vpack.c.bf16 %v4461, %v4457
        %v4609 = vpack.c.bf16 %v4463, %v4459
        %v4610 = vpack.c.bf16 %v4469, %v4465
        %v4611 = vpack.c.bf16 %v4471, %v4467
        %v4612 = vpack.c.bf16 %v4477, %v4473
        %v4613 = vpack.c.bf16 %v4479, %v4475
        %v4614 = vpack.c.bf16 %v4485, %v4481
        %v4615 = vpack.c.bf16 %v4487, %v4483
        %v4620 = vunpack.c.l.b16 %v346
        %v4621 = vunpack.c.h.b16 %v346
        %v4622 = vunpack.c.l.b16 %v347
        %v4623 = vunpack.c.h.b16 %v347
        %v4624 = vunpack.c.l.b16 %v348
        %v4625 = vunpack.c.h.b16 %v348
        %v4626 = vunpack.c.l.b16 %v349
        %v4627 = vunpack.c.h.b16 %v349
        %v4628 = vpack.c.b16 %v4622, %v4620
        %v4629 = vpack.c.b16 %v4623, %v4621
        %v4630 = vpack.c.b16 %v4626, %v4624
        %v4631 = vpack.c.b16 %v4627, %v4625
        %4636 = vmatprep.subr.bf16.mxu0 %v4585
        %4637 = vmatpush1.bf16.xpose.msra.mxu0 %v4584
        %4638 = vmatprep.subr.bf16.mxu0 %v4587
        %4639 = vmatpush1.bf16.xpose.msra.mxu0 %v4586
        %4640 = vmatprep.subr.bf16.mxu0 %v4589
        %4641 = vmatpush1.bf16.xpose.msra.mxu0 %v4588
        %4642 = vmatprep.subr.bf16.mxu0 %v4591
        %4643 = vmatpush1.bf16.xpose.msra.mxu0 %v4590
        %4644 = vmatprep.subr.bf16.mxu0 %v4593
        %4645 = vmatpush1.bf16.xpose.msra.mxu0 %v4592
        %4646 = vmatprep.subr.bf16.mxu0 %v4595
        %4647 = vmatpush1.bf16.xpose.msra.mxu0 %v4594
        %4648 = vmatprep.subr.bf16.mxu0 %v4597
        %4649 = vmatpush1.bf16.xpose.msra.mxu0 %v4596
        %4650 = vmatprep.subr.bf16.mxu0 %v4599
        %4651 = vmatpush1.bf16.xpose.msra.mxu0 %v4598
        %4652 = vmatprep.subr.bf16.mxu0 %v4601
        %4653 = vmatpush1.bf16.xpose.msra.mxu0 %v4600
        %4654 = vmatprep.subr.bf16.mxu0 %v4603
        %4655 = vmatpush1.bf16.xpose.msra.mxu0 %v4602
        %4656 = vmatprep.subr.bf16.mxu0 %v4605
        %4657 = vmatpush1.bf16.xpose.msra.mxu0 %v4604
        %4658 = vmatprep.subr.bf16.mxu0 %v4607
        %4659 = vmatpush1.bf16.xpose.msra.mxu0 %v4606
        %4660 = vmatprep.subr.bf16.mxu0 %v4609
        %4661 = vmatpush1.bf16.xpose.msra.mxu0 %v4608
        %4662 = vmatprep.subr.bf16.mxu0 %v4611
        %4663 = vmatpush1.bf16.xpose.msra.mxu0 %v4610
        %4664 = vmatprep.subr.bf16.mxu0 %v4613
        %4665 = vmatpush1.bf16.xpose.msra.mxu0 %v4612
        %4666 = vmatprep.subr.bf16.mxu0 %v4615
        %4667 = vmatpush1.bf16.xpose.msra.mxu0 %v4614
        %4668 = vmatprep.mubr.bf16.mxu0 %v4629
        %4669 = vmatmul.mubr.bf16.gmra.mrb[0].mxu0 %v4628
        %v4670 = vpop.f32.mrb[0].mxu0
        %v4671 = vadd.f32 0.0, %v4670
        %v4672 = vpop.f32.mrb[0].mxu0
        %v4673 = vadd.f32 0.0, %v4672
        %v4674 = vpop.f32.mrb[0].mxu0
        %v4675 = vadd.f32 0.0, %v4674
        %v4676 = vpop.f32.mrb[0].mxu0
        %v4677 = vadd.f32 0.0, %v4676
        %4678 = vmatprep.mubr.bf16.mxu0 %v4631
        %4679 = vmatmul.mubr.bf16.gmra.mrb[0].mxu0 %v4630
        %v4680 = vpop.f32.mrb[0].mxu0
        %v4681 = vadd.f32 0.0, %v4680
        %v4682 = vpop.f32.mrb[0].mxu0
        %v4683 = vadd.f32 0.0, %v4682
        %v4684 = vpop.f32.mrb[0].mxu0
        %v4685 = vadd.f32 0.0, %v4684
        %v4686 = vpop.f32.mrb[0].mxu0
        %v4687 = vadd.f32 0.0, %v4686
        %4688 = vdwg.mxu0
        %v4689 = vrcp.pop %v4490
        %v4690 = vrcp.pop %v4493
        %v4691 = vrcp.pop %v4496
        %v4692 = vrcp.pop %v4499
        %v4693 = vrcp.pop %v4502
        %v4694 = vrcp.pop %v4505
        %v4695 = vrcp.pop %v4508
        %v4696 = vrcp.pop %v4511
        %v4697 = vrcp.pop %v4514
        %v4698 = vrcp.pop %v4517
        %v4699 = vrcp.pop %v4520
        %v4700 = vrcp.pop %v4523
        %v4701 = vrcp.pop %v4526
        %v4702 = vrcp.pop %v4529
        %v4703 = vrcp.pop %v4532
        %v4704 = vrcp.pop %v4535
        %v4705 = vrcp.pop %v4538
        %v4706 = vrcp.pop %v4541
        %v4707 = vrcp.pop %v4544
        %v4708 = vrcp.pop %v4547
        %v4709 = vrcp.pop %v4550
        %v4710 = vrcp.pop %v4553
        %v4711 = vrcp.pop %v4556
        %v4712 = vrcp.pop %v4559
        %v4713 = vrcp.pop %v4562
        %v4714 = vrcp.pop %v4565
        %v4715 = vrcp.pop %v4568
        %v4716 = vrcp.pop %v4571
        %v4717 = vrcp.pop %v4574
        %v4718 = vrcp.pop %v4577
        %v4719 = vrcp.pop %v4580
        %v4720 = vrcp.pop %v4583
        %4721 = vxpose.xlu0.b32.start [1/16] %v4689, 128
        %4722 = vxpose.xlu0.b32.cont [2/16] %v4690, 128
        %4723 = vxpose.xlu0.b32.cont [3/16] %v4691, 128
        %4724 = vxpose.xlu0.b32.cont [4/16] %v4692, 128
        %4725 = vxpose.xlu0.b32.cont [5/16] %v4693, 128
        %4726 = vxpose.xlu0.b32.cont [6/16] %v4694, 128
        %4727 = vxpose.xlu0.b32.cont [7/16] %v4695, 128
        %4728 = vxpose.xlu0.b32.cont [8/16] %v4696, 128
        %4729 = vxpose.xlu0.b32.cont [9/16] %v4697, 128
        %4730 = vxpose.xlu0.b32.cont [10/16] %v4698, 128
        %4731 = vxpose.xlu0.b32.cont [11/16] %v4699, 128
        %4732 = vxpose.xlu0.b32.cont [12/16] %v4700, 128
        %4733 = vxpose.xlu0.b32.cont [13/16] %v4701, 128
        %4734 = vxpose.xlu0.b32.cont [14/16] %v4702, 128
        %4735 = vxpose.xlu0.b32.cont [15/16] %v4703, 128
        %4736 = vxpose.xlu0.b32.end [16/16] %v4704, 128
        %v4737 = vpop.trf.xlu0
        %v4738 = vpop.trf.xlu0
        %v4739 = vpop.trf.xlu0
        %v4740 = vpop.trf.xlu0
        %v4741 = vpop.trf.xlu0
        %v4742 = vpop.trf.xlu0
        %v4743 = vpop.trf.xlu0
        %v4744 = vpop.trf.xlu0
        %v4745 = vpop.trf.xlu0
        %v4746 = vpop.trf.xlu0
        %v4747 = vpop.trf.xlu0
        %v4748 = vpop.trf.xlu0
        %v4749 = vpop.trf.xlu0
        %v4750 = vpop.trf.xlu0
        %v4751 = vpop.trf.xlu0
        %v4752 = vpop.trf.xlu0
        %4753 = vxpose.xlu0.b32.start [1/16] %v4705, 128
        %4754 = vxpose.xlu0.b32.cont [2/16] %v4706, 128
        %4755 = vxpose.xlu0.b32.cont [3/16] %v4707, 128
        %4756 = vxpose.xlu0.b32.cont [4/16] %v4708, 128
        %4757 = vxpose.xlu0.b32.cont [5/16] %v4709, 128
        %4758 = vxpose.xlu0.b32.cont [6/16] %v4710, 128
        %4759 = vxpose.xlu0.b32.cont [7/16] %v4711, 128
        %4760 = vxpose.xlu0.b32.cont [8/16] %v4712, 128
        %4761 = vxpose.xlu0.b32.cont [9/16] %v4713, 128
        %4762 = vxpose.xlu0.b32.cont [10/16] %v4714, 128
        %4763 = vxpose.xlu0.b32.cont [11/16] %v4715, 128
        %4764 = vxpose.xlu0.b32.cont [12/16] %v4716, 128
        %4765 = vxpose.xlu0.b32.cont [13/16] %v4717, 128
        %4766 = vxpose.xlu0.b32.cont [14/16] %v4718, 128
        %4767 = vxpose.xlu0.b32.cont [15/16] %v4719, 128
        %4768 = vxpose.xlu0.b32.end [16/16] %v4720, 128
        %v4769 = vpop.trf.xlu0
        %v4770 = vpop.trf.xlu0
        %v4771 = vpop.trf.xlu0
        %v4772 = vpop.trf.xlu0
        %v4773 = vpop.trf.xlu0
        %v4774 = vpop.trf.xlu0
        %v4775 = vpop.trf.xlu0
        %v4776 = vpop.trf.xlu0
        %v4777 = vpop.trf.xlu0
        %v4778 = vpop.trf.xlu0
        %v4779 = vpop.trf.xlu0
        %v4780 = vpop.trf.xlu0
        %v4781 = vpop.trf.xlu0
        %v4782 = vpop.trf.xlu0
        %v4783 = vpop.trf.xlu0
        %v4784 = vpop.trf.xlu0
        %v4785 = vlaneseq
        %v4786 = vshrl.u32 %v4785, 7
        %v4787 = vsub.s32 0, %v4786
        %v4788 = vrot.slane %v4737, %v4787
        %v4789 = vlaneseq
        %v4790 = vshrl.u32 %v4789, 7
        %v4791 = vsub.s32 0, %v4790
        %v4792 = vrot.slane %v4769, %v4791
        %v4793 = vmul.f32 %v4671, %v4788
        %v4794 = vmul.f32 %v4673, %v4792
        %v4795 = vmul.f32 %v4675, %v4788
        %v4796 = vmul.f32 %v4677, %v4792
        %v4797 = vmul.f32 %v4681, %v4788
        %v4798 = vmul.f32 %v4683, %v4792
        %v4799 = vmul.f32 %v4685, %v4788
        %v4800 = vmul.f32 %v4687, %v4792
        %4801 = vst [vmem:[%s258] sm:$0xff] %v4793
        %4802 = vst [vmem:[%s258 + $0x8] sm:$0xff] %v4794
        %4803 = vst [vmem:[%s258 + $0x10] sm:$0xff] %v4795
        %4804 = vst [vmem:[%s258 + $0x18] sm:$0xff] %v4796
        %4805 = vst [vmem:[%s258 + $0x20] sm:$0xff] %v4797
        %4806 = vst [vmem:[%s258 + $0x28] sm:$0xff] %v4798
        %4807 = vst [vmem:[%s258 + $0x30] sm:$0xff] %v4799
        %4808 = vst [vmem:[%s258 + $0x38] sm:$0xff] %v4800
        %s4809 = sand.u32 %s124, 1
        %s4810 = scalar_lea.sflag [#allocation3], %s4809
        %s4811 = sand.u32 %s124, 1
        %s4812 = smul.addr %s4811, 8
        %s4813 = scalar_lea.vmem [#allocation2], %s4812
        %s4814 = sand.u32 %s152, 1
        %s4815 = scalar_lea.sflag [#allocation5], %s4814
        %s4816 = sand.u32 %s152, 1
        %s4817 = smul.addr %s4816, 64
        %s4818 = scalar_lea.vmem [#allocation4], %s4817
        // Predicated region
        $region33: #{tpu_custom_call.1} parent=31 // pred_check
          %p4819 = pneg %p134
        $region34: #{tpu_custom_call.1} parent=31 // pred_check_branch
          %4821 = sbr.rel (%p4819) target = $region36
        $region35: #{tpu_custom_call.1} parent=31 // pred_region
          %s4822 = smul.u32 2, %s27
          %s4824 = ssub.s32 128, 128
          %4825 = vsyncadd %s4810, %s4824
          %s4826 = smul.addr %s26, 2
          %s4827 = sadd.s32 %s4822, %s4826
          %s4828 = smul.addr %s4827, 64
          %s4829 = scalar_lea.hbm %s3, %s4828
          %s4831 = sshll.u32 %s4813, 4
          %s4832 = int_to_ptr.vmem [resolvable:$true] %s4831
          %4834 = dma.vmem_to_hbm [thread:$0]  %s4832, 128, %s4829, %s4810
        $region36: #{tpu_custom_call.1} parent=31 // pred_fallthru
          _
        // Predicated region
        $region37: #{tpu_custom_call.1} parent=31 // pred_check
          %p4835 = pneg %p162
        $region38: #{tpu_custom_call.1} parent=31 // pred_check_branch
          %4837 = sbr.rel (%p4835) target = $region40
        $region39: #{tpu_custom_call.1} parent=31 // pred_region
          %s4838 = smul.u32 2, %s27
          %s4840 = ssub.s32 1024, 1024
          %4841 = vsyncadd %s4815, %s4840
          %s4842 = smul.addr %s26, 8
          %s4843 = sadd.s32 %s4838, %s4842
          %s4844 = smul.addr %s4843, 128
          %s4845 = scalar_lea.hbm %s4, %s4844
          %s4846 = sshll.u32 %s4818, 4
          %s4847 = int_to_ptr.vmem [resolvable:$true] %s4846
          %4852 = dma.vmem_to_hbm [thread:$0]  %s4847, 1024, %s4845, %s4815, 256, 256, 16
        $region40: #{tpu_custom_call.1} parent=31 // pred_fallthru
          _
      $region32: #{tpu_custom_call.1} parent=5 // pred_fallthru
        _
      %p4853 = scmp.le.s32.totalorder 2, %s17
      // Predicated region
      $region41: #{tpu_custom_call.1} parent=5 // pred_check
        %p4854 = pneg %p4853
      $region42: #{tpu_custom_call.1} parent=5 // pred_check_branch
        %4856 = sbr.rel (%p4854) target = $region44
      $region43: #{tpu_custom_call.1} parent=5 // pred_region
        %s4857 = ssub.s32 %s17, 2
        // Predicated region
        $region45: #{tpu_custom_call.1} parent=43 // pred_check
          %p4858 = pneg %p140
        $region46: #{tpu_custom_call.1} parent=43 // pred_check_branch
          %4860 = sbr.rel (%p4858) target = $region48
        $region47: #{tpu_custom_call.1} parent=43 // pred_region
          %s4861 = sand.u32 %s125, 1
          %s4862 = scalar_lea.sflag [#allocation3], %s4861
          %s4863 = sand.u32 %s125, 1
          %s4864 = smul.addr %s4863, 8
          %s4865 = scalar_lea.vmem [#allocation2], %s4864
          %4866 = dma.done %s4862, 128
        $region48: #{tpu_custom_call.1} parent=43 // pred_fallthru
          _
        // Predicated region
        $region49: #{tpu_custom_call.1} parent=43 // pred_check
          %p4867 = pneg %p168
        $region50: #{tpu_custom_call.1} parent=43 // pred_check_branch
          %4869 = sbr.rel (%p4867) target = $region52
        $region51: #{tpu_custom_call.1} parent=43 // pred_region
          %s4870 = sand.u32 %s153, 1
          %s4871 = scalar_lea.sflag [#allocation5], %s4870
          %s4872 = sand.u32 %s153, 1
          %s4873 = smul.addr %s4872, 64
          %s4874 = scalar_lea.vmem [#allocation4], %s4873
          %4875 = dma.done %s4871, 1024
        $region52: #{tpu_custom_call.1} parent=43 // pred_fallthru
          _
      $region44: #{tpu_custom_call.1} parent=5 // pred_fallthru
        _
    $region6: #{tpu_custom_call.1} parent=1 // loop_footer
      %s21 = sadd.s32 1, %s17
    $region7: #{tpu_custom_call.1} parent=1 // loop_footer_branch
      %16 = sbr.rel target = $region3
    $region8: #{tpu_custom_call.1} parent=1 // loop_exit
      _
    %4876 = vsyncpa [#allocation3], 1
    %s4877 = scalar_lea.sflag [#allocation3], 1
    %4878 = vsyncpa %s4877, 1
    %4879 = vsyncpa [#allocation5], 1
    %s4880 = scalar_lea.sflag [#allocation5], 1
    %4881 = vsyncpa %s4880, 1

</llo_original>
